<compile_context>
chip_gen: v5e
topology: v5e:2x2
jax: 0.10.0
libtpu: 0.0.40
codegen_flags: <defaults>
</compile_context>

<pallas_src>
from math import ceil

import numpy as np
import jax
import jax.numpy as jnp
from jax import lax
from jax.experimental import pallas as pl
from jax.experimental.pallas import tpu as pltpu


# ----------------------------- BlockSpec helper -----------------------------
# index_maps receive (grid_i, num_nodes_prefetch_ref) because of scalar prefetch.

def _full_spec(shape):
    nd = len(shape)
    return pl.BlockSpec(tuple(shape), lambda i, nn_ref, _n=nd: (0,) * _n)


# --------------------------- in-kernel math helpers ---------------------------

def _dot_tn(a, b):
    """a[N,K], b[N,M] -> a^T @ b  (transpose absorbed by dot_general / MXU)."""
    return lax.dot_general(a, b, (((0,), (0,)), ((), ())),
                           preferred_element_type=jnp.float32)


def _dot_nt(a, b):
    """a[M,D], b[N,D] -> a @ b^T  (standard NT matmul)."""
    return lax.dot_general(a, b, (((1,), (1,)), ((), ())),
                           preferred_element_type=jnp.float32)


def _layer_norm(x, gamma, beta, eps=1e-5):
    mu = jnp.mean(x, axis=-1, keepdims=True)
    xc = x - mu
    var = jnp.mean(xc * xc, axis=-1, keepdims=True)
    return xc * lax.rsqrt(var + eps) * gamma + beta


def _dense_graph_conv(x, adj, w_stack, b_rel):
    """PyG DenseGraphConv(aggr='add'): lin_rel(adj@x)+lin_root(x), fused into
    one matmul: [adj@x || x] @ [w_rel ; w_root] + b_rel."""
    f32 = jnp.float32
    agg = jnp.dot(adj, x, preferred_element_type=f32)
    cat = jnp.concatenate([agg, x], axis=-1)                  # [K, 2H]
    return jnp.dot(cat, w_stack, preferred_element_type=f32) + b_rel


def _mincut_pool(x, adj, w_mlp, b_mlp, mask_col):
    """mlp -> softmax assignment -> dense_mincut_pool (pooled x, normalized adj)."""
    f32 = jnp.float32
    s_logits = jnp.dot(x, w_mlp, preferred_element_type=f32) + b_mlp     # [N, K]
    m = jnp.max(s_logits, axis=-1, keepdims=True)
    es = jnp.exp(s_logits - m)
    s = es * pl.reciprocal(jnp.sum(es, axis=-1, keepdims=True), approx=True)
    if mask_col is not None:
        x = x * mask_col
        s = s * mask_col
    x_pool = _dot_tn(s, x)                                               # [K, F]
    out_adj = jnp.dot(_dot_tn(s, adj), s, preferred_element_type=f32)    # [K, K]
    K = out_adj.shape[0]
    row = lax.broadcasted_iota(jnp.int32, (K, K), 0)
    col = lax.broadcasted_iota(jnp.int32, (K, K), 1)
    out_adj = jnp.where(row == col, 0.0, out_adj)                        # zero diag
    d = jnp.sqrt(jnp.sum(out_adj, axis=-1, keepdims=True)) + 1e-15       # [K, 1]
    inv_d = pl.reciprocal(d, approx=True)
    out_adj = out_adj * inv_d.T * inv_d                                  # A[i,j]/(d_i d_j)
    return x_pool, out_adj


# --------------------------------- fused kernel --------------------------------

def _make_kernel(B, N, CIN, H, E, K1, K2, O):
    def kernel(nn_ref, x_ref, adj_ref, e_ref, vec_ref, mat_ref, sml_ref, o_ref):
        f32 = jnp.float32

        # ---------------- unpack packed weights once (static slices) ----------------
        vecs = vec_ref[...]                                  # [CIN+13, 4H]
        w_qkvs = vecs[0:CIN, :]                              # [CIN, 4H]
        b_qkvs = vecs[CIN:CIN + 1, :]                        # [1, 4H]
        r = CIN + 1
        bn_s   = vecs[r + 0:r + 1, 0:H]
        bn_b   = vecs[r + 1:r + 2, 0:H]
        b_mlp1 = vecs[r + 2:r + 3, 0:K1]
        b_rel2 = vecs[r + 3:r + 4, 0:H]
        ln2_g  = vecs[r + 4:r + 5, 0:H]
        ln2_b  = vecs[r + 5:r + 6, 0:H]
        b_mlp2 = vecs[r + 6:r + 7, 0:K2]
        b_rel3 = vecs[r + 7:r + 8, 0:H]
        ln3_g  = vecs[r + 8:r + 9, 0:H]
        ln3_b  = vecs[r + 9:r + 10, 0:H]
        b_lin1 = vecs[r + 10:r + 11, 0:H]
        b_read = vecs[r + 11:r + 12, 0:O]

        mats = mat_ref[...]                                  # [5H+E, H]
        w_conv2 = mats[0:2 * H, :]                           # [w_rel2 ; w_root2]
        w_conv3 = mats[2 * H:4 * H, :]                       # [w_rel3 ; w_root3]
        w_lin1  = mats[4 * H:5 * H, :]
        we      = mats[5 * H:5 * H + E, :]                   # [E, H]

        sml = sml_ref[...]                                   # [H, K1+K2+O+E]
        w_mlp1 = sml[:, 0:K1]
        w_mlp2 = sml[:, K1:K1 + K2]
        w_read = sml[:, K1 + K2:K1 + K2 + O]
        we_t   = sml[:, K1 + K2 + O:K1 + K2 + O + E]         # [H, E]

        # -------- Q/K/V/skip projection for the whole flattened batch (M=B*N) --------
        qkvs = jnp.dot(x_ref[...], w_qkvs, preferred_element_type=f32) + b_qkvs

        inv_scale = 1.0 / (float(H) ** 0.5)
        outs = []
        for bb in range(B):                                  # static unroll: 1 grid step total
            r0 = bb * N
            q    = qkvs[r0:r0 + N, 0 * H:1 * H]
            k    = qkvs[r0:r0 + N, 1 * H:2 * H]
            v    = qkvs[r0:r0 + N, 2 * H:3 * H]
            skip = qkvs[r0:r0 + N, 3 * H:4 * H]
            adj   = adj_ref[bb]                              # [N, N]    layout [tgt, src]
            e_all = e_ref[bb]                                # [E, N, N] layout [c, tgt, src]

            # to_dense_batch node mask from the prefetched node count (no mask DMA).
            mask_col = (lax.broadcasted_iota(jnp.int32, (N, 1), 0)
                        < nn_ref[bb]).astype(f32)

            # ---------------- TransformerConv (heads=1, edge_dim=E) ----------------
            qk = _dot_nt(q, k)                                            # [tgt, src]
            qwe = jnp.dot(q, we_t, preferred_element_type=f32)            # [N, E]
            qe = jnp.zeros((N, N), f32)
            for c in range(E):                                            # E=5, unrolled
                qe = qe + e_all[c] * qwe[:, c:c + 1]
            logits = (qk + qe) * inv_scale

            emask = adj > 0.0                                             # no transpose
            ml = jnp.where(emask, logits, jnp.float32(-1e30))
            m = jnp.max(ml, axis=-1, keepdims=True)
            p = jnp.where(emask, jnp.exp(ml - m), 0.0)
            denom = jnp.sum(p, axis=-1, keepdims=True)
            alpha = p * pl.reciprocal(jnp.where(denom > 0.0, denom, 1.0), approx=True)

            out_v = jnp.dot(alpha, v, preferred_element_type=f32)         # [N, H]
            out_e = jnp.zeros((N, H), f32)
            for c in range(E):
                ae_c = jnp.sum(alpha * e_all[c], axis=-1, keepdims=True)  # [N, 1]
                out_e = out_e + ae_c * we[c:c + 1, :]                     # rank-1 update

            h = out_v + out_e + skip
            h = h * bn_s + bn_b                       # BatchNorm1d folded (inference)
            h1 = jnp.maximum(h, 0.0) * mask_col

            # -------- mlp1 + dense_mincut_pool (masked).  adj is [tgt,src]; graph is
            # undirected so this equals the to_dense_adj [src,tgt] layout. --------
            x1, adj1 = _mincut_pool(h1, adj, w_mlp1, b_mlp1, mask_col)

            # ---------------- conv2 (fused DenseGraphConv) -> ln2 -> relu ----------------
            h2 = _dense_graph_conv(x1, adj1, w_conv2, b_rel2)
            h2 = jnp.maximum(_layer_norm(h2, ln2_g, ln2_b), 0.0)

            # ---------------- mlp2 + dense_mincut_pool (no mask) ----------------
            x2, adj2 = _mincut_pool(h2, adj1, w_mlp2, b_mlp2, None)

            # ---------------- conv3 (fused DenseGraphConv) -> ln3 -> relu ----------------
            h3 = _dense_graph_conv(x2, adj2, w_conv3, b_rel3)
            h3 = jnp.maximum(_layer_norm(h3, ln3_g, ln3_b), 0.0)

            # -------- lin1 -> relu -> readout1 -> mean over clusters -> sigmoid --------
            h4 = jnp.maximum(jnp.dot(h3, w_lin1, preferred_element_type=f32)
                             + b_lin1, 0.0)
            lg = jnp.dot(h4, w_read, preferred_element_type=f32) + b_read  # [K2, O]
            outs.append(jax.nn.sigmoid(jnp.mean(lg, axis=0, keepdims=True)))  # [1, O]

        res = jnp.concatenate(outs, axis=0)                               # [B, O]
        # Lane-dense output: broadcast the (O==1) column across 128 lanes.
        o_ref[...] = jnp.broadcast_to(res[:, 0:1], (B, 128)).astype(o_ref.dtype)

    return kernel


# -------------------------------- model wrapper --------------------------------

def make_forward(B, N, CIN, H, E, K1, K2, O):
    kernel = _make_kernel(B, N, CIN, H, E, K1, K2, O)

    def forward(num_nodes_arr, x_flat, adj_ts, e_pack, vec_pack, mat_pack, sml_pack):
        tensor_args = [x_flat, adj_ts, e_pack, vec_pack, mat_pack, sml_pack]
        out = pl.pallas_call(
            kernel,
            out_shape=jax.ShapeDtypeStruct((B, 128), jnp.float32),
            grid_spec=pltpu.PrefetchScalarGridSpec(
                num_scalar_prefetch=1,
                grid=(1,),                 # whole batch in one step: no per-graph overhead
                in_specs=[_full_spec(a.shape) for a in tensor_args],
                out_specs=_full_spec((B, 128)),
            ),
            compiler_params=pltpu.CompilerParams(dimension_semantics=("arbitrary",)),
        )(num_nodes_arr, *tensor_args)
        return out[:, 0]                   # [B]  (== readout mean .squeeze(-1))

    return forward


# ---------------------------------- parameters ----------------------------------

def init_params(key, cin, hidden, out_ch, k1, k2, edge_dim):
    keys = jax.random.split(key, 32)

    def w(k, shape):
        return (jax.random.normal(k, shape, jnp.float32) / np.sqrt(shape[0])).astype(jnp.float32)

    def b(k, n):
        return (0.01 * jax.random.normal(k, (1, n), jnp.float32)).astype(jnp.float32)

    # TransformerConv(in_channels, hidden, edge_dim), heads=1, concat=True
    wq, bq = w(keys[0], (cin, hidden)), b(keys[1], hidden)
    wk, bk = w(keys[2], (cin, hidden)), b(keys[3], hidden)
    wv, bv = w(keys[4], (cin, hidden)), b(keys[5], hidden)
    wskip, bskip = w(keys[6], (cin, hidden)), b(keys[7], hidden)
    we = w(keys[8], (edge_dim, hidden))                   # lin_edge has no bias

    # BatchNorm1d(hidden) — inference mode, fold running stats into scale/shift.
    bn_gamma = 1.0 + 0.05 * jax.random.normal(keys[9], (1, hidden), jnp.float32)
    bn_beta = 0.05 * jax.random.normal(keys[10], (1, hidden), jnp.float32)
    bn_mean = 0.1 * jax.random.normal(keys[11], (1, hidden), jnp.float32)
    bn_var = 1.0 + 0.1 * jax.random.uniform(keys[12], (1, hidden), jnp.float32)
    bn_eps = 1e-5
    bn_scale = bn_gamma / jnp.sqrt(bn_var + bn_eps)
    bn_shift = bn_beta - bn_mean * bn_scale

    return dict(
        w_qkvs=jnp.concatenate([wq, wk, wv, wskip], axis=1),   # [cin, 4H]
        b_qkvs=jnp.concatenate([bq, bk, bv, bskip], axis=1),   # [1, 4H]
        we=we, bn_scale=bn_scale, bn_shift=bn_shift,
        w_mlp1=w(keys[13], (hidden, k1)), b_mlp1=b(keys[14], k1),
        w_rel2=w(keys[15], (hidden, hidden)), b_rel2=b(keys[16], hidden),
        w_root2=w(keys[17], (hidden, hidden)),
        ln2_g=(1.0 + 0.05 * jax.random.normal(keys[18], (1, hidden), jnp.float32)),
        ln2_b=(0.05 * jax.random.normal(keys[19], (1, hidden), jnp.float32)),
        w_mlp2=w(keys[20], (hidden, k2)), b_mlp2=b(keys[21], k2),
        w_rel3=w(keys[22], (hidden, hidden)), b_rel3=b(keys[23], hidden),
        w_root3=w(keys[24], (hidden, hidden)),
        ln3_g=(1.0 + 0.05 * jax.random.normal(keys[25], (1, hidden), jnp.float32)),
        ln3_b=(0.05 * jax.random.normal(keys[26], (1, hidden), jnp.float32)),
        w_lin1=w(keys[27], (hidden, hidden)), b_lin1=b(keys[28], hidden),
        w_read=w(keys[29], (hidden, out_ch)), b_read=b(keys[30], out_ch),
        # mlp3 exists in __init__ but is unused in forward.
    )


def pack_params(p, cin, hidden, k1, k2, edge_dim, out_ch):
    """Pack the many small operands into 3 lane/sublane-dense arrays."""
    H = hidden
    W = 4 * H

    def pad_row(v):
        v = jnp.asarray(v, jnp.float32).reshape(1, -1)
        return jnp.pad(v, ((0, 0), (0, W - v.shape[1])))

    vec = jnp.concatenate(
        [p["w_qkvs"], p["b_qkvs"],
         pad_row(p["bn_scale"]), pad_row(p["bn_shift"]),
         pad_row(p["b_mlp1"]),
         pad_row(p["b_rel2"]), pad_row(p["ln2_g"]), pad_row(p["ln2_b"]),
         pad_row(p["b_mlp2"]),
         pad_row(p["b_rel3"]), pad_row(p["ln3_g"]), pad_row(p["ln3_b"]),
         pad_row(p["b_lin1"]), pad_row(p["b_read"])], axis=0)         # [cin+13, 4H]

    mat = jnp.concatenate(
        [p["w_rel2"], p["w_root2"], p["w_rel3"], p["w_root3"],
         p["w_lin1"], p["we"]], axis=0)                                # [5H+E, H]

    sml = jnp.concatenate(
        [p["w_mlp1"], p["w_mlp2"], p["w_read"], jnp.transpose(p["we"])],
        axis=1)                                                        # [H, K1+K2+O+E]
    return vec, mat, sml


# ------------------------------------- main -------------------------------------

if __name__ == "__main__":
    in_channels, hidden, out_channels = 4, 32, 1
    edge_dim = 5
    average_nodes = 16                       # config['average_nodes']
    k1 = ceil(0.5 * average_nodes)           # 8
    k2 = ceil(0.5 * k1)                      # 4

    num_nodes = [12, 16]
    B = len(num_nodes)
    n_max = max(num_nodes)
    n_total = sum(num_nodes)

    key = jax.random.PRNGKey(0)
    kx, ke, kp = jax.random.split(key, 3)
    x = jax.random.normal(kx, (n_total, in_channels), jnp.float32)

    # Deterministic ring-like (undirected) edge list, no duplicates.
    edges = []
    off = 0
    for n in num_nodes:
        for i in range(n):
            for d in (1, 2):
                j = (i + d) % n
                edges.append((off + i, off + j))
                edges.append((off + j, off + i))
        off += n
    edges = sorted(set(edges))
    edge_index = np.asarray(edges, dtype=np.int32).T          # [2, E]
    E_edges = edge_index.shape[1]
    edge_attr = jax.random.normal(ke, (E_edges, edge_dim), jnp.float32)
    batch = np.repeat(np.arange(B), num_nodes).astype(np.int32)
    local = np.concatenate([np.arange(n) for n in num_nodes]).astype(np.int32)

    # ---- glue: sparse -> dense (to_dense_batch / to_dense_adj equivalents) ----
    x_dense = jnp.zeros((B, n_max, in_channels), jnp.float32).at[batch, local].set(x)
    x_flat = x_dense.reshape(B * n_max, in_channels)           # flattened batch rows
    src, tgt = edge_index[0], edge_index[1]
    # Adjacency built directly in [b, tgt, src] layout (symmetric graph, so it also
    # matches the to_dense_adj [src, tgt] layout used by dense_mincut_pool).
    adj_ts = jnp.zeros((B, n_max, n_max), jnp.float32).at[
        batch[src], local[tgt], local[src]].add(1.0)
    # Edge attrs repacked to [B, edge_dim, tgt, src] so edge_dim is not the lane axis.
    e_tse = jnp.zeros((B, n_max, n_max, edge_dim), jnp.float32).at[
        batch[src], local[tgt], local[src]].set(edge_attr)
    e_pack = jnp.transpose(e_tse, (0, 3, 1, 2))                 # [b, c, tgt, src]
    num_nodes_arr = jnp.asarray(num_nodes, dtype=jnp.int32)     # scalar-prefetch input

    params = init_params(kp, in_channels, hidden, out_channels, k1, k2, edge_dim)
    vec_pack, mat_pack, sml_pack = pack_params(params, in_channels, hidden,
                                               k1, k2, edge_dim, out_channels)

    fwd = jax.jit(make_forward(B, n_max, in_channels, hidden, edge_dim,
                               k1, k2, out_channels))
    out = jax.block_until_ready(
        fwd(num_nodes_arr, x_flat, adj_ts, e_pack, vec_pack, mat_pack, sml_pack))

    assert out.shape == (B,), out.shape
    assert bool(jnp.all(jnp.isfinite(out)))
    assert bool(jnp.all((out >= 0.0) & (out <= 1.0)))
    print("KERNEL_OK")
</pallas_src>

<mosaic_0001>
module attributes {stable_mosaic.version = 11 : i64} {
  func.func @kernel(%arg0: i32, %arg1: memref<2xi32, #tpu.memory_space<smem>>, %arg2: memref<32x4xf32, #tpu.memory_space<vmem>>, %arg3: memref<2x16x16xf32, #tpu.memory_space<vmem>>, %arg4: memref<2x5x16x16xf32, #tpu.memory_space<vmem>>, %arg5: memref<17x128xf32, #tpu.memory_space<vmem>>, %arg6: memref<165x32xf32, #tpu.memory_space<vmem>>, %arg7: memref<32x18xf32, #tpu.memory_space<vmem>>, %arg8: memref<2x128xf32, #tpu.memory_space<vmem>>) attributes {dimension_semantics = [#tpu.dimension_semantics<arbitrary>], iteration_bounds = array<i64: 1>, scalar_prefetch = 1 : i64, scratch_operands = 0 : i64, tpu.core_type = #tpu.core_type<tc>, window_params = [{pipeline_mode = #tpu.pipeline_mode<synchronous>, transform_indices = @transform_0, window_bounds = array<i64: 32, 4>}, {pipeline_mode = #tpu.pipeline_mode<synchronous>, transform_indices = @transform_1, window_bounds = array<i64: 2, 16, 16>}, {pipeline_mode = #tpu.pipeline_mode<synchronous>, transform_indices = @transform_2, window_bounds = array<i64: 2, 5, 16, 16>}, {pipeline_mode = #tpu.pipeline_mode<synchronous>, transform_indices = @transform_3, window_bounds = array<i64: 17, 128>}, {pipeline_mode = #tpu.pipeline_mode<synchronous>, transform_indices = @transform_4, window_bounds = array<i64: 165, 32>}, {pipeline_mode = #tpu.pipeline_mode<synchronous>, transform_indices = @transform_5, window_bounds = array<i64: 32, 18>}, {pipeline_mode = #tpu.pipeline_mode<synchronous>, transform_indices = @transform_6, window_bounds = array<i64: 2, 128>}]} {
    %c0 = arith.constant 0 : index
    %c0_0 = arith.constant 0 : index
    %0 = vector.load %arg5[%c0, %c0_0] : memref<17x128xf32, #tpu.memory_space<vmem>>, vector<17x128xf32>
    %1 = vector.extract_strided_slice %0 {offsets = [0, 0], sizes = [4, 128], strides = [1, 1]} : vector<17x128xf32> to vector<4x128xf32>
    %2 = vector.extract_strided_slice %0 {offsets = [4, 0], sizes = [1, 128], strides = [1, 1]} : vector<17x128xf32> to vector<1x128xf32>
    %3 = vector.extract_strided_slice %0 {offsets = [5, 0], sizes = [1, 32], strides = [1, 1]} : vector<17x128xf32> to vector<1x32xf32>
    %4 = vector.extract_strided_slice %0 {offsets = [6, 0], sizes = [1, 32], strides = [1, 1]} : vector<17x128xf32> to vector<1x32xf32>
    %5 = vector.extract_strided_slice %0 {offsets = [7, 0], sizes = [1, 8], strides = [1, 1]} : vector<17x128xf32> to vector<1x8xf32>
    %6 = vector.extract_strided_slice %0 {offsets = [8, 0], sizes = [1, 32], strides = [1, 1]} : vector<17x128xf32> to vector<1x32xf32>
    %7 = vector.extract_strided_slice %0 {offsets = [9, 0], sizes = [1, 32], strides = [1, 1]} : vector<17x128xf32> to vector<1x32xf32>
    %8 = vector.extract_strided_slice %0 {offsets = [10, 0], sizes = [1, 32], strides = [1, 1]} : vector<17x128xf32> to vector<1x32xf32>
    %9 = vector.extract_strided_slice %0 {offsets = [11, 0], sizes = [1, 4], strides = [1, 1]} : vector<17x128xf32> to vector<1x4xf32>
    %10 = vector.extract_strided_slice %0 {offsets = [12, 0], sizes = [1, 32], strides = [1, 1]} : vector<17x128xf32> to vector<1x32xf32>
    %11 = vector.extract_strided_slice %0 {offsets = [13, 0], sizes = [1, 32], strides = [1, 1]} : vector<17x128xf32> to vector<1x32xf32>
    %12 = vector.extract_strided_slice %0 {offsets = [14, 0], sizes = [1, 32], strides = [1, 1]} : vector<17x128xf32> to vector<1x32xf32>
    %13 = vector.extract_strided_slice %0 {offsets = [15, 0], sizes = [1, 32], strides = [1, 1]} : vector<17x128xf32> to vector<1x32xf32>
    %14 = vector.extract_strided_slice %0 {offsets = [16, 0], sizes = [1, 1], strides = [1, 1]} : vector<17x128xf32> to vector<1x1xf32>
    %c0_1 = arith.constant 0 : index
    %c0_2 = arith.constant 0 : index
    %15 = vector.load %arg6[%c0_1, %c0_2] : memref<165x32xf32, #tpu.memory_space<vmem>>, vector<165x32xf32>
    %16 = vector.extract_strided_slice %15 {offsets = [0, 0], sizes = [64, 32], strides = [1, 1]} : vector<165x32xf32> to vector<64x32xf32>
    %17 = vector.extract_strided_slice %15 {offsets = [64, 0], sizes = [64, 32], strides = [1, 1]} : vector<165x32xf32> to vector<64x32xf32>
    %18 = vector.extract_strided_slice %15 {offsets = [128, 0], sizes = [32, 32], strides = [1, 1]} : vector<165x32xf32> to vector<32x32xf32>
    %19 = vector.extract_strided_slice %15 {offsets = [160, 0], sizes = [5, 32], strides = [1, 1]} : vector<165x32xf32> to vector<5x32xf32>
    %c0_3 = arith.constant 0 : index
    %c0_4 = arith.constant 0 : index
    %20 = vector.load %arg7[%c0_3, %c0_4] : memref<32x18xf32, #tpu.memory_space<vmem>>, vector<32x18xf32>
    %21 = vector.extract_strided_slice %20 {offsets = [0, 0], sizes = [32, 8], strides = [1, 1]} : vector<32x18xf32> to vector<32x8xf32>
    %22 = vector.extract_strided_slice %20 {offsets = [0, 8], sizes = [32, 4], strides = [1, 1]} : vector<32x18xf32> to vector<32x4xf32>
    %23 = vector.extract_strided_slice %20 {offsets = [0, 12], sizes = [32, 1], strides = [1, 1]} : vector<32x18xf32> to vector<32x1xf32>
    %24 = vector.extract_strided_slice %20 {offsets = [0, 13], sizes = [32, 5], strides = [1, 1]} : vector<32x18xf32> to vector<32x5xf32>
    %c0_5 = arith.constant 0 : index
    %c0_6 = arith.constant 0 : index
    %25 = vector.load %arg2[%c0_5, %c0_6] : memref<32x4xf32, #tpu.memory_space<vmem>>, vector<32x4xf32>
    %cst = arith.constant dense<0.000000e+00> : vector<32x128xf32>
    %26 = tpu.matmul %25, %1, %cst {dimension_numbers = #tpu.dot_dimension_numbers<[1], [0], [0], [1], [0, 0, 1, 1], [], []>} : vector<32x4xf32>, vector<4x128xf32>, vector<32x128xf32> -> vector<32x128xf32>
    %27 = vector.broadcast %2 : vector<1x128xf32> to vector<32x128xf32>
    %28 = arith.addf %26, %27 : vector<32x128xf32>
    %29 = vector.extract_strided_slice %28 {offsets = [0, 0], sizes = [16, 32], strides = [1, 1]} : vector<32x128xf32> to vector<16x32xf32>
    %30 = vector.extract_strided_slice %28 {offsets = [0, 32], sizes = [16, 32], strides = [1, 1]} : vector<32x128xf32> to vector<16x32xf32>
    %31 = vector.extract_strided_slice %28 {offsets = [0, 64], sizes = [16, 32], strides = [1, 1]} : vector<32x128xf32> to vector<16x32xf32>
    %32 = vector.extract_strided_slice %28 {offsets = [0, 96], sizes = [16, 32], strides = [1, 1]} : vector<32x128xf32> to vector<16x32xf32>
    %c0_7 = arith.constant 0 : index
    %c0_8 = arith.constant 0 : index
    %c0_9 = arith.constant 0 : index
    %33 = vector.load %arg3[%c0_7, %c0_8, %c0_9] : memref<2x16x16xf32, #tpu.memory_space<vmem>>, vector<1x16x16xf32>
    %34 = vector.shape_cast %33 : vector<1x16x16xf32> to vector<16x16xf32>
    %c0_10 = arith.constant 0 : index
    %c0_11 = arith.constant 0 : index
    %c0_12 = arith.constant 0 : index
    %c0_13 = arith.constant 0 : index
    %35 = vector.load %arg4[%c0_10, %c0_11, %c0_12, %c0_13] : memref<2x5x16x16xf32, #tpu.memory_space<vmem>>, vector<1x5x16x16xf32>
    %36 = vector.shape_cast %35 : vector<1x5x16x16xf32> to vector<5x16x16xf32>
    %37 = tpu.iota {dimensions = array<i32: 0>} : vector<16x1xi32>
    %c0_14 = arith.constant 0 : index
    %38 = memref.load %arg1[%c0_14] : memref<2xi32, #tpu.memory_space<smem>>
    %39 = vector.broadcast %38 : i32 to vector<16x1xi32>
    %40 = arith.cmpi slt, %37, %39 : vector<16x1xi32>
    %41 = arith.extui %40 : vector<16x1xi1> to vector<16x1xi32>
    %42 = arith.sitofp %41 : vector<16x1xi32> to vector<16x1xf32>
    %cst_15 = arith.constant dense<0.000000e+00> : vector<16x16xf32>
    %43 = tpu.matmul %29, %30, %cst_15 {dimension_numbers = #tpu.dot_dimension_numbers<[1], [1], [0], [0], [0, 0, 1, 0], [], []>} : vector<16x32xf32>, vector<16x32xf32>, vector<16x16xf32> -> vector<16x16xf32>
    %cst_16 = arith.constant dense<0.000000e+00> : vector<16x5xf32>
    %44 = tpu.matmul %29, %24, %cst_16 {dimension_numbers = #tpu.dot_dimension_numbers<[1], [0], [0], [1], [0, 0, 1, 1], [], []>} : vector<16x32xf32>, vector<32x5xf32>, vector<16x5xf32> -> vector<16x5xf32>
    %cst_17 = arith.constant 0.000000e+00 : f32
    %45 = vector.broadcast %cst_17 : f32 to vector<16x16xf32>
    %46 = vector.extract_strided_slice %36 {offsets = [0, 0, 0], sizes = [1, 16, 16], strides = [1, 1, 1]} : vector<5x16x16xf32> to vector<1x16x16xf32>
    %47 = vector.shape_cast %46 : vector<1x16x16xf32> to vector<16x16xf32>
    %48 = vector.extract_strided_slice %44 {offsets = [0, 0], sizes = [16, 1], strides = [1, 1]} : vector<16x5xf32> to vector<16x1xf32>
    %49 = vector.broadcast %48 : vector<16x1xf32> to vector<16x16xf32>
    %50 = arith.mulf %47, %49 : vector<16x16xf32>
    %51 = arith.addf %45, %50 : vector<16x16xf32>
    %52 = vector.extract_strided_slice %36 {offsets = [1, 0, 0], sizes = [1, 16, 16], strides = [1, 1, 1]} : vector<5x16x16xf32> to vector<1x16x16xf32>
    %53 = vector.shape_cast %52 : vector<1x16x16xf32> to vector<16x16xf32>
    %54 = vector.extract_strided_slice %44 {offsets = [0, 1], sizes = [16, 1], strides = [1, 1]} : vector<16x5xf32> to vector<16x1xf32>
    %55 = vector.broadcast %54 : vector<16x1xf32> to vector<16x16xf32>
    %56 = arith.mulf %53, %55 : vector<16x16xf32>
    %57 = arith.addf %51, %56 : vector<16x16xf32>
    %58 = vector.extract_strided_slice %36 {offsets = [2, 0, 0], sizes = [1, 16, 16], strides = [1, 1, 1]} : vector<5x16x16xf32> to vector<1x16x16xf32>
    %59 = vector.shape_cast %58 : vector<1x16x16xf32> to vector<16x16xf32>
    %60 = vector.extract_strided_slice %44 {offsets = [0, 2], sizes = [16, 1], strides = [1, 1]} : vector<16x5xf32> to vector<16x1xf32>
    %61 = vector.broadcast %60 : vector<16x1xf32> to vector<16x16xf32>
    %62 = arith.mulf %59, %61 : vector<16x16xf32>
    %63 = arith.addf %57, %62 : vector<16x16xf32>
    %64 = vector.extract_strided_slice %36 {offsets = [3, 0, 0], sizes = [1, 16, 16], strides = [1, 1, 1]} : vector<5x16x16xf32> to vector<1x16x16xf32>
    %65 = vector.shape_cast %64 : vector<1x16x16xf32> to vector<16x16xf32>
    %66 = vector.extract_strided_slice %44 {offsets = [0, 3], sizes = [16, 1], strides = [1, 1]} : vector<16x5xf32> to vector<16x1xf32>
    %67 = vector.broadcast %66 : vector<16x1xf32> to vector<16x16xf32>
    %68 = arith.mulf %65, %67 : vector<16x16xf32>
    %69 = arith.addf %63, %68 : vector<16x16xf32>
    %70 = vector.extract_strided_slice %36 {offsets = [4, 0, 0], sizes = [1, 16, 16], strides = [1, 1, 1]} : vector<5x16x16xf32> to vector<1x16x16xf32>
    %71 = vector.shape_cast %70 : vector<1x16x16xf32> to vector<16x16xf32>
    %72 = vector.extract_strided_slice %44 {offsets = [0, 4], sizes = [16, 1], strides = [1, 1]} : vector<16x5xf32> to vector<16x1xf32>
    %73 = vector.broadcast %72 : vector<16x1xf32> to vector<16x16xf32>
    %74 = arith.mulf %71, %73 : vector<16x16xf32>
    %75 = arith.addf %69, %74 : vector<16x16xf32>
    %76 = arith.addf %43, %75 : vector<16x16xf32>
    %cst_18 = arith.constant 0.176776692 : f32
    %77 = vector.broadcast %cst_18 : f32 to vector<16x16xf32>
    %78 = arith.mulf %76, %77 : vector<16x16xf32>
    %cst_19 = arith.constant 0.000000e+00 : f32
    %79 = vector.broadcast %cst_19 : f32 to vector<16x16xf32>
    %80 = arith.cmpf ogt, %34, %79 : vector<16x16xf32>
    %cst_20 = arith.constant -1.000000e+30 : f32
    %81 = vector.broadcast %cst_20 : f32 to vector<16x16xf32>
    %82 = arith.select %80, %78, %81 : vector<16x16xi1>, vector<16x16xf32>
    %cst_21 = arith.constant dense<0xFF800000> : vector<16xf32>
    %83 = vector.multi_reduction <maximumf>, %82, %cst_21 [1] : vector<16x16xf32> to vector<16xf32>
    %84 = vector.shape_cast %83 : vector<16xf32> to vector<16x1xf32>
    %85 = vector.broadcast %84 : vector<16x1xf32> to vector<16x16xf32>
    %86 = arith.subf %82, %85 : vector<16x16xf32>
    %87 = math.exp %86 : vector<16x16xf32>
    %cst_22 = arith.constant 0.000000e+00 : f32
    %88 = vector.broadcast %cst_22 : f32 to vector<16x16xf32>
    %89 = arith.select %80, %87, %88 : vector<16x16xi1>, vector<16x16xf32>
    %cst_23 = arith.constant dense<0.000000e+00> : vector<16xf32>
    %90 = vector.multi_reduction <add>, %89, %cst_23 [1] : vector<16x16xf32> to vector<16xf32>
    %91 = vector.shape_cast %90 : vector<16xf32> to vector<16x1xf32>
    %cst_24 = arith.constant 0.000000e+00 : f32
    %92 = vector.broadcast %cst_24 : f32 to vector<16x1xf32>
    %93 = arith.cmpf ogt, %91, %92 : vector<16x1xf32>
    %cst_25 = arith.constant 1.000000e+00 : f32
    %94 = vector.broadcast %cst_25 : f32 to vector<16x1xf32>
    %95 = arith.select %93, %91, %94 : vector<16x1xi1>, vector<16x1xf32>
    %96 = tpu.reciprocal %95 {approx = true} : vector<16x1xf32> -> vector<16x1xf32>
    %97 = vector.broadcast %96 : vector<16x1xf32> to vector<16x16xf32>
    %98 = arith.mulf %89, %97 : vector<16x16xf32>
    %cst_26 = arith.constant dense<0.000000e+00> : vector<16x32xf32>
    %99 = tpu.matmul %98, %31, %cst_26 {dimension_numbers = #tpu.dot_dimension_numbers<[1], [0], [0], [1], [0, 0, 1, 1], [], []>} : vector<16x16xf32>, vector<16x32xf32>, vector<16x32xf32> -> vector<16x32xf32>
    %cst_27 = arith.constant 0.000000e+00 : f32
    %100 = vector.broadcast %cst_27 : f32 to vector<16x32xf32>
    %101 = vector.extract_strided_slice %36 {offsets = [0, 0, 0], sizes = [1, 16, 16], strides = [1, 1, 1]} : vector<5x16x16xf32> to vector<1x16x16xf32>
    %102 = vector.shape_cast %101 : vector<1x16x16xf32> to vector<16x16xf32>
    %103 = arith.mulf %98, %102 : vector<16x16xf32>
    %cst_28 = arith.constant dense<0.000000e+00> : vector<16xf32>
    %104 = vector.multi_reduction <add>, %103, %cst_28 [1] : vector<16x16xf32> to vector<16xf32>
    %105 = vector.shape_cast %104 : vector<16xf32> to vector<16x1xf32>
    %106 = vector.extract_strided_slice %19 {offsets = [0, 0], sizes = [1, 32], strides = [1, 1]} : vector<5x32xf32> to vector<1x32xf32>
    %107 = vector.broadcast %105 : vector<16x1xf32> to vector<16x32xf32>
    %108 = vector.broadcast %106 : vector<1x32xf32> to vector<16x32xf32>
    %109 = arith.mulf %107, %108 : vector<16x32xf32>
    %110 = arith.addf %100, %109 : vector<16x32xf32>
    %111 = vector.extract_strided_slice %36 {offsets = [1, 0, 0], sizes = [1, 16, 16], strides = [1, 1, 1]} : vector<5x16x16xf32> to vector<1x16x16xf32>
    %112 = vector.shape_cast %111 : vector<1x16x16xf32> to vector<16x16xf32>
    %113 = arith.mulf %98, %112 : vector<16x16xf32>
    %cst_29 = arith.constant dense<0.000000e+00> : vector<16xf32>
    %114 = vector.multi_reduction <add>, %113, %cst_29 [1] : vector<16x16xf32> to vector<16xf32>
    %115 = vector.shape_cast %114 : vector<16xf32> to vector<16x1xf32>
    %116 = vector.extract_strided_slice %19 {offsets = [1, 0], sizes = [1, 32], strides = [1, 1]} : vector<5x32xf32> to vector<1x32xf32>
    %117 = vector.broadcast %115 : vector<16x1xf32> to vector<16x32xf32>
    %118 = vector.broadcast %116 : vector<1x32xf32> to vector<16x32xf32>
    %119 = arith.mulf %117, %118 : vector<16x32xf32>
    %120 = arith.addf %110, %119 : vector<16x32xf32>
    %121 = vector.extract_strided_slice %36 {offsets = [2, 0, 0], sizes = [1, 16, 16], strides = [1, 1, 1]} : vector<5x16x16xf32> to vector<1x16x16xf32>
    %122 = vector.shape_cast %121 : vector<1x16x16xf32> to vector<16x16xf32>
    %123 = arith.mulf %98, %122 : vector<16x16xf32>
    %cst_30 = arith.constant dense<0.000000e+00> : vector<16xf32>
    %124 = vector.multi_reduction <add>, %123, %cst_30 [1] : vector<16x16xf32> to vector<16xf32>
    %125 = vector.shape_cast %124 : vector<16xf32> to vector<16x1xf32>
    %126 = vector.extract_strided_slice %19 {offsets = [2, 0], sizes = [1, 32], strides = [1, 1]} : vector<5x32xf32> to vector<1x32xf32>
    %127 = vector.broadcast %125 : vector<16x1xf32> to vector<16x32xf32>
    %128 = vector.broadcast %126 : vector<1x32xf32> to vector<16x32xf32>
    %129 = arith.mulf %127, %128 : vector<16x32xf32>
    %130 = arith.addf %120, %129 : vector<16x32xf32>
    %131 = vector.extract_strided_slice %36 {offsets = [3, 0, 0], sizes = [1, 16, 16], strides = [1, 1, 1]} : vector<5x16x16xf32> to vector<1x16x16xf32>
    %132 = vector.shape_cast %131 : vector<1x16x16xf32> to vector<16x16xf32>
    %133 = arith.mulf %98, %132 : vector<16x16xf32>
    %cst_31 = arith.constant dense<0.000000e+00> : vector<16xf32>
    %134 = vector.multi_reduction <add>, %133, %cst_31 [1] : vector<16x16xf32> to vector<16xf32>
    %135 = vector.shape_cast %134 : vector<16xf32> to vector<16x1xf32>
    %136 = vector.extract_strided_slice %19 {offsets = [3, 0], sizes = [1, 32], strides = [1, 1]} : vector<5x32xf32> to vector<1x32xf32>
    %137 = vector.broadcast %135 : vector<16x1xf32> to vector<16x32xf32>
    %138 = vector.broadcast %136 : vector<1x32xf32> to vector<16x32xf32>
    %139 = arith.mulf %137, %138 : vector<16x32xf32>
    %140 = arith.addf %130, %139 : vector<16x32xf32>
    %141 = vector.extract_strided_slice %36 {offsets = [4, 0, 0], sizes = [1, 16, 16], strides = [1, 1, 1]} : vector<5x16x16xf32> to vector<1x16x16xf32>
    %142 = vector.shape_cast %141 : vector<1x16x16xf32> to vector<16x16xf32>
    %143 = arith.mulf %98, %142 : vector<16x16xf32>
    %cst_32 = arith.constant dense<0.000000e+00> : vector<16xf32>
    %144 = vector.multi_reduction <add>, %143, %cst_32 [1] : vector<16x16xf32> to vector<16xf32>
    %145 = vector.shape_cast %144 : vector<16xf32> to vector<16x1xf32>
    %146 = vector.extract_strided_slice %19 {offsets = [4, 0], sizes = [1, 32], strides = [1, 1]} : vector<5x32xf32> to vector<1x32xf32>
    %147 = vector.broadcast %145 : vector<16x1xf32> to vector<16x32xf32>
    %148 = vector.broadcast %146 : vector<1x32xf32> to vector<16x32xf32>
    %149 = arith.mulf %147, %148 : vector<16x32xf32>
    %150 = arith.addf %140, %149 : vector<16x32xf32>
    %151 = arith.addf %99, %150 : vector<16x32xf32>
    %152 = arith.addf %151, %32 : vector<16x32xf32>
    %153 = vector.broadcast %3 : vector<1x32xf32> to vector<16x32xf32>
    %154 = arith.mulf %152, %153 : vector<16x32xf32>
    %155 = vector.broadcast %4 : vector<1x32xf32> to vector<16x32xf32>
    %156 = arith.addf %154, %155 : vector<16x32xf32>
    %cst_33 = arith.constant 0.000000e+00 : f32
    %157 = vector.broadcast %cst_33 : f32 to vector<16x32xf32>
    %158 = arith.maximumf %156, %157 : vector<16x32xf32>
    %159 = vector.broadcast %42 : vector<16x1xf32> to vector<16x32xf32>
    %160 = arith.mulf %158, %159 : vector<16x32xf32>
    %cst_34 = arith.constant dense<0.000000e+00> : vector<16x8xf32>
    %161 = tpu.matmul %160, %21, %cst_34 {dimension_numbers = #tpu.dot_dimension_numbers<[1], [0], [0], [1], [0, 0, 1, 1], [], []>} : vector<16x32xf32>, vector<32x8xf32>, vector<16x8xf32> -> vector<16x8xf32>
    %162 = vector.broadcast %5 : vector<1x8xf32> to vector<16x8xf32>
    %163 = arith.addf %161, %162 : vector<16x8xf32>
    %cst_35 = arith.constant dense<0xFF800000> : vector<16xf32>
    %164 = vector.multi_reduction <maximumf>, %163, %cst_35 [1] : vector<16x8xf32> to vector<16xf32>
    %165 = vector.shape_cast %164 : vector<16xf32> to vector<16x1xf32>
    %166 = vector.broadcast %165 : vector<16x1xf32> to vector<16x8xf32>
    %167 = arith.subf %163, %166 : vector<16x8xf32>
    %168 = math.exp %167 : vector<16x8xf32>
    %cst_36 = arith.constant dense<0.000000e+00> : vector<16xf32>
    %169 = vector.multi_reduction <add>, %168, %cst_36 [1] : vector<16x8xf32> to vector<16xf32>
    %170 = vector.shape_cast %169 : vector<16xf32> to vector<16x1xf32>
    %171 = tpu.reciprocal %170 {approx = true} : vector<16x1xf32> -> vector<16x1xf32>
    %172 = vector.broadcast %171 : vector<16x1xf32> to vector<16x8xf32>
    %173 = arith.mulf %168, %172 : vector<16x8xf32>
    %174 = vector.broadcast %42 : vector<16x1xf32> to vector<16x32xf32>
    %175 = arith.mulf %160, %174 : vector<16x32xf32>
    %176 = vector.broadcast %42 : vector<16x1xf32> to vector<16x8xf32>
    %177 = arith.mulf %173, %176 : vector<16x8xf32>
    %cst_37 = arith.constant dense<0.000000e+00> : vector<8x32xf32>
    %178 = tpu.matmul %177, %175, %cst_37 {dimension_numbers = #tpu.dot_dimension_numbers<[0], [0], [1], [1], [0, 1, 1, 1], [], []>} : vector<16x8xf32>, vector<16x32xf32>, vector<8x32xf32> -> vector<8x32xf32>
    %cst_38 = arith.constant dense<0.000000e+00> : vector<8x16xf32>
    %179 = tpu.matmul %177, %34, %cst_38 {dimension_numbers = #tpu.dot_dimension_numbers<[0], [0], [1], [1], [0, 1, 1, 1], [], []>} : vector<16x8xf32>, vector<16x16xf32>, vector<8x16xf32> -> vector<8x16xf32>
    %cst_39 = arith.constant dense<0.000000e+00> : vector<8x8xf32>
    %180 = tpu.matmul %179, %177, %cst_39 {dimension_numbers = #tpu.dot_dimension_numbers<[1], [0], [0], [1], [0, 0, 1, 1], [], []>} : vector<8x16xf32>, vector<16x8xf32>, vector<8x8xf32> -> vector<8x8xf32>
    %181 = tpu.iota {dimensions = array<i32: 0>} : vector<8x8xi32>
    %182 = tpu.iota {dimensions = array<i32: 1>} : vector<8x8xi32>
    %183 = arith.cmpi eq, %181, %182 : vector<8x8xi32>
    %cst_40 = arith.constant 0.000000e+00 : f32
    %184 = vector.broadcast %cst_40 : f32 to vector<8x8xf32>
    %185 = arith.select %183, %184, %180 : vector<8x8xi1>, vector<8x8xf32>
    %cst_41 = arith.constant dense<0.000000e+00> : vector<8xf32>
    %186 = vector.multi_reduction <add>, %185, %cst_41 [1] : vector<8x8xf32> to vector<8xf32>
    %187 = vector.shape_cast %186 : vector<8xf32> to vector<8x1xf32>
    %188 = math.sqrt %187 : vector<8x1xf32>
    %cst_42 = arith.constant 1.000000e-15 : f32
    %189 = vector.broadcast %cst_42 : f32 to vector<8x1xf32>
    %190 = arith.addf %188, %189 : vector<8x1xf32>
    %191 = tpu.reciprocal %190 {approx = true} : vector<8x1xf32> -> vector<8x1xf32>
    %192 = tpu.transpose %191, [1, 0] : vector<8x1xf32> -> vector<1x8xf32>
    %193 = vector.broadcast %192 : vector<1x8xf32> to vector<8x8xf32>
    %194 = arith.mulf %185, %193 : vector<8x8xf32>
    %195 = vector.broadcast %191 : vector<8x1xf32> to vector<8x8xf32>
    %196 = arith.mulf %194, %195 : vector<8x8xf32>
    %cst_43 = arith.constant dense<0.000000e+00> : vector<8x32xf32>
    %197 = tpu.matmul %196, %178, %cst_43 {dimension_numbers = #tpu.dot_dimension_numbers<[1], [0], [0], [1], [0, 0, 1, 1], [], []>} : vector<8x8xf32>, vector<8x32xf32>, vector<8x32xf32> -> vector<8x32xf32>
    %198 = tpu.concatenate %197, %178 in 1 : vector<8x32xf32>, vector<8x32xf32> -> vector<8x64xf32>
    %cst_44 = arith.constant dense<0.000000e+00> : vector<8x32xf32>
    %199 = tpu.matmul %198, %16, %cst_44 {dimension_numbers = #tpu.dot_dimension_numbers<[1], [0], [0], [1], [0, 0, 1, 1], [], []>} : vector<8x64xf32>, vector<64x32xf32>, vector<8x32xf32> -> vector<8x32xf32>
    %200 = vector.broadcast %6 : vector<1x32xf32> to vector<8x32xf32>
    %201 = arith.addf %199, %200 : vector<8x32xf32>
    %cst_45 = arith.constant dense<0.000000e+00> : vector<8xf32>
    %202 = vector.multi_reduction <add>, %201, %cst_45 [1] : vector<8x32xf32> to vector<8xf32>
    %203 = vector.shape_cast %202 : vector<8xf32> to vector<8x1xf32>
    %cst_46 = arith.constant 3.200000e+01 : f32
    %204 = vector.broadcast %cst_46 : f32 to vector<8x1xf32>
    %205 = arith.divf %203, %204 : vector<8x1xf32>
    %206 = vector.broadcast %205 : vector<8x1xf32> to vector<8x32xf32>
    %207 = arith.subf %201, %206 : vector<8x32xf32>
    %208 = arith.mulf %207, %207 : vector<8x32xf32>
    %cst_47 = arith.constant dense<0.000000e+00> : vector<8xf32>
    %209 = vector.multi_reduction <add>, %208, %cst_47 [1] : vector<8x32xf32> to vector<8xf32>
    %210 = vector.shape_cast %209 : vector<8xf32> to vector<8x1xf32>
    %cst_48 = arith.constant 3.200000e+01 : f32
    %211 = vector.broadcast %cst_48 : f32 to vector<8x1xf32>
    %212 = arith.divf %210, %211 : vector<8x1xf32>
    %cst_49 = arith.constant 9.99999974E-6 : f32
    %213 = vector.broadcast %cst_49 : f32 to vector<8x1xf32>
    %214 = arith.addf %212, %213 : vector<8x1xf32>
    %215 = math.rsqrt %214 : vector<8x1xf32>
    %216 = vector.broadcast %215 : vector<8x1xf32> to vector<8x32xf32>
    %217 = arith.mulf %207, %216 : vector<8x32xf32>
    %218 = vector.broadcast %7 : vector<1x32xf32> to vector<8x32xf32>
    %219 = arith.mulf %217, %218 : vector<8x32xf32>
    %220 = vector.broadcast %8 : vector<1x32xf32> to vector<8x32xf32>
    %221 = arith.addf %219, %220 : vector<8x32xf32>
    %cst_50 = arith.constant 0.000000e+00 : f32
    %222 = vector.broadcast %cst_50 : f32 to vector<8x32xf32>
    %223 = arith.maximumf %221, %222 : vector<8x32xf32>
    %cst_51 = arith.constant dense<0.000000e+00> : vector<8x4xf32>
    %224 = tpu.matmul %223, %22, %cst_51 {dimension_numbers = #tpu.dot_dimension_numbers<[1], [0], [0], [1], [0, 0, 1, 1], [], []>} : vector<8x32xf32>, vector<32x4xf32>, vector<8x4xf32> -> vector<8x4xf32>
    %225 = vector.broadcast %9 : vector<1x4xf32> to vector<8x4xf32>
    %226 = arith.addf %224, %225 : vector<8x4xf32>
    %cst_52 = arith.constant dense<0xFF800000> : vector<8xf32>
    %227 = vector.multi_reduction <maximumf>, %226, %cst_52 [1] : vector<8x4xf32> to vector<8xf32>
    %228 = vector.shape_cast %227 : vector<8xf32> to vector<8x1xf32>
    %229 = vector.broadcast %228 : vector<8x1xf32> to vector<8x4xf32>
    %230 = arith.subf %226, %229 : vector<8x4xf32>
    %231 = math.exp %230 : vector<8x4xf32>
    %cst_53 = arith.constant dense<0.000000e+00> : vector<8xf32>
    %232 = vector.multi_reduction <add>, %231, %cst_53 [1] : vector<8x4xf32> to vector<8xf32>
    %233 = vector.shape_cast %232 : vector<8xf32> to vector<8x1xf32>
    %234 = tpu.reciprocal %233 {approx = true} : vector<8x1xf32> -> vector<8x1xf32>
    %235 = vector.broadcast %234 : vector<8x1xf32> to vector<8x4xf32>
    %236 = arith.mulf %231, %235 : vector<8x4xf32>
    %cst_54 = arith.constant dense<0.000000e+00> : vector<4x32xf32>
    %237 = tpu.matmul %236, %223, %cst_54 {dimension_numbers = #tpu.dot_dimension_numbers<[0], [0], [1], [1], [0, 1, 1, 1], [], []>} : vector<8x4xf32>, vector<8x32xf32>, vector<4x32xf32> -> vector<4x32xf32>
    %cst_55 = arith.constant dense<0.000000e+00> : vector<4x8xf32>
    %238 = tpu.matmul %236, %196, %cst_55 {dimension_numbers = #tpu.dot_dimension_numbers<[0], [0], [1], [1], [0, 1, 1, 1], [], []>} : vector<8x4xf32>, vector<8x8xf32>, vector<4x8xf32> -> vector<4x8xf32>
    %cst_56 = arith.constant dense<0.000000e+00> : vector<4x4xf32>
    %239 = tpu.matmul %238, %236, %cst_56 {dimension_numbers = #tpu.dot_dimension_numbers<[1], [0], [0], [1], [0, 0, 1, 1], [], []>} : vector<4x8xf32>, vector<8x4xf32>, vector<4x4xf32> -> vector<4x4xf32>
    %240 = tpu.iota {dimensions = array<i32: 0>} : vector<4x4xi32>
    %241 = tpu.iota {dimensions = array<i32: 1>} : vector<4x4xi32>
    %242 = arith.cmpi eq, %240, %241 : vector<4x4xi32>
    %cst_57 = arith.constant 0.000000e+00 : f32
    %243 = vector.broadcast %cst_57 : f32 to vector<4x4xf32>
    %244 = arith.select %242, %243, %239 : vector<4x4xi1>, vector<4x4xf32>
    %cst_58 = arith.constant dense<0.000000e+00> : vector<4xf32>
    %245 = vector.multi_reduction <add>, %244, %cst_58 [1] : vector<4x4xf32> to vector<4xf32>
    %246 = vector.shape_cast %245 : vector<4xf32> to vector<4x1xf32>
    %247 = math.sqrt %246 : vector<4x1xf32>
    %cst_59 = arith.constant 1.000000e-15 : f32
    %248 = vector.broadcast %cst_59 : f32 to vector<4x1xf32>
    %249 = arith.addf %247, %248 : vector<4x1xf32>
    %250 = tpu.reciprocal %249 {approx = true} : vector<4x1xf32> -> vector<4x1xf32>
    %251 = tpu.transpose %250, [1, 0] : vector<4x1xf32> -> vector<1x4xf32>
    %252 = vector.broadcast %251 : vector<1x4xf32> to vector<4x4xf32>
    %253 = arith.mulf %244, %252 : vector<4x4xf32>
    %254 = vector.broadcast %250 : vector<4x1xf32> to vector<4x4xf32>
    %255 = arith.mulf %253, %254 : vector<4x4xf32>
    %cst_60 = arith.constant dense<0.000000e+00> : vector<4x32xf32>
    %256 = tpu.matmul %255, %237, %cst_60 {dimension_numbers = #tpu.dot_dimension_numbers<[1], [0], [0], [1], [0, 0, 1, 1], [], []>} : vector<4x4xf32>, vector<4x32xf32>, vector<4x32xf32> -> vector<4x32xf32>
    %257 = tpu.concatenate %256, %237 in 1 : vector<4x32xf32>, vector<4x32xf32> -> vector<4x64xf32>
    %cst_61 = arith.constant dense<0.000000e+00> : vector<4x32xf32>
    %258 = tpu.matmul %257, %17, %cst_61 {dimension_numbers = #tpu.dot_dimension_numbers<[1], [0], [0], [1], [0, 0, 1, 1], [], []>} : vector<4x64xf32>, vector<64x32xf32>, vector<4x32xf32> -> vector<4x32xf32>
    %259 = vector.broadcast %10 : vector<1x32xf32> to vector<4x32xf32>
    %260 = arith.addf %258, %259 : vector<4x32xf32>
    %cst_62 = arith.constant dense<0.000000e+00> : vector<4xf32>
    %261 = vector.multi_reduction <add>, %260, %cst_62 [1] : vector<4x32xf32> to vector<4xf32>
    %262 = vector.shape_cast %261 : vector<4xf32> to vector<4x1xf32>
    %cst_63 = arith.constant 3.200000e+01 : f32
    %263 = vector.broadcast %cst_63 : f32 to vector<4x1xf32>
    %264 = arith.divf %262, %263 : vector<4x1xf32>
    %265 = vector.broadcast %264 : vector<4x1xf32> to vector<4x32xf32>
    %266 = arith.subf %260, %265 : vector<4x32xf32>
    %267 = arith.mulf %266, %266 : vector<4x32xf32>
    %cst_64 = arith.constant dense<0.000000e+00> : vector<4xf32>
    %268 = vector.multi_reduction <add>, %267, %cst_64 [1] : vector<4x32xf32> to vector<4xf32>
    %269 = vector.shape_cast %268 : vector<4xf32> to vector<4x1xf32>
    %cst_65 = arith.constant 3.200000e+01 : f32
    %270 = vector.broadcast %cst_65 : f32 to vector<4x1xf32>
    %271 = arith.divf %269, %270 : vector<4x1xf32>
    %cst_66 = arith.constant 9.99999974E-6 : f32
    %272 = vector.broadcast %cst_66 : f32 to vector<4x1xf32>
    %273 = arith.addf %271, %272 : vector<4x1xf32>
    %274 = math.rsqrt %273 : vector<4x1xf32>
    %275 = vector.broadcast %274 : vector<4x1xf32> to vector<4x32xf32>
    %276 = arith.mulf %266, %275 : vector<4x32xf32>
    %277 = vector.broadcast %11 : vector<1x32xf32> to vector<4x32xf32>
    %278 = arith.mulf %276, %277 : vector<4x32xf32>
    %279 = vector.broadcast %12 : vector<1x32xf32> to vector<4x32xf32>
    %280 = arith.addf %278, %279 : vector<4x32xf32>
    %cst_67 = arith.constant 0.000000e+00 : f32
    %281 = vector.broadcast %cst_67 : f32 to vector<4x32xf32>
    %282 = arith.maximumf %280, %281 : vector<4x32xf32>
    %cst_68 = arith.constant dense<0.000000e+00> : vector<4x32xf32>
    %283 = tpu.matmul %282, %18, %cst_68 {dimension_numbers = #tpu.dot_dimension_numbers<[1], [0], [0], [1], [0, 0, 1, 1], [], []>} : vector<4x32xf32>, vector<32x32xf32>, vector<4x32xf32> -> vector<4x32xf32>
    %284 = vector.broadcast %13 : vector<1x32xf32> to vector<4x32xf32>
    %285 = arith.addf %283, %284 : vector<4x32xf32>
    %cst_69 = arith.constant 0.000000e+00 : f32
    %286 = vector.broadcast %cst_69 : f32 to vector<4x32xf32>
    %287 = arith.maximumf %285, %286 : vector<4x32xf32>
    %cst_70 = arith.constant dense<0.000000e+00> : vector<4x1xf32>
    %288 = tpu.matmul %287, %23, %cst_70 {dimension_numbers = #tpu.dot_dimension_numbers<[1], [0], [0], [1], [0, 0, 1, 1], [], []>} : vector<4x32xf32>, vector<32x1xf32>, vector<4x1xf32> -> vector<4x1xf32>
    %289 = vector.broadcast %14 : vector<1x1xf32> to vector<4x1xf32>
    %290 = arith.addf %288, %289 : vector<4x1xf32>
    %cst_71 = arith.constant dense<0.000000e+00> : vector<1xf32>
    %291 = vector.multi_reduction <add>, %290, %cst_71 [0] : vector<4x1xf32> to vector<1xf32>
    %292 = vector.shape_cast %291 : vector<1xf32> to vector<1x1xf32>
    %cst_72 = arith.constant 4.000000e+00 : f32
    %293 = vector.broadcast %cst_72 : f32 to vector<1x1xf32>
    %294 = arith.divf %292, %293 : vector<1x1xf32>
    %295 = arith.negf %294 : vector<1x1xf32>
    %296 = math.exp %295 : vector<1x1xf32>
    %cst_73 = arith.constant 1.000000e+00 : f32
    %297 = vector.broadcast %cst_73 : f32 to vector<1x1xf32>
    %298 = arith.addf %297, %296 : vector<1x1xf32>
    %299 = arith.divf %297, %298 : vector<1x1xf32>
    %300 = vector.extract_strided_slice %28 {offsets = [16, 0], sizes = [16, 32], strides = [1, 1]} : vector<32x128xf32> to vector<16x32xf32>
    %301 = vector.extract_strided_slice %28 {offsets = [16, 32], sizes = [16, 32], strides = [1, 1]} : vector<32x128xf32> to vector<16x32xf32>
    %302 = vector.extract_strided_slice %28 {offsets = [16, 64], sizes = [16, 32], strides = [1, 1]} : vector<32x128xf32> to vector<16x32xf32>
    %303 = vector.extract_strided_slice %28 {offsets = [16, 96], sizes = [16, 32], strides = [1, 1]} : vector<32x128xf32> to vector<16x32xf32>
    %c1 = arith.constant 1 : index
    %c0_74 = arith.constant 0 : index
    %c0_75 = arith.constant 0 : index
    %304 = vector.load %arg3[%c1, %c0_74, %c0_75] : memref<2x16x16xf32, #tpu.memory_space<vmem>>, vector<1x16x16xf32>
    %305 = vector.shape_cast %304 : vector<1x16x16xf32> to vector<16x16xf32>
    %c1_76 = arith.constant 1 : index
    %c0_77 = arith.constant 0 : index
    %c0_78 = arith.constant 0 : index
    %c0_79 = arith.constant 0 : index
    %306 = vector.load %arg4[%c1_76, %c0_77, %c0_78, %c0_79] : memref<2x5x16x16xf32, #tpu.memory_space<vmem>>, vector<1x5x16x16xf32>
    %307 = vector.shape_cast %306 : vector<1x5x16x16xf32> to vector<5x16x16xf32>
    %308 = tpu.iota {dimensions = array<i32: 0>} : vector<16x1xi32>
    %c1_80 = arith.constant 1 : index
    %309 = memref.load %arg1[%c1_80] : memref<2xi32, #tpu.memory_space<smem>>
    %310 = vector.broadcast %309 : i32 to vector<16x1xi32>
    %311 = arith.cmpi slt, %308, %310 : vector<16x1xi32>
    %312 = arith.extui %311 : vector<16x1xi1> to vector<16x1xi32>
    %313 = arith.sitofp %312 : vector<16x1xi32> to vector<16x1xf32>
    %cst_81 = arith.constant dense<0.000000e+00> : vector<16x16xf32>
    %314 = tpu.matmul %300, %301, %cst_81 {dimension_numbers = #tpu.dot_dimension_numbers<[1], [1], [0], [0], [0, 0, 1, 0], [], []>} : vector<16x32xf32>, vector<16x32xf32>, vector<16x16xf32> -> vector<16x16xf32>
    %cst_82 = arith.constant dense<0.000000e+00> : vector<16x5xf32>
    %315 = tpu.matmul %300, %24, %cst_82 {dimension_numbers = #tpu.dot_dimension_numbers<[1], [0], [0], [1], [0, 0, 1, 1], [], []>} : vector<16x32xf32>, vector<32x5xf32>, vector<16x5xf32> -> vector<16x5xf32>
    %cst_83 = arith.constant 0.000000e+00 : f32
    %316 = vector.broadcast %cst_83 : f32 to vector<16x16xf32>
    %317 = vector.extract_strided_slice %307 {offsets = [0, 0, 0], sizes = [1, 16, 16], strides = [1, 1, 1]} : vector<5x16x16xf32> to vector<1x16x16xf32>
    %318 = vector.shape_cast %317 : vector<1x16x16xf32> to vector<16x16xf32>
    %319 = vector.extract_strided_slice %315 {offsets = [0, 0], sizes = [16, 1], strides = [1, 1]} : vector<16x5xf32> to vector<16x1xf32>
    %320 = vector.broadcast %319 : vector<16x1xf32> to vector<16x16xf32>
    %321 = arith.mulf %318, %320 : vector<16x16xf32>
    %322 = arith.addf %316, %321 : vector<16x16xf32>
    %323 = vector.extract_strided_slice %307 {offsets = [1, 0, 0], sizes = [1, 16, 16], strides = [1, 1, 1]} : vector<5x16x16xf32> to vector<1x16x16xf32>
    %324 = vector.shape_cast %323 : vector<1x16x16xf32> to vector<16x16xf32>
    %325 = vector.extract_strided_slice %315 {offsets = [0, 1], sizes = [16, 1], strides = [1, 1]} : vector<16x5xf32> to vector<16x1xf32>
    %326 = vector.broadcast %325 : vector<16x1xf32> to vector<16x16xf32>
    %327 = arith.mulf %324, %326 : vector<16x16xf32>
    %328 = arith.addf %322, %327 : vector<16x16xf32>
    %329 = vector.extract_strided_slice %307 {offsets = [2, 0, 0], sizes = [1, 16, 16], strides = [1, 1, 1]} : vector<5x16x16xf32> to vector<1x16x16xf32>
    %330 = vector.shape_cast %329 : vector<1x16x16xf32> to vector<16x16xf32>
    %331 = vector.extract_strided_slice %315 {offsets = [0, 2], sizes = [16, 1], strides = [1, 1]} : vector<16x5xf32> to vector<16x1xf32>
    %332 = vector.broadcast %331 : vector<16x1xf32> to vector<16x16xf32>
    %333 = arith.mulf %330, %332 : vector<16x16xf32>
    %334 = arith.addf %328, %333 : vector<16x16xf32>
    %335 = vector.extract_strided_slice %307 {offsets = [3, 0, 0], sizes = [1, 16, 16], strides = [1, 1, 1]} : vector<5x16x16xf32> to vector<1x16x16xf32>
    %336 = vector.shape_cast %335 : vector<1x16x16xf32> to vector<16x16xf32>
    %337 = vector.extract_strided_slice %315 {offsets = [0, 3], sizes = [16, 1], strides = [1, 1]} : vector<16x5xf32> to vector<16x1xf32>
    %338 = vector.broadcast %337 : vector<16x1xf32> to vector<16x16xf32>
    %339 = arith.mulf %336, %338 : vector<16x16xf32>
    %340 = arith.addf %334, %339 : vector<16x16xf32>
    %341 = vector.extract_strided_slice %307 {offsets = [4, 0, 0], sizes = [1, 16, 16], strides = [1, 1, 1]} : vector<5x16x16xf32> to vector<1x16x16xf32>
    %342 = vector.shape_cast %341 : vector<1x16x16xf32> to vector<16x16xf32>
    %343 = vector.extract_strided_slice %315 {offsets = [0, 4], sizes = [16, 1], strides = [1, 1]} : vector<16x5xf32> to vector<16x1xf32>
    %344 = vector.broadcast %343 : vector<16x1xf32> to vector<16x16xf32>
    %345 = arith.mulf %342, %344 : vector<16x16xf32>
    %346 = arith.addf %340, %345 : vector<16x16xf32>
    %347 = arith.addf %314, %346 : vector<16x16xf32>
    %cst_84 = arith.constant 0.176776692 : f32
    %348 = vector.broadcast %cst_84 : f32 to vector<16x16xf32>
    %349 = arith.mulf %347, %348 : vector<16x16xf32>
    %cst_85 = arith.constant 0.000000e+00 : f32
    %350 = vector.broadcast %cst_85 : f32 to vector<16x16xf32>
    %351 = arith.cmpf ogt, %305, %350 : vector<16x16xf32>
    %cst_86 = arith.constant -1.000000e+30 : f32
    %352 = vector.broadcast %cst_86 : f32 to vector<16x16xf32>
    %353 = arith.select %351, %349, %352 : vector<16x16xi1>, vector<16x16xf32>
    %cst_87 = arith.constant dense<0xFF800000> : vector<16xf32>
    %354 = vector.multi_reduction <maximumf>, %353, %cst_87 [1] : vector<16x16xf32> to vector<16xf32>
    %355 = vector.shape_cast %354 : vector<16xf32> to vector<16x1xf32>
    %356 = vector.broadcast %355 : vector<16x1xf32> to vector<16x16xf32>
    %357 = arith.subf %353, %356 : vector<16x16xf32>
    %358 = math.exp %357 : vector<16x16xf32>
    %cst_88 = arith.constant 0.000000e+00 : f32
    %359 = vector.broadcast %cst_88 : f32 to vector<16x16xf32>
    %360 = arith.select %351, %358, %359 : vector<16x16xi1>, vector<16x16xf32>
    %cst_89 = arith.constant dense<0.000000e+00> : vector<16xf32>
    %361 = vector.multi_reduction <add>, %360, %cst_89 [1] : vector<16x16xf32> to vector<16xf32>
    %362 = vector.shape_cast %361 : vector<16xf32> to vector<16x1xf32>
    %cst_90 = arith.constant 0.000000e+00 : f32
    %363 = vector.broadcast %cst_90 : f32 to vector<16x1xf32>
    %364 = arith.cmpf ogt, %362, %363 : vector<16x1xf32>
    %cst_91 = arith.constant 1.000000e+00 : f32
    %365 = vector.broadcast %cst_91 : f32 to vector<16x1xf32>
    %366 = arith.select %364, %362, %365 : vector<16x1xi1>, vector<16x1xf32>
    %367 = tpu.reciprocal %366 {approx = true} : vector<16x1xf32> -> vector<16x1xf32>
    %368 = vector.broadcast %367 : vector<16x1xf32> to vector<16x16xf32>
    %369 = arith.mulf %360, %368 : vector<16x16xf32>
    %cst_92 = arith.constant dense<0.000000e+00> : vector<16x32xf32>
    %370 = tpu.matmul %369, %302, %cst_92 {dimension_numbers = #tpu.dot_dimension_numbers<[1], [0], [0], [1], [0, 0, 1, 1], [], []>} : vector<16x16xf32>, vector<16x32xf32>, vector<16x32xf32> -> vector<16x32xf32>
    %cst_93 = arith.constant 0.000000e+00 : f32
    %371 = vector.broadcast %cst_93 : f32 to vector<16x32xf32>
    %372 = vector.extract_strided_slice %307 {offsets = [0, 0, 0], sizes = [1, 16, 16], strides = [1, 1, 1]} : vector<5x16x16xf32> to vector<1x16x16xf32>
    %373 = vector.shape_cast %372 : vector<1x16x16xf32> to vector<16x16xf32>
    %374 = arith.mulf %369, %373 : vector<16x16xf32>
    %cst_94 = arith.constant dense<0.000000e+00> : vector<16xf32>
    %375 = vector.multi_reduction <add>, %374, %cst_94 [1] : vector<16x16xf32> to vector<16xf32>
    %376 = vector.shape_cast %375 : vector<16xf32> to vector<16x1xf32>
    %377 = vector.extract_strided_slice %19 {offsets = [0, 0], sizes = [1, 32], strides = [1, 1]} : vector<5x32xf32> to vector<1x32xf32>
    %378 = vector.broadcast %376 : vector<16x1xf32> to vector<16x32xf32>
    %379 = vector.broadcast %377 : vector<1x32xf32> to vector<16x32xf32>
    %380 = arith.mulf %378, %379 : vector<16x32xf32>
    %381 = arith.addf %371, %380 : vector<16x32xf32>
    %382 = vector.extract_strided_slice %307 {offsets = [1, 0, 0], sizes = [1, 16, 16], strides = [1, 1, 1]} : vector<5x16x16xf32> to vector<1x16x16xf32>
    %383 = vector.shape_cast %382 : vector<1x16x16xf32> to vector<16x16xf32>
    %384 = arith.mulf %369, %383 : vector<16x16xf32>
    %cst_95 = arith.constant dense<0.000000e+00> : vector<16xf32>
    %385 = vector.multi_reduction <add>, %384, %cst_95 [1] : vector<16x16xf32> to vector<16xf32>
    %386 = vector.shape_cast %385 : vector<16xf32> to vector<16x1xf32>
    %387 = vector.extract_strided_slice %19 {offsets = [1, 0], sizes = [1, 32], strides = [1, 1]} : vector<5x32xf32> to vector<1x32xf32>
    %388 = vector.broadcast %386 : vector<16x1xf32> to vector<16x32xf32>
    %389 = vector.broadcast %387 : vector<1x32xf32> to vector<16x32xf32>
    %390 = arith.mulf %388, %389 : vector<16x32xf32>
    %391 = arith.addf %381, %390 : vector<16x32xf32>
    %392 = vector.extract_strided_slice %307 {offsets = [2, 0, 0], sizes = [1, 16, 16], strides = [1, 1, 1]} : vector<5x16x16xf32> to vector<1x16x16xf32>
    %393 = vector.shape_cast %392 : vector<1x16x16xf32> to vector<16x16xf32>
    %394 = arith.mulf %369, %393 : vector<16x16xf32>
    %cst_96 = arith.constant dense<0.000000e+00> : vector<16xf32>
    %395 = vector.multi_reduction <add>, %394, %cst_96 [1] : vector<16x16xf32> to vector<16xf32>
    %396 = vector.shape_cast %395 : vector<16xf32> to vector<16x1xf32>
    %397 = vector.extract_strided_slice %19 {offsets = [2, 0], sizes = [1, 32], strides = [1, 1]} : vector<5x32xf32> to vector<1x32xf32>
    %398 = vector.broadcast %396 : vector<16x1xf32> to vector<16x32xf32>
    %399 = vector.broadcast %397 : vector<1x32xf32> to vector<16x32xf32>
    %400 = arith.mulf %398, %399 : vector<16x32xf32>
    %401 = arith.addf %391, %400 : vector<16x32xf32>
    %402 = vector.extract_strided_slice %307 {offsets = [3, 0, 0], sizes = [1, 16, 16], strides = [1, 1, 1]} : vector<5x16x16xf32> to vector<1x16x16xf32>
    %403 = vector.shape_cast %402 : vector<1x16x16xf32> to vector<16x16xf32>
    %404 = arith.mulf %369, %403 : vector<16x16xf32>
    %cst_97 = arith.constant dense<0.000000e+00> : vector<16xf32>
    %405 = vector.multi_reduction <add>, %404, %cst_97 [1] : vector<16x16xf32> to vector<16xf32>
    %406 = vector.shape_cast %405 : vector<16xf32> to vector<16x1xf32>
    %407 = vector.extract_strided_slice %19 {offsets = [3, 0], sizes = [1, 32], strides = [1, 1]} : vector<5x32xf32> to vector<1x32xf32>
    %408 = vector.broadcast %406 : vector<16x1xf32> to vector<16x32xf32>
    %409 = vector.broadcast %407 : vector<1x32xf32> to vector<16x32xf32>
    %410 = arith.mulf %408, %409 : vector<16x32xf32>
    %411 = arith.addf %401, %410 : vector<16x32xf32>
    %412 = vector.extract_strided_slice %307 {offsets = [4, 0, 0], sizes = [1, 16, 16], strides = [1, 1, 1]} : vector<5x16x16xf32> to vector<1x16x16xf32>
    %413 = vector.shape_cast %412 : vector<1x16x16xf32> to vector<16x16xf32>
    %414 = arith.mulf %369, %413 : vector<16x16xf32>
    %cst_98 = arith.constant dense<0.000000e+00> : vector<16xf32>
    %415 = vector.multi_reduction <add>, %414, %cst_98 [1] : vector<16x16xf32> to vector<16xf32>
    %416 = vector.shape_cast %415 : vector<16xf32> to vector<16x1xf32>
    %417 = vector.extract_strided_slice %19 {offsets = [4, 0], sizes = [1, 32], strides = [1, 1]} : vector<5x32xf32> to vector<1x32xf32>
    %418 = vector.broadcast %416 : vector<16x1xf32> to vector<16x32xf32>
    %419 = vector.broadcast %417 : vector<1x32xf32> to vector<16x32xf32>
    %420 = arith.mulf %418, %419 : vector<16x32xf32>
    %421 = arith.addf %411, %420 : vector<16x32xf32>
    %422 = arith.addf %370, %421 : vector<16x32xf32>
    %423 = arith.addf %422, %303 : vector<16x32xf32>
    %424 = vector.broadcast %3 : vector<1x32xf32> to vector<16x32xf32>
    %425 = arith.mulf %423, %424 : vector<16x32xf32>
    %426 = vector.broadcast %4 : vector<1x32xf32> to vector<16x32xf32>
    %427 = arith.addf %425, %426 : vector<16x32xf32>
    %cst_99 = arith.constant 0.000000e+00 : f32
    %428 = vector.broadcast %cst_99 : f32 to vector<16x32xf32>
    %429 = arith.maximumf %427, %428 : vector<16x32xf32>
    %430 = vector.broadcast %313 : vector<16x1xf32> to vector<16x32xf32>
    %431 = arith.mulf %429, %430 : vector<16x32xf32>
    %cst_100 = arith.constant dense<0.000000e+00> : vector<16x8xf32>
    %432 = tpu.matmul %431, %21, %cst_100 {dimension_numbers = #tpu.dot_dimension_numbers<[1], [0], [0], [1], [0, 0, 1, 1], [], []>} : vector<16x32xf32>, vector<32x8xf32>, vector<16x8xf32> -> vector<16x8xf32>
    %433 = vector.broadcast %5 : vector<1x8xf32> to vector<16x8xf32>
    %434 = arith.addf %432, %433 : vector<16x8xf32>
    %cst_101 = arith.constant dense<0xFF800000> : vector<16xf32>
    %435 = vector.multi_reduction <maximumf>, %434, %cst_101 [1] : vector<16x8xf32> to vector<16xf32>
    %436 = vector.shape_cast %435 : vector<16xf32> to vector<16x1xf32>
    %437 = vector.broadcast %436 : vector<16x1xf32> to vector<16x8xf32>
    %438 = arith.subf %434, %437 : vector<16x8xf32>
    %439 = math.exp %438 : vector<16x8xf32>
    %cst_102 = arith.constant dense<0.000000e+00> : vector<16xf32>
    %440 = vector.multi_reduction <add>, %439, %cst_102 [1] : vector<16x8xf32> to vector<16xf32>
    %441 = vector.shape_cast %440 : vector<16xf32> to vector<16x1xf32>
    %442 = tpu.reciprocal %441 {approx = true} : vector<16x1xf32> -> vector<16x1xf32>
    %443 = vector.broadcast %442 : vector<16x1xf32> to vector<16x8xf32>
    %444 = arith.mulf %439, %443 : vector<16x8xf32>
    %445 = vector.broadcast %313 : vector<16x1xf32> to vector<16x32xf32>
    %446 = arith.mulf %431, %445 : vector<16x32xf32>
    %447 = vector.broadcast %313 : vector<16x1xf32> to vector<16x8xf32>
    %448 = arith.mulf %444, %447 : vector<16x8xf32>
    %cst_103 = arith.constant dense<0.000000e+00> : vector<8x32xf32>
    %449 = tpu.matmul %448, %446, %cst_103 {dimension_numbers = #tpu.dot_dimension_numbers<[0], [0], [1], [1], [0, 1, 1, 1], [], []>} : vector<16x8xf32>, vector<16x32xf32>, vector<8x32xf32> -> vector<8x32xf32>
    %cst_104 = arith.constant dense<0.000000e+00> : vector<8x16xf32>
    %450 = tpu.matmul %448, %305, %cst_104 {dimension_numbers = #tpu.dot_dimension_numbers<[0], [0], [1], [1], [0, 1, 1, 1], [], []>} : vector<16x8xf32>, vector<16x16xf32>, vector<8x16xf32> -> vector<8x16xf32>
    %cst_105 = arith.constant dense<0.000000e+00> : vector<8x8xf32>
    %451 = tpu.matmul %450, %448, %cst_105 {dimension_numbers = #tpu.dot_dimension_numbers<[1], [0], [0], [1], [0, 0, 1, 1], [], []>} : vector<8x16xf32>, vector<16x8xf32>, vector<8x8xf32> -> vector<8x8xf32>
    %452 = tpu.iota {dimensions = array<i32: 0>} : vector<8x8xi32>
    %453 = tpu.iota {dimensions = array<i32: 1>} : vector<8x8xi32>
    %454 = arith.cmpi eq, %452, %453 : vector<8x8xi32>
    %cst_106 = arith.constant 0.000000e+00 : f32
    %455 = vector.broadcast %cst_106 : f32 to vector<8x8xf32>
    %456 = arith.select %454, %455, %451 : vector<8x8xi1>, vector<8x8xf32>
    %cst_107 = arith.constant dense<0.000000e+00> : vector<8xf32>
    %457 = vector.multi_reduction <add>, %456, %cst_107 [1] : vector<8x8xf32> to vector<8xf32>
    %458 = vector.shape_cast %457 : vector<8xf32> to vector<8x1xf32>
    %459 = math.sqrt %458 : vector<8x1xf32>
    %cst_108 = arith.constant 1.000000e-15 : f32
    %460 = vector.broadcast %cst_108 : f32 to vector<8x1xf32>
    %461 = arith.addf %459, %460 : vector<8x1xf32>
    %462 = tpu.reciprocal %461 {approx = true} : vector<8x1xf32> -> vector<8x1xf32>
    %463 = tpu.transpose %462, [1, 0] : vector<8x1xf32> -> vector<1x8xf32>
    %464 = vector.broadcast %463 : vector<1x8xf32> to vector<8x8xf32>
    %465 = arith.mulf %456, %464 : vector<8x8xf32>
    %466 = vector.broadcast %462 : vector<8x1xf32> to vector<8x8xf32>
    %467 = arith.mulf %465, %466 : vector<8x8xf32>
    %cst_109 = arith.constant dense<0.000000e+00> : vector<8x32xf32>
    %468 = tpu.matmul %467, %449, %cst_109 {dimension_numbers = #tpu.dot_dimension_numbers<[1], [0], [0], [1], [0, 0, 1, 1], [], []>} : vector<8x8xf32>, vector<8x32xf32>, vector<8x32xf32> -> vector<8x32xf32>
    %469 = tpu.concatenate %468, %449 in 1 : vector<8x32xf32>, vector<8x32xf32> -> vector<8x64xf32>
    %cst_110 = arith.constant dense<0.000000e+00> : vector<8x32xf32>
    %470 = tpu.matmul %469, %16, %cst_110 {dimension_numbers = #tpu.dot_dimension_numbers<[1], [0], [0], [1], [0, 0, 1, 1], [], []>} : vector<8x64xf32>, vector<64x32xf32>, vector<8x32xf32> -> vector<8x32xf32>
    %471 = vector.broadcast %6 : vector<1x32xf32> to vector<8x32xf32>
    %472 = arith.addf %470, %471 : vector<8x32xf32>
    %cst_111 = arith.constant dense<0.000000e+00> : vector<8xf32>
    %473 = vector.multi_reduction <add>, %472, %cst_111 [1] : vector<8x32xf32> to vector<8xf32>
    %474 = vector.shape_cast %473 : vector<8xf32> to vector<8x1xf32>
    %cst_112 = arith.constant 3.200000e+01 : f32
    %475 = vector.broadcast %cst_112 : f32 to vector<8x1xf32>
    %476 = arith.divf %474, %475 : vector<8x1xf32>
    %477 = vector.broadcast %476 : vector<8x1xf32> to vector<8x32xf32>
    %478 = arith.subf %472, %477 : vector<8x32xf32>
    %479 = arith.mulf %478, %478 : vector<8x32xf32>
    %cst_113 = arith.constant dense<0.000000e+00> : vector<8xf32>
    %480 = vector.multi_reduction <add>, %479, %cst_113 [1] : vector<8x32xf32> to vector<8xf32>
    %481 = vector.shape_cast %480 : vector<8xf32> to vector<8x1xf32>
    %cst_114 = arith.constant 3.200000e+01 : f32
    %482 = vector.broadcast %cst_114 : f32 to vector<8x1xf32>
    %483 = arith.divf %481, %482 : vector<8x1xf32>
    %cst_115 = arith.constant 9.99999974E-6 : f32
    %484 = vector.broadcast %cst_115 : f32 to vector<8x1xf32>
    %485 = arith.addf %483, %484 : vector<8x1xf32>
    %486 = math.rsqrt %485 : vector<8x1xf32>
    %487 = vector.broadcast %486 : vector<8x1xf32> to vector<8x32xf32>
    %488 = arith.mulf %478, %487 : vector<8x32xf32>
    %489 = vector.broadcast %7 : vector<1x32xf32> to vector<8x32xf32>
    %490 = arith.mulf %488, %489 : vector<8x32xf32>
    %491 = vector.broadcast %8 : vector<1x32xf32> to vector<8x32xf32>
    %492 = arith.addf %490, %491 : vector<8x32xf32>
    %cst_116 = arith.constant 0.000000e+00 : f32
    %493 = vector.broadcast %cst_116 : f32 to vector<8x32xf32>
    %494 = arith.maximumf %492, %493 : vector<8x32xf32>
    %cst_117 = arith.constant dense<0.000000e+00> : vector<8x4xf32>
    %495 = tpu.matmul %494, %22, %cst_117 {dimension_numbers = #tpu.dot_dimension_numbers<[1], [0], [0], [1], [0, 0, 1, 1], [], []>} : vector<8x32xf32>, vector<32x4xf32>, vector<8x4xf32> -> vector<8x4xf32>
    %496 = vector.broadcast %9 : vector<1x4xf32> to vector<8x4xf32>
    %497 = arith.addf %495, %496 : vector<8x4xf32>
    %cst_118 = arith.constant dense<0xFF800000> : vector<8xf32>
    %498 = vector.multi_reduction <maximumf>, %497, %cst_118 [1] : vector<8x4xf32> to vector<8xf32>
    %499 = vector.shape_cast %498 : vector<8xf32> to vector<8x1xf32>
    %500 = vector.broadcast %499 : vector<8x1xf32> to vector<8x4xf32>
    %501 = arith.subf %497, %500 : vector<8x4xf32>
    %502 = math.exp %501 : vector<8x4xf32>
    %cst_119 = arith.constant dense<0.000000e+00> : vector<8xf32>
    %503 = vector.multi_reduction <add>, %502, %cst_119 [1] : vector<8x4xf32> to vector<8xf32>
    %504 = vector.shape_cast %503 : vector<8xf32> to vector<8x1xf32>
    %505 = tpu.reciprocal %504 {approx = true} : vector<8x1xf32> -> vector<8x1xf32>
    %506 = vector.broadcast %505 : vector<8x1xf32> to vector<8x4xf32>
    %507 = arith.mulf %502, %506 : vector<8x4xf32>
    %cst_120 = arith.constant dense<0.000000e+00> : vector<4x32xf32>
    %508 = tpu.matmul %507, %494, %cst_120 {dimension_numbers = #tpu.dot_dimension_numbers<[0], [0], [1], [1], [0, 1, 1, 1], [], []>} : vector<8x4xf32>, vector<8x32xf32>, vector<4x32xf32> -> vector<4x32xf32>
    %cst_121 = arith.constant dense<0.000000e+00> : vector<4x8xf32>
    %509 = tpu.matmul %507, %467, %cst_121 {dimension_numbers = #tpu.dot_dimension_numbers<[0], [0], [1], [1], [0, 1, 1, 1], [], []>} : vector<8x4xf32>, vector<8x8xf32>, vector<4x8xf32> -> vector<4x8xf32>
    %cst_122 = arith.constant dense<0.000000e+00> : vector<4x4xf32>
    %510 = tpu.matmul %509, %507, %cst_122 {dimension_numbers = #tpu.dot_dimension_numbers<[1], [0], [0], [1], [0, 0, 1, 1], [], []>} : vector<4x8xf32>, vector<8x4xf32>, vector<4x4xf32> -> vector<4x4xf32>
    %511 = tpu.iota {dimensions = array<i32: 0>} : vector<4x4xi32>
    %512 = tpu.iota {dimensions = array<i32: 1>} : vector<4x4xi32>
    %513 = arith.cmpi eq, %511, %512 : vector<4x4xi32>
    %cst_123 = arith.constant 0.000000e+00 : f32
    %514 = vector.broadcast %cst_123 : f32 to vector<4x4xf32>
    %515 = arith.select %513, %514, %510 : vector<4x4xi1>, vector<4x4xf32>
    %cst_124 = arith.constant dense<0.000000e+00> : vector<4xf32>
    %516 = vector.multi_reduction <add>, %515, %cst_124 [1] : vector<4x4xf32> to vector<4xf32>
    %517 = vector.shape_cast %516 : vector<4xf32> to vector<4x1xf32>
    %518 = math.sqrt %517 : vector<4x1xf32>
    %cst_125 = arith.constant 1.000000e-15 : f32
    %519 = vector.broadcast %cst_125 : f32 to vector<4x1xf32>
    %520 = arith.addf %518, %519 : vector<4x1xf32>
    %521 = tpu.reciprocal %520 {approx = true} : vector<4x1xf32> -> vector<4x1xf32>
    %522 = tpu.transpose %521, [1, 0] : vector<4x1xf32> -> vector<1x4xf32>
    %523 = vector.broadcast %522 : vector<1x4xf32> to vector<4x4xf32>
    %524 = arith.mulf %515, %523 : vector<4x4xf32>
    %525 = vector.broadcast %521 : vector<4x1xf32> to vector<4x4xf32>
    %526 = arith.mulf %524, %525 : vector<4x4xf32>
    %cst_126 = arith.constant dense<0.000000e+00> : vector<4x32xf32>
    %527 = tpu.matmul %526, %508, %cst_126 {dimension_numbers = #tpu.dot_dimension_numbers<[1], [0], [0], [1], [0, 0, 1, 1], [], []>} : vector<4x4xf32>, vector<4x32xf32>, vector<4x32xf32> -> vector<4x32xf32>
    %528 = tpu.concatenate %527, %508 in 1 : vector<4x32xf32>, vector<4x32xf32> -> vector<4x64xf32>
    %cst_127 = arith.constant dense<0.000000e+00> : vector<4x32xf32>
    %529 = tpu.matmul %528, %17, %cst_127 {dimension_numbers = #tpu.dot_dimension_numbers<[1], [0], [0], [1], [0, 0, 1, 1], [], []>} : vector<4x64xf32>, vector<64x32xf32>, vector<4x32xf32> -> vector<4x32xf32>
    %530 = vector.broadcast %10 : vector<1x32xf32> to vector<4x32xf32>
    %531 = arith.addf %529, %530 : vector<4x32xf32>
    %cst_128 = arith.constant dense<0.000000e+00> : vector<4xf32>
    %532 = vector.multi_reduction <add>, %531, %cst_128 [1] : vector<4x32xf32> to vector<4xf32>
    %533 = vector.shape_cast %532 : vector<4xf32> to vector<4x1xf32>
    %cst_129 = arith.constant 3.200000e+01 : f32
    %534 = vector.broadcast %cst_129 : f32 to vector<4x1xf32>
    %535 = arith.divf %533, %534 : vector<4x1xf32>
    %536 = vector.broadcast %535 : vector<4x1xf32> to vector<4x32xf32>
    %537 = arith.subf %531, %536 : vector<4x32xf32>
    %538 = arith.mulf %537, %537 : vector<4x32xf32>
    %cst_130 = arith.constant dense<0.000000e+00> : vector<4xf32>
    %539 = vector.multi_reduction <add>, %538, %cst_130 [1] : vector<4x32xf32> to vector<4xf32>
    %540 = vector.shape_cast %539 : vector<4xf32> to vector<4x1xf32>
    %cst_131 = arith.constant 3.200000e+01 : f32
    %541 = vector.broadcast %cst_131 : f32 to vector<4x1xf32>
    %542 = arith.divf %540, %541 : vector<4x1xf32>
    %cst_132 = arith.constant 9.99999974E-6 : f32
    %543 = vector.broadcast %cst_132 : f32 to vector<4x1xf32>
    %544 = arith.addf %542, %543 : vector<4x1xf32>
    %545 = math.rsqrt %544 : vector<4x1xf32>
    %546 = vector.broadcast %545 : vector<4x1xf32> to vector<4x32xf32>
    %547 = arith.mulf %537, %546 : vector<4x32xf32>
    %548 = vector.broadcast %11 : vector<1x32xf32> to vector<4x32xf32>
    %549 = arith.mulf %547, %548 : vector<4x32xf32>
    %550 = vector.broadcast %12 : vector<1x32xf32> to vector<4x32xf32>
    %551 = arith.addf %549, %550 : vector<4x32xf32>
    %cst_133 = arith.constant 0.000000e+00 : f32
    %552 = vector.broadcast %cst_133 : f32 to vector<4x32xf32>
    %553 = arith.maximumf %551, %552 : vector<4x32xf32>
    %cst_134 = arith.constant dense<0.000000e+00> : vector<4x32xf32>
    %554 = tpu.matmul %553, %18, %cst_134 {dimension_numbers = #tpu.dot_dimension_numbers<[1], [0], [0], [1], [0, 0, 1, 1], [], []>} : vector<4x32xf32>, vector<32x32xf32>, vector<4x32xf32> -> vector<4x32xf32>
    %555 = vector.broadcast %13 : vector<1x32xf32> to vector<4x32xf32>
    %556 = arith.addf %554, %555 : vector<4x32xf32>
    %cst_135 = arith.constant 0.000000e+00 : f32
    %557 = vector.broadcast %cst_135 : f32 to vector<4x32xf32>
    %558 = arith.maximumf %556, %557 : vector<4x32xf32>
    %cst_136 = arith.constant dense<0.000000e+00> : vector<4x1xf32>
    %559 = tpu.matmul %558, %23, %cst_136 {dimension_numbers = #tpu.dot_dimension_numbers<[1], [0], [0], [1], [0, 0, 1, 1], [], []>} : vector<4x32xf32>, vector<32x1xf32>, vector<4x1xf32> -> vector<4x1xf32>
    %560 = vector.broadcast %14 : vector<1x1xf32> to vector<4x1xf32>
    %561 = arith.addf %559, %560 : vector<4x1xf32>
    %cst_137 = arith.constant dense<0.000000e+00> : vector<1xf32>
    %562 = vector.multi_reduction <add>, %561, %cst_137 [0] : vector<4x1xf32> to vector<1xf32>
    %563 = vector.shape_cast %562 : vector<1xf32> to vector<1x1xf32>
    %cst_138 = arith.constant 4.000000e+00 : f32
    %564 = vector.broadcast %cst_138 : f32 to vector<1x1xf32>
    %565 = arith.divf %563, %564 : vector<1x1xf32>
    %566 = arith.negf %565 : vector<1x1xf32>
    %567 = math.exp %566 : vector<1x1xf32>
    %cst_139 = arith.constant 1.000000e+00 : f32
    %568 = vector.broadcast %cst_139 : f32 to vector<1x1xf32>
    %569 = arith.addf %568, %567 : vector<1x1xf32>
    %570 = arith.divf %568, %569 : vector<1x1xf32>
    %571 = tpu.concatenate %299, %570 in 0 : vector<1x1xf32>, vector<1x1xf32> -> vector<2x1xf32>
    %572 = vector.shape_cast %571 : vector<2x1xf32> to vector<2x1xf32>
    %573 = vector.broadcast %572 : vector<2x1xf32> to vector<2x128xf32>
    %c0_140 = arith.constant 0 : index
    %c0_141 = arith.constant 0 : index
    %574 = vector.load %arg8[%c0_140, %c0_141] : memref<2x128xf32, #tpu.memory_space<vmem>>, vector<2x128xf32>
    tpu.vector_store %arg8[%c0_140, %c0_141], %573 {strides = array<i32>} : memref<2x128xf32, #tpu.memory_space<vmem>>, vector<2x128xf32>,
    return
  }
  func.func @transform_0(%arg0: i32, %arg1: memref<2xi32, #tpu.memory_space<smem>>) -> (i32, i32) {
    %c0_i32 = arith.constant 0 : i32
    %c0_i32_0 = arith.constant 0 : i32
    %c0_i32_1 = arith.constant 0 : i32
    return %c0_i32, %c0_i32_0 : i32, i32
  }
  func.func @transform_1(%arg0: i32, %arg1: memref<2xi32, #tpu.memory_space<smem>>) -> (i32, i32, i32) {
    %c0_i32 = arith.constant 0 : i32
    %c0_i32_0 = arith.constant 0 : i32
    %c0_i32_1 = arith.constant 0 : i32
    %c0_i32_2 = arith.constant 0 : i32
    return %c0_i32, %c0_i32_0, %c0_i32_1 : i32, i32, i32
  }
  func.func @transform_2(%arg0: i32, %arg1: memref<2xi32, #tpu.memory_space<smem>>) -> (i32, i32, i32, i32) {
    %c0_i32 = arith.constant 0 : i32
    %c0_i32_0 = arith.constant 0 : i32
    %c0_i32_1 = arith.constant 0 : i32
    %c0_i32_2 = arith.constant 0 : i32
    %c0_i32_3 = arith.constant 0 : i32
    return %c0_i32, %c0_i32_0, %c0_i32_1, %c0_i32_2 : i32, i32, i32, i32
  }
  func.func @transform_3(%arg0: i32, %arg1: memref<2xi32, #tpu.memory_space<smem>>) -> (i32, i32) {
    %c0_i32 = arith.constant 0 : i32
    %c0_i32_0 = arith.constant 0 : i32
    %c0_i32_1 = arith.constant 0 : i32
    return %c0_i32, %c0_i32_0 : i32, i32
  }
  func.func @transform_4(%arg0: i32, %arg1: memref<2xi32, #tpu.memory_space<smem>>) -> (i32, i32) {
    %c0_i32 = arith.constant 0 : i32
    %c0_i32_0 = arith.constant 0 : i32
    %c0_i32_1 = arith.constant 0 : i32
    return %c0_i32, %c0_i32_0 : i32, i32
  }
  func.func @transform_5(%arg0: i32, %arg1: memref<2xi32, #tpu.memory_space<smem>>) -> (i32, i32) {
    %c0_i32 = arith.constant 0 : i32
    %c0_i32_0 = arith.constant 0 : i32
    %c0_i32_1 = arith.constant 0 : i32
    return %c0_i32, %c0_i32_0 : i32, i32
  }
  func.func @transform_6(%arg0: i32, %arg1: memref<2xi32, #tpu.memory_space<smem>>) -> (i32, i32) {
    %c0_i32 = arith.constant 0 : i32
    %c0_i32_0 = arith.constant 0 : i32
    %c0_i32_1 = arith.constant 0 : i32
    return %c0_i32, %c0_i32_0 : i32, i32
  }
}

</mosaic_0001>

<llo_original>
// kernel: forward.1
$region0: #{forward.1}
  #allocation0 [shape = 'u32[]', space=smem, size = 0x4, offset = 0x4, fixed_abs, tag = 'smem constant byte address 0x4 - core index']
  #allocation1 [shape = 'u32[72,128]{1,0:T(1,128)}', space=vmem, size = 0x9000, scoped, tag = 'internal scratch']
  #allocation2 [shape = 's32[1]{0}', space=sflag, size = 0x4, scoped, tag = 'scoped memory for forward.1']
  #allocation3 [shape = 'u8[512]{0}', space=smem, size = 0x200, scoped, tag = 'prefetched SMEM operand 0']
  %s0 = inlined_call_operand.vmem [shape: s32[2], index: 0, kind: input, shape index: {}]
  %s1 = inlined_call_operand.vmem [shape: f32[32,4], index: 1, kind: input, shape index: {}]
  %s2 = inlined_call_operand.vmem [shape: f32[2,16,16], index: 2, kind: input, shape index: {}]
  %s3 = inlined_call_operand.vmem [shape: f32[2,5,16,16], index: 3, kind: input, shape index: {}]
  %s4 = inlined_call_operand.vmem [shape: f32[17,128], index: 4, kind: input, shape index: {}]
  %s5 = inlined_call_operand.vmem [shape: f32[165,32], index: 5, kind: input, shape index: {}]
  %s6 = inlined_call_operand.vmem [shape: f32[32,18], index: 6, kind: input, shape index: {}]
  %s7 = inlined_call_operand.vmem [shape: f32[2,128], index: 7, kind: output, shape index: {}]
  %s8 = sld [smem:[#allocation0]]
  $region34: #{forward.1} parent=0
    _
  %s10 = ssub.s32 1, %s8
  %s11 = scalar_select 0, %s10, %s8
  %s13 = sshll.u32 %s0, 4
  %s14 = int_to_ptr.vmem [resolvable:$true] %s13
  %16 = dma.vmem_to_smem %s14, 16, [#allocation3], [#allocation2]
  %18 = dma.done [#allocation2], 16
  %19 = sfence
  // Predicated region
  $region2: #{forward.1} parent=0 // pred_check
    _
  $region3: #{forward.1} parent=0 // pred_check_branch
    %21 = sbr.rel (0) target = $region5
  $region4: #{forward.1} parent=0 // pred_region
    _
  $region5: #{forward.1} parent=0 // pred_fallthru
    _
  // Predicated region
  $region6: #{forward.1} parent=0 // pred_check
    _
  $region7: #{forward.1} parent=0 // pred_check_branch
    %23 = sbr.rel (0) target = $region9
  $region8: #{forward.1} parent=0 // pred_region
    _
  $region9: #{forward.1} parent=0 // pred_fallthru
    _
  // Predicated region
  $region10: #{forward.1} parent=0 // pred_check
    _
  $region11: #{forward.1} parent=0 // pred_check_branch
    %25 = sbr.rel (0) target = $region13
  $region12: #{forward.1} parent=0 // pred_region
    _
  $region13: #{forward.1} parent=0 // pred_fallthru
    _
  // Predicated region
  $region14: #{forward.1} parent=0 // pred_check
    _
  $region15: #{forward.1} parent=0 // pred_check_branch
    %27 = sbr.rel (0) target = $region17
  $region16: #{forward.1} parent=0 // pred_region
    _
  $region17: #{forward.1} parent=0 // pred_fallthru
    _
  // Predicated region
  $region18: #{forward.1} parent=0 // pred_check
    _
  $region19: #{forward.1} parent=0 // pred_check_branch
    %29 = sbr.rel (0) target = $region21
  $region20: #{forward.1} parent=0 // pred_region
    _
  $region21: #{forward.1} parent=0 // pred_fallthru
    _
  // Predicated region
  $region22: #{forward.1} parent=0 // pred_check
    _
  $region23: #{forward.1} parent=0 // pred_check_branch
    %31 = sbr.rel (0) target = $region25
  $region24: #{forward.1} parent=0 // pred_region
    _
  $region25: #{forward.1} parent=0 // pred_fallthru
    _
  %v32 = vld [vmem:[%s4] sm:$0xff]
  %v33 = vld [vmem:[%s4 + $0x8] sm:$0xff]
  %v34 = vld [vmem:[%s4 + $0x10] sm:$0x1]
  %v35 = vld [vmem:[%s5] sm:$0xff]
  %v36 = vld [vmem:[%s5 + $0x8] sm:$0xff]
  %v37 = vld [vmem:[%s5 + $0x10] sm:$0xff]
  %v38 = vld [vmem:[%s5 + $0x18] sm:$0xff]
  %v39 = vld [vmem:[%s5 + $0x20] sm:$0xff]
  %v40 = vld [vmem:[%s5 + $0x28] sm:$0xff]
  %v41 = vld [vmem:[%s5 + $0x30] sm:$0xff]
  %v42 = vld [vmem:[%s5 + $0x38] sm:$0xff]
  %v43 = vld [vmem:[%s5 + $0x40] sm:$0xff]
  %v44 = vld [vmem:[%s5 + $0x48] sm:$0xff]
  %v45 = vld [vmem:[%s5 + $0x50] sm:$0xff]
  %v46 = vld [vmem:[%s5 + $0x58] sm:$0xff]
  %v47 = vld [vmem:[%s5 + $0x60] sm:$0xff]
  %v48 = vld [vmem:[%s5 + $0x68] sm:$0xff]
  %v49 = vld [vmem:[%s5 + $0x70] sm:$0xff]
  %v50 = vld [vmem:[%s5 + $0x78] sm:$0xff]
  %v51 = vld [vmem:[%s5 + $0x80] sm:$0xff]
  %v52 = vld [vmem:[%s5 + $0x88] sm:$0xff]
  %v53 = vld [vmem:[%s5 + $0x90] sm:$0xff]
  %v54 = vld [vmem:[%s5 + $0x98] sm:$0xff]
  %v55 = vld [vmem:[%s5 + $0xa0] sm:$0x1f]
  %v56 = vld [vmem:[%s6] sm:$0xff]
  %v57 = vld [vmem:[%s6 + $0x8] sm:$0xff]
  %v58 = vld [vmem:[%s6 + $0x10] sm:$0xff]
  %v59 = vld [vmem:[%s6 + $0x18] sm:$0xff]
  %v60 = vld [vmem:[%s1] sm:$0xff]
  %v61 = vld [vmem:[%s1 + $0x8] sm:$0xff]
  %v62 = vld [vmem:[%s1 + $0x10] sm:$0xff]
  %v63 = vld [vmem:[%s1 + $0x18] sm:$0xff]
  %v64 = vperm.slane %v32, 4
  %vm65 = vcmask 31744
  %v67 = vsel %vm65, %v60, 0
  %v70 = vsel %vm65, %v61, 0
  %v73 = vsel %vm65, %v62, 0
  %v76 = vsel %vm65, %v63, 0
  %vm78 = vcmask 1043456
  %v80 = vsel %vm78, %v32, 0
  %82 = vmatpush.msra.mxu0 0.0
  %83 = vmatpush.msra.mxu0 0.0
  %84 = vmatpush.msra.mxu0 0.0
  %85 = vmatpush.msra.mxu0 0.0
  %86 = vmatpush.msra.mxu0 0.0
  %87 = vmatpush.msra.mxu0 0.0
  %88 = vmatpush.msra.mxu0 0.0
  %89 = vmatpush.msra.mxu0 0.0
  %90 = vmatpush.msra.mxu0 0.0
  %91 = vmatpush.msra.mxu0 0.0
  %92 = vmatpush.msra.mxu0 0.0
  %93 = vmatpush.msra.mxu0 0.0
  %94 = vmatpush.msra.mxu0 0.0
  %95 = vmatpush.msra.mxu0 0.0
  %96 = vmatpush.msra.mxu0 0.0
  %97 = vmatpush.msra.mxu0 %v80
  %98 = vmatmul.f32.gmra.mxu0 %v67
  %v99 = vpop.f32.mrf.mxu0
  %v100 = vadd.f32 %v64, %v99
  %101 = vmatmul.f32.gmra.mxu0 %v70
  %v102 = vpop.f32.mrf.mxu0
  %v103 = vadd.f32 %v64, %v102
  %104 = vmatmul.f32.gmra.mxu0 %v73
  %v105 = vpop.f32.mrf.mxu0
  %v106 = vadd.f32 %v64, %v105
  %107 = vmatmul.f32.gmra.mxu0 %v76
  %v108 = vpop.f32.mrf.mxu0
  %v109 = vadd.f32 %v64, %v108
  %110 = vdwg.mxu0
  %v111 = vld [vmem:[%s2] sm:$0xff]
  %v112 = vld [vmem:[%s2 + $0x8] sm:$0xff]
  %v113 = vld [vmem:[%s3] sm:$0xff]
  %v114 = vld [vmem:[%s3 + $0x8] sm:$0xff]
  %v115 = vld [vmem:[%s3 + $0x10] sm:$0xff]
  %v116 = vld [vmem:[%s3 + $0x18] sm:$0xff]
  %v117 = vld [vmem:[%s3 + $0x20] sm:$0xff]
  %v118 = vld [vmem:[%s3 + $0x28] sm:$0xff]
  %v119 = vld [vmem:[%s3 + $0x30] sm:$0xff]
  %v120 = vld [vmem:[%s3 + $0x38] sm:$0xff]
  %v121 = vld [vmem:[%s3 + $0x40] sm:$0xff]
  %v122 = vld [vmem:[%s3 + $0x48] sm:$0xff]
  %v123 = vlaneseq
  %v124 = vshrl.u32 %v123, 7
  %v125 = vadd.s32 %v124, 8
  %s126 = sld [smem:[#allocation3]]
  %v127 = vstv %s126
  %vm128 = vcmp.lt.s32.totalorder %v124, %v127
  %vm129 = vcmp.lt.s32.totalorder %v125, %v127
  %v130 = vsel %vm128, 1, 0
  %v131 = vsel %vm129, 1, 0
  %v132 = vcvt.s32.f32 %v130
  %v133 = vcvt.s32.f32 %v131
  %138 = vrot.lane.b32.xlu0 %v56, 115
  %v139 = vpop.permute.xlu0 %138
  %140 = vrot.lane.b32.xlu0 %v57, 115
  %v141 = vpop.permute.xlu0 %140
  %142 = vrot.lane.b32.xlu0 %v58, 115
  %v143 = vpop.permute.xlu0 %142
  %144 = vrot.lane.b32.xlu0 %v59, 115
  %v145 = vpop.permute.xlu0 %144
  %vm150 = vcmask 261120
  %v152 = vsel %vm150, %v100, 0
  %v155 = vsel %vm150, %v103, 0
  %157 = vmatpush.msra.mxu0 0.0
  %158 = vmatpush.msra.mxu0 0.0
  %159 = vmatpush.msra.mxu0 0.0
  %160 = vmatpush.msra.mxu0 0.0
  %161 = vmatpush.msra.mxu0 0.0
  %162 = vmatpush.msra.mxu0 0.0
  %163 = vmatpush.msra.mxu0 0.0
  %164 = vmatpush.msra.mxu0 0.0
  %165 = vmatpush.msra.mxu0 0.0
  %166 = vmatpush.msra.mxu0 0.0
  %167 = vmatpush.msra.mxu0 0.0
  %168 = vmatpush.msra.mxu0 0.0
  %169 = vmatpush.msra.mxu0 %v145
  %170 = vmatpush.msra.mxu0 %v143
  %171 = vmatpush.msra.mxu0 %v141
  %172 = vmatpush.msra.mxu0 %v139
  %173 = vmatmul.f32.gmra.mxu0 %v152
  %v174 = vpop.f32.mrf.mxu0
  %v175 = vadd.f32 0.0, %v174
  %176 = vmatmul.f32.gmra.mxu0 %v155
  %v177 = vpop.f32.mrf.mxu0
  %v178 = vadd.f32 0.0, %v177
  %179 = vdwg.mxu0
  %181 = vset.pattern.permute.xlu0 0
  %182 = vperm.xlu0 %181, %v175
  %v183 = vpop.permute.xlu0 %182
  %186 = vset.pattern.permute.xlu0 0
  %187 = vperm.xlu0 %186, %v178
  %v188 = vpop.permute.xlu0 %187
  %v190 = vmul.f32 %v113, %v183
  %v191 = vmul.f32 %v114, %v188
  %v192 = vadd.f32 %v190, 0.0
  %v193 = vadd.f32 %v191, 0.0
  %194 = vset.pattern.permute.xlu0 1
  %195 = vperm.xlu0 %194, %v175
  %v196 = vpop.permute.xlu0 %195
  %198 = vset.pattern.permute.xlu0 1
  %199 = vperm.xlu0 %198, %v178
  %v200 = vpop.permute.xlu0 %199
  %v202 = vmul.f32 %v115, %v196
  %v203 = vmul.f32 %v116, %v200
  %v204 = vadd.f32 %v192, %v202
  %v205 = vadd.f32 %v193, %v203
  %206 = vset.pattern.permute.xlu0 2
  %207 = vperm.xlu0 %206, %v175
  %v208 = vpop.permute.xlu0 %207
  %210 = vset.pattern.permute.xlu0 2
  %211 = vperm.xlu0 %210, %v178
  %v212 = vpop.permute.xlu0 %211
  %v214 = vmul.f32 %v117, %v208
  %v215 = vmul.f32 %v118, %v212
  %v216 = vadd.f32 %v204, %v214
  %v217 = vadd.f32 %v205, %v215
  %218 = vset.pattern.permute.xlu0 3
  %219 = vperm.xlu0 %218, %v175
  %v220 = vpop.permute.xlu0 %219
  %222 = vset.pattern.permute.xlu0 3
  %223 = vperm.xlu0 %222, %v178
  %v224 = vpop.permute.xlu0 %223
  %v226 = vmul.f32 %v119, %v220
  %v227 = vmul.f32 %v120, %v224
  %v228 = vadd.f32 %v216, %v226
  %v229 = vadd.f32 %v217, %v227
  %230 = vset.pattern.permute.xlu0 4
  %231 = vperm.xlu0 %230, %v175
  %v232 = vpop.permute.xlu0 %231
  %234 = vset.pattern.permute.xlu0 4
  %235 = vperm.xlu0 %234, %v178
  %v236 = vpop.permute.xlu0 %235
  %v238 = vmul.f32 %v121, %v232
  %v239 = vmul.f32 %v122, %v236
  %v240 = vadd.f32 %v228, %v238
  %v241 = vadd.f32 %v229, %v239
  %242 = vrot.lane.b32.xlu0 %v100, 96
  %v243 = vpop.permute.xlu0 %242
  %244 = vrot.lane.b32.xlu0 %v103, 96
  %v245 = vpop.permute.xlu0 %244
  %v246 = vsel %vm150, %v243, 0
  %v248 = vsel %vm150, %v245, 0
  %250 = vmatpush.xpose.msra.mxu0 0.0
  %251 = vmatpush.xpose.msra.mxu0 0.0
  %252 = vmatpush.xpose.msra.mxu0 0.0
  %253 = vmatpush.xpose.msra.mxu0 0.0
  %254 = vmatpush.xpose.msra.mxu0 0.0
  %255 = vmatpush.xpose.msra.mxu0 0.0
  %256 = vmatpush.xpose.msra.mxu0 0.0
  %257 = vmatpush.xpose.msra.mxu0 0.0
  %258 = vmatpush.xpose.msra.mxu0 0.0
  %259 = vmatpush.xpose.msra.mxu0 0.0
  %260 = vmatpush.xpose.msra.mxu0 0.0
  %261 = vmatpush.xpose.msra.mxu0 0.0
  %262 = vmatpush.xpose.msra.mxu0 0.0
  %263 = vmatpush.xpose.msra.mxu0 0.0
  %264 = vmatpush.xpose.msra.mxu0 %v248
  %265 = vmatpush.xpose.msra.mxu0 %v246
  %266 = vmatmul.f32.gmra.mxu0 %v152
  %v267 = vpop.f32.mrf.mxu0
  %v268 = vadd.f32 %v240, %v267
  %269 = vmatmul.f32.gmra.mxu0 %v155
  %v270 = vpop.f32.mrf.mxu0
  %v271 = vadd.f32 %v241, %v270
  %272 = vdwg.mxu0
  %v273 = vmul.f32 %v268, 0.17677669
  %v274 = vmul.f32 %v271, 0.17677669
  %vm275 = vcmp.gt.f32.partialorder %v111, 0.0
  %vm276 = vcmp.gt.f32.partialorder %v112, 0.0
  %v277 = vsel %vm275, %v273, -1e+30
  %v278 = vsel %vm276, %v274, -1e+30
  %vm279 = vcmask 130048
  %v280 = vsel %vm279, %v277, -inf
  %281 = vmax.xlane.f32.xlu0 %v280
  %v282 = vpop.xlane.xlu0 %281
  %v283 = vsel %vm279, %v278, -inf
  %284 = vmax.xlane.f32.xlu0 %v283
  %v285 = vpop.xlane.xlu0 %284
  %v286 = vsub.f32 %v277, %v282
  %v287 = vsub.f32 %v278, %v285
  %v288 = vmul.f32 %v286, 1.442695
  %v289 = vpow.pop %v288
  %v290 = vmul.f32 %v287, 1.442695
  %v291 = vpow.pop %v290
  %v292 = vsel %vm275, %v289, 0.0
  %v293 = vsel %vm276, %v291, 0.0
  %v294 = vsel %vm279, %v292, 0.0
  %295 = vadd.xlane.f32.xlu0 %v294
  %v296 = vpop.xlane.xlu0 %295
  %v297 = vsel %vm279, %v293, 0.0
  %298 = vadd.xlane.f32.xlu0 %v297
  %v299 = vpop.xlane.xlu0 %298
  %vm300 = vcmp.gt.f32.partialorder %v296, 0.0
  %vm301 = vcmp.gt.f32.partialorder %v299, 0.0
  %v302 = vsel %vm300, %v296, 1.0
  %v303 = vsel %vm301, %v299, 1.0
  %v304 = vrcp.pop %v302
  %v305 = vrcp.pop %v303
  %v306 = vmul.f32 %v292, %v304
  %v307 = vmul.f32 %v293, %v305
  %v308 = vmul.f32 %v306, %v113
  %v309 = vmul.f32 %v307, %v114
  %v310 = vsel %vm279, %v308, 0.0
  %311 = vadd.xlane.f32.xlu0 %v310
  %v312 = vpop.xlane.xlu0 %311
  %v313 = vsel %vm279, %v309, 0.0
  %314 = vadd.xlane.f32.xlu0 %v313
  %v315 = vpop.xlane.xlu0 %314
  %v316 = vperm.slane %v55, 0
  %v317 = vmul.f32 %v312, %v316
  %v318 = vmul.f32 %v315, %v316
  %v319 = vadd.f32 %v317, 0.0
  %v320 = vadd.f32 %v318, 0.0
  %v321 = vmul.f32 %v306, %v115
  %v322 = vmul.f32 %v307, %v116
  %v323 = vsel %vm279, %v321, 0.0
  %324 = vadd.xlane.f32.xlu0 %v323
  %v325 = vpop.xlane.xlu0 %324
  %v326 = vsel %vm279, %v322, 0.0
  %327 = vadd.xlane.f32.xlu0 %v326
  %v328 = vpop.xlane.xlu0 %327
  %v329 = vperm.slane %v55, 1
  %v330 = vmul.f32 %v325, %v329
  %v331 = vmul.f32 %v328, %v329
  %v332 = vadd.f32 %v319, %v330
  %v333 = vadd.f32 %v320, %v331
  %v334 = vmul.f32 %v306, %v117
  %v335 = vmul.f32 %v307, %v118
  %v336 = vsel %vm279, %v334, 0.0
  %337 = vadd.xlane.f32.xlu0 %v336
  %v338 = vpop.xlane.xlu0 %337
  %v339 = vsel %vm279, %v335, 0.0
  %340 = vadd.xlane.f32.xlu0 %v339
  %v341 = vpop.xlane.xlu0 %340
  %v342 = vperm.slane %v55, 2
  %v343 = vmul.f32 %v338, %v342
  %v344 = vmul.f32 %v341, %v342
  %v345 = vadd.f32 %v332, %v343
  %v346 = vadd.f32 %v333, %v344
  %v347 = vmul.f32 %v306, %v119
  %v348 = vmul.f32 %v307, %v120
  %v349 = vsel %vm279, %v347, 0.0
  %350 = vadd.xlane.f32.xlu0 %v349
  %v351 = vpop.xlane.xlu0 %350
  %v352 = vsel %vm279, %v348, 0.0
  %353 = vadd.xlane.f32.xlu0 %v352
  %v354 = vpop.xlane.xlu0 %353
  %v355 = vperm.slane %v55, 3
  %v356 = vmul.f32 %v351, %v355
  %v357 = vmul.f32 %v354, %v355
  %v358 = vadd.f32 %v345, %v356
  %v359 = vadd.f32 %v346, %v357
  %v360 = vmul.f32 %v306, %v121
  %v361 = vmul.f32 %v307, %v122
  %v362 = vsel %vm279, %v360, 0.0
  %363 = vadd.xlane.f32.xlu0 %v362
  %v364 = vpop.xlane.xlu0 %363
  %v365 = vsel %vm279, %v361, 0.0
  %366 = vadd.xlane.f32.xlu0 %v365
  %v367 = vpop.xlane.xlu0 %366
  %v368 = vperm.slane %v55, 4
  %v369 = vmul.f32 %v364, %v368
  %v370 = vmul.f32 %v367, %v368
  %v371 = vadd.f32 %v358, %v369
  %v372 = vadd.f32 %v359, %v370
  %373 = vrot.lane.b32.xlu0 %v100, 64
  %v374 = vpop.permute.xlu0 %373
  %375 = vrot.lane.b32.xlu0 %v103, 64
  %v376 = vpop.permute.xlu0 %375
  %v380 = vsel %vm279, %v306, 0
  %v383 = vsel %vm279, %v307, 0
  %385 = vmatpush.msra.mxu0 0.0
  %386 = vmatpush.msra.mxu0 0.0
  %387 = vmatpush.msra.mxu0 0.0
  %388 = vmatpush.msra.mxu0 0.0
  %389 = vmatpush.msra.mxu0 0.0
  %390 = vmatpush.msra.mxu0 0.0
  %391 = vmatpush.msra.mxu0 0.0
  %392 = vmatpush.msra.mxu0 0.0
  %393 = vmatpush.msra.mxu0 0.0
  %394 = vmatpush.msra.mxu0 0.0
  %395 = vmatpush.msra.mxu0 0.0
  %396 = vmatpush.msra.mxu0 0.0
  %397 = vmatpush.msra.mxu0 0.0
  %398 = vmatpush.msra.mxu0 0.0
  %399 = vmatpush.msra.mxu0 %v376
  %400 = vmatpush.msra.mxu0 %v374
  %401 = vmatmul.f32.gmra.mxu0 %v380
  %v402 = vpop.f32.mrf.mxu0
  %v403 = vadd.f32 %v371, %v402
  %404 = vmatmul.f32.gmra.mxu0 %v383
  %v405 = vpop.f32.mrf.mxu0
  %v406 = vadd.f32 %v372, %v405
  %407 = vdwg.mxu0
  %408 = vrot.lane.b32.xlu0 %v100, 32
  %v409 = vpop.permute.xlu0 %408
  %410 = vrot.lane.b32.xlu0 %v103, 32
  %v411 = vpop.permute.xlu0 %410
  %v414 = vadd.f32 %v403, %v409
  %v415 = vadd.f32 %v406, %v411
  %v416 = vperm.slane %v32, 5
  %v417 = vmul.f32 %v414, %v416
  %v418 = vmul.f32 %v415, %v416
  %v419 = vperm.slane %v32, 6
  %v420 = vadd.f32 %v417, %v419
  %v421 = vadd.f32 %v418, %v419
  %v422 = vmax.f32 %v420, 0.0
  %v423 = vmax.f32 %v421, 0.0
  %v424 = vmul.f32 %v422, %v132
  %v425 = vmul.f32 %v423, %v133
  %v426 = vperm.slane %v32, 7
  %v428 = vsel %vm150, %v424, 0
  %v431 = vsel %vm150, %v425, 0
  %433 = vmatpush.msra.mxu0 0.0
  %434 = vmatpush.msra.mxu0 0.0
  %435 = vmatpush.msra.mxu0 0.0
  %436 = vmatpush.msra.mxu0 0.0
  %437 = vmatpush.msra.mxu0 0.0
  %438 = vmatpush.msra.mxu0 0.0
  %439 = vmatpush.msra.mxu0 0.0
  %440 = vmatpush.msra.mxu0 0.0
  %441 = vmatpush.msra.mxu0 0.0
  %442 = vmatpush.msra.mxu0 0.0
  %443 = vmatpush.msra.mxu0 0.0
  %444 = vmatpush.msra.mxu0 0.0
  %445 = vmatpush.msra.mxu0 %v59
  %446 = vmatpush.msra.mxu0 %v58
  %447 = vmatpush.msra.mxu0 %v57
  %448 = vmatpush.msra.mxu0 %v56
  %449 = vmatmul.f32.gmra.mxu0 %v428
  %v450 = vpop.f32.mrf.mxu0
  %v451 = vadd.f32 %v426, %v450
  %452 = vmatmul.f32.gmra.mxu0 %v431
  %v453 = vpop.f32.mrf.mxu0
  %v454 = vadd.f32 %v426, %v453
  %455 = vdwg.mxu0
  %vm456 = vcmask 64512
  %v457 = vsel %vm456, %v451, -inf
  %458 = vmax.xlane.f32.xlu0 %v457
  %v459 = vpop.xlane.xlu0 %458
  %v460 = vsel %vm456, %v454, -inf
  %461 = vmax.xlane.f32.xlu0 %v460
  %v462 = vpop.xlane.xlu0 %461
  %v463 = vsub.f32 %v451, %v459
  %v464 = vsub.f32 %v454, %v462
  %v465 = vmul.f32 %v463, 1.442695
  %v466 = vpow.pop %v465
  %v467 = vmul.f32 %v464, 1.442695
  %v468 = vpow.pop %v467
  %v469 = vsel %vm456, %v466, 0.0
  %470 = vadd.xlane.f32.xlu0 %v469
  %v471 = vpop.xlane.xlu0 %470
  %v472 = vsel %vm456, %v468, 0.0
  %473 = vadd.xlane.f32.xlu0 %v472
  %v474 = vpop.xlane.xlu0 %473
  %v475 = vrcp.pop %v471
  %v476 = vrcp.pop %v474
  %v477 = vmul.f32 %v466, %v475
  %v478 = vmul.f32 %v468, %v476
  %v479 = vmul.f32 %v424, %v132
  %v480 = vmul.f32 %v425, %v133
  %v481 = vmul.f32 %v477, %v132
  %v482 = vmul.f32 %v478, %v133
  %483 = vxpose.xlu0.b32.start [1/16] %v481, 128
  %484 = vxpose.xlu0.b32.cont [2/16] %v482, 128
  %485 = vxpose.xlu0.b32.cont [3/16] 0.0, 128
  %486 = vxpose.xlu0.b32.cont [4/16] 0.0, 128
  %487 = vxpose.xlu0.b32.cont [5/16] 0.0, 128
  %488 = vxpose.xlu0.b32.cont [6/16] 0.0, 128
  %489 = vxpose.xlu0.b32.cont [7/16] 0.0, 128
  %490 = vxpose.xlu0.b32.cont [8/16] 0.0, 128
  %491 = vxpose.xlu0.b32.cont [9/16] 0.0, 128
  %492 = vxpose.xlu0.b32.cont [10/16] 0.0, 128
  %493 = vxpose.xlu0.b32.cont [11/16] 0.0, 128
  %494 = vxpose.xlu0.b32.cont [12/16] 0.0, 128
  %495 = vxpose.xlu0.b32.cont [13/16] 0.0, 128
  %496 = vxpose.xlu0.b32.cont [14/16] 0.0, 128
  %497 = vxpose.xlu0.b32.cont [15/16] 0.0, 128
  %498 = vxpose.xlu0.b32.end [16/16] 0.0, 128
  %v499 = vpop.trf.xlu0
  %v500 = vpop.trf.xlu0
  %v501 = vpop.trf.xlu0
  %v502 = vpop.trf.xlu0
  %v503 = vpop.trf.xlu0
  %v504 = vpop.trf.xlu0
  %v505 = vpop.trf.xlu0
  %v506 = vpop.trf.xlu0
  %v507 = vpop.trf.xlu0
  %v508 = vpop.trf.xlu0
  %v509 = vpop.trf.xlu0
  %v510 = vpop.trf.xlu0
  %v511 = vpop.trf.xlu0
  %v512 = vpop.trf.xlu0
  %v513 = vpop.trf.xlu0
  %v514 = vpop.trf.xlu0
  %v516 = vsel %vm279, %v499, 0
  %518 = vmatpush.msra.mxu0 0.0
  %519 = vmatpush.msra.mxu0 0.0
  %520 = vmatpush.msra.mxu0 0.0
  %521 = vmatpush.msra.mxu0 0.0
  %522 = vmatpush.msra.mxu0 0.0
  %523 = vmatpush.msra.mxu0 0.0
  %524 = vmatpush.msra.mxu0 0.0
  %525 = vmatpush.msra.mxu0 0.0
  %526 = vmatpush.msra.mxu0 0.0
  %527 = vmatpush.msra.mxu0 0.0
  %528 = vmatpush.msra.mxu0 0.0
  %529 = vmatpush.msra.mxu0 0.0
  %530 = vmatpush.msra.mxu0 0.0
  %531 = vmatpush.msra.mxu0 0.0
  %532 = vmatpush.msra.mxu0 %v480
  %533 = vmatpush.msra.mxu0 %v479
  %534 = vmatmul.f32.gmra.mxu0 %v516
  %v535 = vpop.f32.mrf.mxu0
  %v536 = vadd.f32 0.0, %v535
  %537 = vdwg.mxu0
  %538 = vmatpush.msra.mxu0 0.0
  %539 = vmatpush.msra.mxu0 0.0
  %540 = vmatpush.msra.mxu0 0.0
  %541 = vmatpush.msra.mxu0 0.0
  %542 = vmatpush.msra.mxu0 0.0
  %543 = vmatpush.msra.mxu0 0.0
  %544 = vmatpush.msra.mxu0 0.0
  %545 = vmatpush.msra.mxu0 0.0
  %546 = vmatpush.msra.mxu0 0.0
  %547 = vmatpush.msra.mxu0 0.0
  %548 = vmatpush.msra.mxu0 0.0
  %549 = vmatpush.msra.mxu0 0.0
  %550 = vmatpush.msra.mxu0 0.0
  %551 = vmatpush.msra.mxu0 0.0
  %552 = vmatpush.msra.mxu0 %v112
  %553 = vmatpush.msra.mxu0 %v111
  %554 = vmatmul.f32.gmra.mxu0 %v516
  %v555 = vpop.f32.mrf.mxu0
  %v556 = vadd.f32 0.0, %v555
  %557 = vdwg.mxu0
  %v559 = vsel %vm279, %v556, 0
  %561 = vmatpush.msra.mxu0 0.0
  %562 = vmatpush.msra.mxu0 0.0
  %563 = vmatpush.msra.mxu0 0.0
  %564 = vmatpush.msra.mxu0 0.0
  %565 = vmatpush.msra.mxu0 0.0
  %566 = vmatpush.msra.mxu0 0.0
  %567 = vmatpush.msra.mxu0 0.0
  %568 = vmatpush.msra.mxu0 0.0
  %569 = vmatpush.msra.mxu0 0.0
  %570 = vmatpush.msra.mxu0 0.0
  %571 = vmatpush.msra.mxu0 0.0
  %572 = vmatpush.msra.mxu0 0.0
  %573 = vmatpush.msra.mxu0 0.0
  %574 = vmatpush.msra.mxu0 0.0
  %575 = vmatpush.msra.mxu0 %v482
  %576 = vmatpush.msra.mxu0 %v481
  %577 = vmatmul.f32.gmra.mxu0 %v559
  %v578 = vpop.f32.mrf.mxu0
  %v579 = vadd.f32 0.0, %v578
  %580 = vdwg.mxu0
  %v581 = vlaneseq
  %v582 = vand.u32 %v581, 127
  %vm583 = vcmp.eq.s32.totalorder %v124, %v582
  %v584 = vsel %vm583, 0.0, %v579
  %v585 = vsel %vm456, %v584, 0.0
  %586 = vadd.xlane.f32.xlu0 %v585
  %v587 = vpop.xlane.xlu0 %586
  %v588 = vrsqrt.pop %v587
  %v589 = vmul.f32 %v588, %v587
  %v590 = vmul.f32 %v589, %v588
  %v591 = vmul.f32 0.5, %v590
  %v592 = vsub.f32 1.5, %v591
  %v593 = vmul.f32 %v588, %v592
  %v594 = vmul.f32 %v587, %v593
  %vm595 = vcmp.eq.f32.partialorder %v587, inf
  %v596 = vsel %vm595, %v587, %v594
  %vm597 = vcmp.eq.f32.partialorder %v587, 0.0
  %v598 = vand.u32 %v587, 2147483648
  %v599 = vsel %vm597, %v598, %v596
  %v600 = vadd.f32 %v599, 1e-15
  %v601 = vrcp.pop %v600
  %602 = vxpose.xlu0.b32.start [1/16] %v601, 128
  %603 = vxpose.xlu0.b32.cont [2/16] 0.0, 128
  %604 = vxpose.xlu0.b32.cont [3/16] 0.0, 128
  %605 = vxpose.xlu0.b32.cont [4/16] 0.0, 128
  %606 = vxpose.xlu0.b32.cont [5/16] 0.0, 128
  %607 = vxpose.xlu0.b32.cont [6/16] 0.0, 128
  %608 = vxpose.xlu0.b32.cont [7/16] 0.0, 128
  %609 = vxpose.xlu0.b32.cont [8/16] 0.0, 128
  %610 = vxpose.xlu0.b32.cont [9/16] 0.0, 128
  %611 = vxpose.xlu0.b32.cont [10/16] 0.0, 128
  %612 = vxpose.xlu0.b32.cont [11/16] 0.0, 128
  %613 = vxpose.xlu0.b32.cont [12/16] 0.0, 128
  %614 = vxpose.xlu0.b32.cont [13/16] 0.0, 128
  %615 = vxpose.xlu0.b32.cont [14/16] 0.0, 128
  %616 = vxpose.xlu0.b32.cont [15/16] 0.0, 128
  %617 = vxpose.xlu0.b32.end [16/16] 0.0, 128
  %v618 = vpop.trf.xlu0
  %v619 = vpop.trf.xlu0
  %v620 = vpop.trf.xlu0
  %v621 = vpop.trf.xlu0
  %v622 = vpop.trf.xlu0
  %v623 = vpop.trf.xlu0
  %v624 = vpop.trf.xlu0
  %v625 = vpop.trf.xlu0
  %v626 = vpop.trf.xlu0
  %v627 = vpop.trf.xlu0
  %v628 = vpop.trf.xlu0
  %v629 = vpop.trf.xlu0
  %v630 = vpop.trf.xlu0
  %v631 = vpop.trf.xlu0
  %v632 = vpop.trf.xlu0
  %v633 = vpop.trf.xlu0
  %v634 = vperm.slane %v618, 0
  %v635 = vmul.f32 %v584, %v634
  %v636 = vmul.f32 %v635, %v601
  %v638 = vsel %vm456, %v636, 0
  %640 = vmatpush.msra.mxu0 0.0
  %641 = vmatpush.msra.mxu0 0.0
  %642 = vmatpush.msra.mxu0 0.0
  %643 = vmatpush.msra.mxu0 0.0
  %644 = vmatpush.msra.mxu0 0.0
  %645 = vmatpush.msra.mxu0 0.0
  %646 = vmatpush.msra.mxu0 0.0
  %647 = vmatpush.msra.mxu0 0.0
  %648 = vmatpush.msra.mxu0 0.0
  %649 = vmatpush.msra.mxu0 0.0
  %650 = vmatpush.msra.mxu0 0.0
  %651 = vmatpush.msra.mxu0 0.0
  %652 = vmatpush.msra.mxu0 0.0
  %653 = vmatpush.msra.mxu0 0.0
  %654 = vmatpush.msra.mxu0 0.0
  %655 = vmatpush.msra.mxu0 %v536
  %656 = vmatmul.f32.gmra.mxu0 %v638
  %v657 = vpop.f32.mrf.mxu0
  %v658 = vadd.f32 0.0, %v657
  %659 = vdwg.mxu0
  %661 = vrot.lane.b32.xlu0 %v536, 32
  %v662 = vpop.permute.xlu0 %661
  %v664 = vsel %vm150, %v658, %v662
  %v665 = vperm.slane %v33, 0
  %vm666 = vcmask 523264
  %v668 = vsel %vm666, %v664, 0
  %670 = vmatpush.msra.mxu0 0.0
  %671 = vmatpush.msra.mxu0 0.0
  %672 = vmatpush.msra.mxu0 0.0
  %673 = vmatpush.msra.mxu0 0.0
  %674 = vmatpush.msra.mxu0 0.0
  %675 = vmatpush.msra.mxu0 0.0
  %676 = vmatpush.msra.mxu0 0.0
  %677 = vmatpush.msra.mxu0 0.0
  %678 = vmatpush.msra.mxu0 %v42
  %679 = vmatpush.msra.mxu0 %v41
  %680 = vmatpush.msra.mxu0 %v40
  %681 = vmatpush.msra.mxu0 %v39
  %682 = vmatpush.msra.mxu0 %v38
  %683 = vmatpush.msra.mxu0 %v37
  %684 = vmatpush.msra.mxu0 %v36
  %685 = vmatpush.msra.mxu0 %v35
  %686 = vmatmul.f32.gmra.mxu0 %v668
  %v687 = vpop.f32.mrf.mxu0
  %v688 = vadd.f32 %v665, %v687
  %689 = vdwg.mxu0
  %v690 = vsel %vm150, %v688, 0.0
  %691 = vadd.xlane.f32.xlu0 %v690
  %v692 = vpop.xlane.xlu0 %691
  %v693 = vrcp.pop 32.0
  %v694 = vmul.f32 32.0, %v693
  %v695 = vsub.f32 1.0, %v694
  %v696 = vmul.f32 %v693, %v695
  %v697 = vadd.f32 %v693, %v696
  %vm698 = vweird.f32 %v693
  %v699 = vsel %vm698, %v693, %v697
  %v700 = vmul.f32 %v692, %v699
  %v701 = vsub.f32 %v688, %v700
  %v702 = vmul.f32 %v701, %v701
  %v703 = vsel %vm150, %v702, 0.0
  %704 = vadd.xlane.f32.xlu0 %v703
  %v705 = vpop.xlane.xlu0 %704
  %v706 = vmul.f32 %v705, %v699
  %v707 = vadd.f32 %v706, 1e-05
  %v708 = vrsqrt.pop %v707
  %v709 = vmul.f32 %v708, %v707
  %v710 = vmul.f32 %v709, %v708
  %v711 = vmul.f32 0.5, %v710
  %v712 = vsub.f32 1.5, %v711
  %v713 = vmul.f32 %v708, %v712
  %vm714 = vweird.f32 %v707
  %vm715 = vweird.f32 %v708
  %vm716 = vmor %vm714, %vm715
  %v717 = vsel %vm716, %v708, %v713
  %v718 = vmul.f32 %v701, %v717
  %v719 = vperm.slane %v33, 1
  %v720 = vmul.f32 %v718, %v719
  %v721 = vperm.slane %v33, 2
  %v722 = vadd.f32 %v720, %v721
  %v723 = vmax.f32 %v722, 0.0
  %v724 = vperm.slane %v33, 3
  %725 = vrot.lane.b32.xlu0 %v56, 120
  %v726 = vpop.permute.xlu0 %725
  %727 = vrot.lane.b32.xlu0 %v57, 120
  %v728 = vpop.permute.xlu0 %727
  %729 = vrot.lane.b32.xlu0 %v58, 120
  %v730 = vpop.permute.xlu0 %729
  %731 = vrot.lane.b32.xlu0 %v59, 120
  %v732 = vpop.permute.xlu0 %731
  %v738 = vsel %vm150, %v723, 0
  %740 = vmatpush.msra.mxu0 0.0
  %741 = vmatpush.msra.mxu0 0.0
  %742 = vmatpush.msra.mxu0 0.0
  %743 = vmatpush.msra.mxu0 0.0
  %744 = vmatpush.msra.mxu0 0.0
  %745 = vmatpush.msra.mxu0 0.0
  %746 = vmatpush.msra.mxu0 0.0
  %747 = vmatpush.msra.mxu0 0.0
  %748 = vmatpush.msra.mxu0 0.0
  %749 = vmatpush.msra.mxu0 0.0
  %750 = vmatpush.msra.mxu0 0.0
  %751 = vmatpush.msra.mxu0 0.0
  %752 = vmatpush.msra.mxu0 %v732
  %753 = vmatpush.msra.mxu0 %v730
  %754 = vmatpush.msra.mxu0 %v728
  %755 = vmatpush.msra.mxu0 %v726
  %756 = vmatmul.f32.gmra.mxu0 %v738
  %v757 = vpop.f32.mrf.mxu0
  %v758 = vadd.f32 %v724, %v757
  %759 = vdwg.mxu0
  %v760 = vsel %vm65, %v758, -inf
  %761 = vmax.xlane.f32.xlu0 %v760
  %v762 = vpop.xlane.xlu0 %761
  %v763 = vsub.f32 %v758, %v762
  %v764 = vmul.f32 %v763, 1.442695
  %v765 = vpow.pop %v764
  %v766 = vsel %vm65, %v765, 0.0
  %767 = vadd.xlane.f32.xlu0 %v766
  %v768 = vpop.xlane.xlu0 %767
  %v769 = vrcp.pop %v768
  %v770 = vmul.f32 %v765, %v769
  %771 = vxpose.xlu0.b32.start [1/16] %v770, 128
  %772 = vxpose.xlu0.b32.cont [2/16] 0.0, 128
  %773 = vxpose.xlu0.b32.cont [3/16] 0.0, 128
  %774 = vxpose.xlu0.b32.cont [4/16] 0.0, 128
  %775 = vxpose.xlu0.b32.cont [5/16] 0.0, 128
  %776 = vxpose.xlu0.b32.cont [6/16] 0.0, 128
  %777 = vxpose.xlu0.b32.cont [7/16] 0.0, 128
  %778 = vxpose.xlu0.b32.cont [8/16] 0.0, 128
  %779 = vxpose.xlu0.b32.cont [9/16] 0.0, 128
  %780 = vxpose.xlu0.b32.cont [10/16] 0.0, 128
  %781 = vxpose.xlu0.b32.cont [11/16] 0.0, 128
  %782 = vxpose.xlu0.b32.cont [12/16] 0.0, 128
  %783 = vxpose.xlu0.b32.cont [13/16] 0.0, 128
  %784 = vxpose.xlu0.b32.cont [14/16] 0.0, 128
  %785 = vxpose.xlu0.b32.cont [15/16] 0.0, 128
  %786 = vxpose.xlu0.b32.end [16/16] 0.0, 128
  %v787 = vpop.trf.xlu0
  %v788 = vpop.trf.xlu0
  %v789 = vpop.trf.xlu0
  %v790 = vpop.trf.xlu0
  %v791 = vpop.trf.xlu0
  %v792 = vpop.trf.xlu0
  %v793 = vpop.trf.xlu0
  %v794 = vpop.trf.xlu0
  %v795 = vpop.trf.xlu0
  %v796 = vpop.trf.xlu0
  %v797 = vpop.trf.xlu0
  %v798 = vpop.trf.xlu0
  %v799 = vpop.trf.xlu0
  %v800 = vpop.trf.xlu0
  %v801 = vpop.trf.xlu0
  %v802 = vpop.trf.xlu0
  %v804 = vsel %vm456, %v787, 0
  %806 = vmatpush.msra.mxu0 0.0
  %807 = vmatpush.msra.mxu0 0.0
  %808 = vmatpush.msra.mxu0 0.0
  %809 = vmatpush.msra.mxu0 0.0
  %810 = vmatpush.msra.mxu0 0.0
  %811 = vmatpush.msra.mxu0 0.0
  %812 = vmatpush.msra.mxu0 0.0
  %813 = vmatpush.msra.mxu0 0.0
  %814 = vmatpush.msra.mxu0 0.0
  %815 = vmatpush.msra.mxu0 0.0
  %816 = vmatpush.msra.mxu0 0.0
  %817 = vmatpush.msra.mxu0 0.0
  %818 = vmatpush.msra.mxu0 0.0
  %819 = vmatpush.msra.mxu0 0.0
  %820 = vmatpush.msra.mxu0 0.0
  %821 = vmatpush.msra.mxu0 %v723
  %822 = vmatmul.f32.gmra.mxu0 %v804
  %v823 = vpop.f32.mrf.mxu0
  %v824 = vadd.f32 0.0, %v823
  %825 = vdwg.mxu0
  %826 = vmatpush.msra.mxu0 0.0
  %827 = vmatpush.msra.mxu0 0.0
  %828 = vmatpush.msra.mxu0 0.0
  %829 = vmatpush.msra.mxu0 0.0
  %830 = vmatpush.msra.mxu0 0.0
  %831 = vmatpush.msra.mxu0 0.0
  %832 = vmatpush.msra.mxu0 0.0
  %833 = vmatpush.msra.mxu0 0.0
  %834 = vmatpush.msra.mxu0 0.0
  %835 = vmatpush.msra.mxu0 0.0
  %836 = vmatpush.msra.mxu0 0.0
  %837 = vmatpush.msra.mxu0 0.0
  %838 = vmatpush.msra.mxu0 0.0
  %839 = vmatpush.msra.mxu0 0.0
  %840 = vmatpush.msra.mxu0 0.0
  %841 = vmatpush.msra.mxu0 %v636
  %842 = vmatmul.f32.gmra.mxu0 %v804
  %v843 = vpop.f32.mrf.mxu0
  %v844 = vadd.f32 0.0, %v843
  %845 = vdwg.mxu0
  %v847 = vsel %vm456, %v844, 0
  %849 = vmatpush.msra.mxu0 0.0
  %850 = vmatpush.msra.mxu0 0.0
  %851 = vmatpush.msra.mxu0 0.0
  %852 = vmatpush.msra.mxu0 0.0
  %853 = vmatpush.msra.mxu0 0.0
  %854 = vmatpush.msra.mxu0 0.0
  %855 = vmatpush.msra.mxu0 0.0
  %856 = vmatpush.msra.mxu0 0.0
  %857 = vmatpush.msra.mxu0 0.0
  %858 = vmatpush.msra.mxu0 0.0
  %859 = vmatpush.msra.mxu0 0.0
  %860 = vmatpush.msra.mxu0 0.0
  %861 = vmatpush.msra.mxu0 0.0
  %862 = vmatpush.msra.mxu0 0.0
  %863 = vmatpush.msra.mxu0 0.0
  %864 = vmatpush.msra.mxu0 %v770
  %865 = vmatmul.f32.gmra.mxu0 %v847
  %v866 = vpop.f32.mrf.mxu0
  %v867 = vadd.f32 0.0, %v866
  %868 = vdwg.mxu0
  %v869 = vsel %vm583, 0.0, %v867
  %vm870 = vcmask 27648
  %v871 = vsel %vm870, %v869, 0.0
  %872 = vadd.xlane.f32.xlu0 %v871
  %v873 = vpop.xlane.xlu0 %872
  %v874 = vrsqrt.pop %v873
  %v875 = vmul.f32 %v874, %v873
  %v876 = vmul.f32 %v875, %v874
  %v877 = vmul.f32 0.5, %v876
  %v878 = vsub.f32 1.5, %v877
  %v879 = vmul.f32 %v874, %v878
  %v880 = vmul.f32 %v873, %v879
  %vm881 = vcmp.eq.f32.partialorder %v873, inf
  %v882 = vsel %vm881, %v873, %v880
  %vm883 = vcmp.eq.f32.partialorder %v873, 0.0
  %v884 = vand.u32 %v873, 2147483648
  %v885 = vsel %vm883, %v884, %v882
  %v886 = vadd.f32 %v885, 1e-15
  %v887 = vrcp.pop %v886
  %888 = vxpose.xlu0.b32.start [1/16] %v887, 128
  %889 = vxpose.xlu0.b32.cont [2/16] 0.0, 128
  %890 = vxpose.xlu0.b32.cont [3/16] 0.0, 128
  %891 = vxpose.xlu0.b32.cont [4/16] 0.0, 128
  %892 = vxpose.xlu0.b32.cont [5/16] 0.0, 128
  %893 = vxpose.xlu0.b32.cont [6/16] 0.0, 128
  %894 = vxpose.xlu0.b32.cont [7/16] 0.0, 128
  %895 = vxpose.xlu0.b32.cont [8/16] 0.0, 128
  %896 = vxpose.xlu0.b32.cont [9/16] 0.0, 128
  %897 = vxpose.xlu0.b32.cont [10/16] 0.0, 128
  %898 = vxpose.xlu0.b32.cont [11/16] 0.0, 128
  %899 = vxpose.xlu0.b32.cont [12/16] 0.0, 128
  %900 = vxpose.xlu0.b32.cont [13/16] 0.0, 128
  %901 = vxpose.xlu0.b32.cont [14/16] 0.0, 128
  %902 = vxpose.xlu0.b32.cont [15/16] 0.0, 128
  %903 = vxpose.xlu0.b32.end [16/16] 0.0, 128
  %v904 = vpop.trf.xlu0
  %v905 = vpop.trf.xlu0
  %v906 = vpop.trf.xlu0
  %v907 = vpop.trf.xlu0
  %v908 = vpop.trf.xlu0
  %v909 = vpop.trf.xlu0
  %v910 = vpop.trf.xlu0
  %v911 = vpop.trf.xlu0
  %v912 = vpop.trf.xlu0
  %v913 = vpop.trf.xlu0
  %v914 = vpop.trf.xlu0
  %v915 = vpop.trf.xlu0
  %v916 = vpop.trf.xlu0
  %v917 = vpop.trf.xlu0
  %v918 = vpop.trf.xlu0
  %v919 = vpop.trf.xlu0
  %v920 = vperm.slane %v904, 0
  %v921 = vmul.f32 %v869, %v920
  %v922 = vmul.f32 %v921, %v887
  %v924 = vsel %vm65, %v922, 0
  %v927 = vsel %vm78, %v824, 0
  %929 = vmatpush.msra.mxu0 0.0
  %930 = vmatpush.msra.mxu0 0.0
  %931 = vmatpush.msra.mxu0 0.0
  %932 = vmatpush.msra.mxu0 0.0
  %933 = vmatpush.msra.mxu0 0.0
  %934 = vmatpush.msra.mxu0 0.0
  %935 = vmatpush.msra.mxu0 0.0
  %936 = vmatpush.msra.mxu0 0.0
  %937 = vmatpush.msra.mxu0 0.0
  %938 = vmatpush.msra.mxu0 0.0
  %939 = vmatpush.msra.mxu0 0.0
  %940 = vmatpush.msra.mxu0 0.0
  %941 = vmatpush.msra.mxu0 0.0
  %942 = vmatpush.msra.mxu0 0.0
  %943 = vmatpush.msra.mxu0 0.0
  %944 = vmatpush.msra.mxu0 %v927
  %945 = vmatmul.f32.gmra.mxu0 %v924
  %v946 = vpop.f32.mrf.mxu0
  %v947 = vadd.f32 0.0, %v946
  %948 = vdwg.mxu0
  %949 = vrot.lane.b32.xlu0 %v824, 32
  %v950 = vpop.permute.xlu0 %949
  %v952 = vsel %vm150, %v947, %v950
  %v953 = vperm.slane %v33, 4
  %v955 = vsel %vm666, %v952, 0
  %957 = vmatpush.msra.mxu0 0.0
  %958 = vmatpush.msra.mxu0 0.0
  %959 = vmatpush.msra.mxu0 0.0
  %960 = vmatpush.msra.mxu0 0.0
  %961 = vmatpush.msra.mxu0 0.0
  %962 = vmatpush.msra.mxu0 0.0
  %963 = vmatpush.msra.mxu0 0.0
  %964 = vmatpush.msra.mxu0 0.0
  %965 = vmatpush.msra.mxu0 %v50
  %966 = vmatpush.msra.mxu0 %v49
  %967 = vmatpush.msra.mxu0 %v48
  %968 = vmatpush.msra.mxu0 %v47
  %969 = vmatpush.msra.mxu0 %v46
  %970 = vmatpush.msra.mxu0 %v45
  %971 = vmatpush.msra.mxu0 %v44
  %972 = vmatpush.msra.mxu0 %v43
  %973 = vmatmul.f32.gmra.mxu0 %v955
  %v974 = vpop.f32.mrf.mxu0
  %v975 = vadd.f32 %v953, %v974
  %976 = vdwg.mxu0
  %vm977 = vcmask 257024
  %v978 = vsel %vm977, %v975, 0.0
  %979 = vadd.xlane.f32.xlu0 %v978
  %v980 = vpop.xlane.xlu0 %979
  %v981 = vmul.f32 %v980, %v699
  %v982 = vsub.f32 %v975, %v981
  %v983 = vmul.f32 %v982, %v982
  %v984 = vsel %vm977, %v983, 0.0
  %985 = vadd.xlane.f32.xlu0 %v984
  %v986 = vpop.xlane.xlu0 %985
  %v987 = vmul.f32 %v986, %v699
  %v988 = vadd.f32 %v987, 1e-05
  %v989 = vrsqrt.pop %v988
  %v990 = vmul.f32 %v989, %v988
  %v991 = vmul.f32 %v990, %v989
  %v992 = vmul.f32 0.5, %v991
  %v993 = vsub.f32 1.5, %v992
  %v994 = vmul.f32 %v989, %v993
  %vm995 = vweird.f32 %v988
  %vm996 = vweird.f32 %v989
  %vm997 = vmor %vm995, %vm996
  %v998 = vsel %vm997, %v989, %v994
  %v999 = vmul.f32 %v982, %v998
  %v1000 = vperm.slane %v33, 5
  %v1001 = vmul.f32 %v999, %v1000
  %v1002 = vperm.slane %v33, 6
  %v1003 = vadd.f32 %v1001, %v1002
  %v1004 = vmax.f32 %v1003, 0.0
  %v1005 = vperm.slane %v33, 7
  %v1007 = vsel %vm150, %v1004, 0
  %1009 = vmatpush.msra.mxu0 0.0
  %1010 = vmatpush.msra.mxu0 0.0
  %1011 = vmatpush.msra.mxu0 0.0
  %1012 = vmatpush.msra.mxu0 0.0
  %1013 = vmatpush.msra.mxu0 0.0
  %1014 = vmatpush.msra.mxu0 0.0
  %1015 = vmatpush.msra.mxu0 0.0
  %1016 = vmatpush.msra.mxu0 0.0
  %1017 = vmatpush.msra.mxu0 0.0
  %1018 = vmatpush.msra.mxu0 0.0
  %1019 = vmatpush.msra.mxu0 0.0
  %1020 = vmatpush.msra.mxu0 0.0
  %1021 = vmatpush.msra.mxu0 %v54
  %1022 = vmatpush.msra.mxu0 %v53
  %1023 = vmatpush.msra.mxu0 %v52
  %1024 = vmatpush.msra.mxu0 %v51
  %1025 = vmatmul.f32.gmra.mxu0 %v1007
  %v1026 = vpop.f32.mrf.mxu0
  %v1027 = vadd.f32 %v1005, %v1026
  %1028 = vdwg.mxu0
  %v1029 = vmax.f32 %v1027, 0.0
  %v1030 = vperm.slane %v34, 0
  %1031 = vrot.lane.b32.xlu0 %v56, 116
  %v1032 = vpop.permute.xlu0 %1031
  %1033 = vrot.lane.b32.xlu0 %v57, 116
  %v1034 = vpop.permute.xlu0 %1033
  %1035 = vrot.lane.b32.xlu0 %v58, 116
  %v1036 = vpop.permute.xlu0 %1035
  %1037 = vrot.lane.b32.xlu0 %v59, 116
  %v1038 = vpop.permute.xlu0 %1037
  %v1044 = vsel %vm150, %v1029, 0
  %1046 = vmatpush.msra.mxu0 0.0
  %1047 = vmatpush.msra.mxu0 0.0
  %1048 = vmatpush.msra.mxu0 0.0
  %1049 = vmatpush.msra.mxu0 0.0
  %1050 = vmatpush.msra.mxu0 0.0
  %1051 = vmatpush.msra.mxu0 0.0
  %1052 = vmatpush.msra.mxu0 0.0
  %1053 = vmatpush.msra.mxu0 0.0
  %1054 = vmatpush.msra.mxu0 0.0
  %1055 = vmatpush.msra.mxu0 0.0
  %1056 = vmatpush.msra.mxu0 0.0
  %1057 = vmatpush.msra.mxu0 0.0
  %1058 = vmatpush.msra.mxu0 %v1038
  %1059 = vmatpush.msra.mxu0 %v1036
  %1060 = vmatpush.msra.mxu0 %v1034
  %1061 = vmatpush.msra.mxu0 %v1032
  %1062 = vmatmul.f32.gmra.mxu0 %v1044
  %v1063 = vpop.f32.mrf.mxu0
  %v1064 = vadd.f32 %v1030, %v1063
  %1065 = vdwg.mxu0
  %vm1066 = vcmask 3072
  %v1067 = vsel %vm1066, %v1064, 0.0
  %v1068 = vrot.slane %v1067, 4
  %v1069 = vadd.f32 %v1067, %v1068
  %v1070 = vrot.slane %v1069, 2
  %v1071 = vadd.f32 %v1069, %v1070
  %v1072 = vrot.slane %v1071, 1
  %v1073 = vadd.f32 %v1071, %v1072
  %v1074 = vrcp.pop 4.0
  %v1075 = vmul.f32 4.0, %v1074
  %v1076 = vsub.f32 1.0, %v1075
  %v1077 = vmul.f32 %v1074, %v1076
  %v1078 = vadd.f32 %v1074, %v1077
  %vm1079 = vweird.f32 %v1074
  %v1080 = vsel %vm1079, %v1074, %v1078
  %v1081 = vmul.f32 %v1073, %v1080
  %v1082 = vxor.u32 %v1081, 2147483648
  %v1083 = vmul.f32 %v1082, 1.442695
  %v1084 = vpow.pop %v1083
  %v1085 = vadd.f32 %v1084, 1.0
  %v1086 = vrcp.pop %v1085
  %v1087 = vmul.f32 %v1085, %v1086
  %v1088 = vsub.f32 1.0, %v1087
  %v1089 = vmul.f32 %v1086, %v1088
  %v1090 = vadd.f32 %v1086, %v1089
  %vm1091 = vweird.f32 %v1085
  %vm1092 = vweird.f32 %v1086
  %vm1093 = vmor %vm1091, %vm1092
  %v1094 = vsel %vm1093, %v1086, %v1090
  %v1095 = vand.u32 2147483647, %v1085
  %vm1096 = vcmp.eq.f32.partialorder %v1095, 8.507059e+37
  %v1097 = vand.u32 %v1085, 2147483648
  %v1098 = vor.u32 1.1754944e-38, %v1097
  %v1099 = vsel %vm1096, %v1098, %v1094
  %v1100 = vmul.f32 1.0, %v1099
  %s1101 = scalar_lea.vmem %s2, 16
  %v1102 = vld [vmem:[%s1101] sm:$0xff]
  %v1103 = vld [vmem:[%s1101 + $0x8] sm:$0xff]
  %s1104 = scalar_lea.vmem %s3, 80
  %v1105 = vld [vmem:[%s1104] sm:$0xff]
  %v1106 = vld [vmem:[%s1104 + $0x8] sm:$0xff]
  %v1107 = vld [vmem:[%s1104 + $0x10] sm:$0xff]
  %v1108 = vld [vmem:[%s1104 + $0x18] sm:$0xff]
  %v1109 = vld [vmem:[%s1104 + $0x20] sm:$0xff]
  %v1110 = vld [vmem:[%s1104 + $0x28] sm:$0xff]
  %v1111 = vld [vmem:[%s1104 + $0x30] sm:$0xff]
  %v1112 = vld [vmem:[%s1104 + $0x38] sm:$0xff]
  %v1113 = vld [vmem:[%s1104 + $0x40] sm:$0xff]
  %v1114 = vld [vmem:[%s1104 + $0x48] sm:$0xff]
  %s1115 = sld [smem:[#allocation3 + $0x1]]
  %v1116 = vstv %s1115
  %vm1117 = vcmp.lt.s32.totalorder %v124, %v1116
  %vm1118 = vcmp.lt.s32.totalorder %v125, %v1116
  %v1119 = vsel %vm1117, 1, 0
  %v1120 = vsel %vm1118, 1, 0
  %v1121 = vcvt.s32.f32 %v1119
  %v1122 = vcvt.s32.f32 %v1120
  %v1124 = vsel %vm150, %v106, 0
  %v1127 = vsel %vm150, %v109, 0
  %1129 = vmatpush.msra.mxu0 0.0
  %1130 = vmatpush.msra.mxu0 0.0
  %1131 = vmatpush.msra.mxu0 0.0
  %1132 = vmatpush.msra.mxu0 0.0
  %1133 = vmatpush.msra.mxu0 0.0
  %1134 = vmatpush.msra.mxu0 0.0
  %1135 = vmatpush.msra.mxu0 0.0
  %1136 = vmatpush.msra.mxu0 0.0
  %1137 = vmatpush.msra.mxu0 0.0
  %1138 = vmatpush.msra.mxu0 0.0
  %1139 = vmatpush.msra.mxu0 0.0
  %1140 = vmatpush.msra.mxu0 0.0
  %1141 = vmatpush.msra.mxu0 %v145
  %1142 = vmatpush.msra.mxu0 %v143
  %1143 = vmatpush.msra.mxu0 %v141
  %1144 = vmatpush.msra.mxu0 %v139
  %1145 = vmatmul.f32.gmra.mxu0 %v1124
  %v1146 = vpop.f32.mrf.mxu0
  %v1147 = vadd.f32 0.0, %v1146
  %1148 = vmatmul.f32.gmra.mxu0 %v1127
  %v1149 = vpop.f32.mrf.mxu0
  %v1150 = vadd.f32 0.0, %v1149
  %1151 = vdwg.mxu0
  %1153 = vset.pattern.permute.xlu0 0
  %1154 = vperm.xlu0 %1153, %v1147
  %v1155 = vpop.permute.xlu0 %1154
  %1158 = vset.pattern.permute.xlu0 0
  %1159 = vperm.xlu0 %1158, %v1150
  %v1160 = vpop.permute.xlu0 %1159
  %v1162 = vmul.f32 %v1105, %v1155
  %v1163 = vmul.f32 %v1106, %v1160
  %v1164 = vadd.f32 %v1162, 0.0
  %v1165 = vadd.f32 %v1163, 0.0
  %1166 = vset.pattern.permute.xlu0 1
  %1167 = vperm.xlu0 %1166, %v1147
  %v1168 = vpop.permute.xlu0 %1167
  %1170 = vset.pattern.permute.xlu0 1
  %1171 = vperm.xlu0 %1170, %v1150
  %v1172 = vpop.permute.xlu0 %1171
  %v1174 = vmul.f32 %v1107, %v1168
  %v1175 = vmul.f32 %v1108, %v1172
  %v1176 = vadd.f32 %v1164, %v1174
  %v1177 = vadd.f32 %v1165, %v1175
  %1178 = vset.pattern.permute.xlu0 2
  %1179 = vperm.xlu0 %1178, %v1147
  %v1180 = vpop.permute.xlu0 %1179
  %1182 = vset.pattern.permute.xlu0 2
  %1183 = vperm.xlu0 %1182, %v1150
  %v1184 = vpop.permute.xlu0 %1183
  %v1186 = vmul.f32 %v1109, %v1180
  %v1187 = vmul.f32 %v1110, %v1184
  %v1188 = vadd.f32 %v1176, %v1186
  %v1189 = vadd.f32 %v1177, %v1187
  %1190 = vset.pattern.permute.xlu0 3
  %1191 = vperm.xlu0 %1190, %v1147
  %v1192 = vpop.permute.xlu0 %1191
  %1194 = vset.pattern.permute.xlu0 3
  %1195 = vperm.xlu0 %1194, %v1150
  %v1196 = vpop.permute.xlu0 %1195
  %v1198 = vmul.f32 %v1111, %v1192
  %v1199 = vmul.f32 %v1112, %v1196
  %v1200 = vadd.f32 %v1188, %v1198
  %v1201 = vadd.f32 %v1189, %v1199
  %1202 = vset.pattern.permute.xlu0 4
  %1203 = vperm.xlu0 %1202, %v1147
  %v1204 = vpop.permute.xlu0 %1203
  %1206 = vset.pattern.permute.xlu0 4
  %1207 = vperm.xlu0 %1206, %v1150
  %v1208 = vpop.permute.xlu0 %1207
  %v1210 = vmul.f32 %v1113, %v1204
  %v1211 = vmul.f32 %v1114, %v1208
  %v1212 = vadd.f32 %v1200, %v1210
  %v1213 = vadd.f32 %v1201, %v1211
  %1214 = vrot.lane.b32.xlu0 %v106, 96
  %v1215 = vpop.permute.xlu0 %1214
  %1216 = vrot.lane.b32.xlu0 %v109, 96
  %v1217 = vpop.permute.xlu0 %1216
  %v1218 = vsel %vm150, %v1215, 0
  %v1220 = vsel %vm150, %v1217, 0
  %1222 = vmatpush.xpose.msra.mxu0 0.0
  %1223 = vmatpush.xpose.msra.mxu0 0.0
  %1224 = vmatpush.xpose.msra.mxu0 0.0
  %1225 = vmatpush.xpose.msra.mxu0 0.0
  %1226 = vmatpush.xpose.msra.mxu0 0.0
  %1227 = vmatpush.xpose.msra.mxu0 0.0
  %1228 = vmatpush.xpose.msra.mxu0 0.0
  %1229 = vmatpush.xpose.msra.mxu0 0.0
  %1230 = vmatpush.xpose.msra.mxu0 0.0
  %1231 = vmatpush.xpose.msra.mxu0 0.0
  %1232 = vmatpush.xpose.msra.mxu0 0.0
  %1233 = vmatpush.xpose.msra.mxu0 0.0
  %1234 = vmatpush.xpose.msra.mxu0 0.0
  %1235 = vmatpush.xpose.msra.mxu0 0.0
  %1236 = vmatpush.xpose.msra.mxu0 %v1220
  %1237 = vmatpush.xpose.msra.mxu0 %v1218
  %1238 = vmatmul.f32.gmra.mxu0 %v1124
  %v1239 = vpop.f32.mrf.mxu0
  %v1240 = vadd.f32 %v1212, %v1239
  %1241 = vmatmul.f32.gmra.mxu0 %v1127
  %v1242 = vpop.f32.mrf.mxu0
  %v1243 = vadd.f32 %v1213, %v1242
  %1244 = vdwg.mxu0
  %v1245 = vmul.f32 %v1240, 0.17677669
  %v1246 = vmul.f32 %v1243, 0.17677669
  %vm1247 = vcmp.gt.f32.partialorder %v1102, 0.0
  %vm1248 = vcmp.gt.f32.partialorder %v1103, 0.0
  %v1249 = vsel %vm1247, %v1245, -1e+30
  %v1250 = vsel %vm1248, %v1246, -1e+30
  %v1251 = vsel %vm279, %v1249, -inf
  %1252 = vmax.xlane.f32.xlu0 %v1251
  %v1253 = vpop.xlane.xlu0 %1252
  %v1254 = vsel %vm279, %v1250, -inf
  %1255 = vmax.xlane.f32.xlu0 %v1254
  %v1256 = vpop.xlane.xlu0 %1255
  %v1257 = vsub.f32 %v1249, %v1253
  %v1258 = vsub.f32 %v1250, %v1256
  %v1259 = vmul.f32 %v1257, 1.442695
  %v1260 = vpow.pop %v1259
  %v1261 = vmul.f32 %v1258, 1.442695
  %v1262 = vpow.pop %v1261
  %v1263 = vsel %vm1247, %v1260, 0.0
  %v1264 = vsel %vm1248, %v1262, 0.0
  %v1265 = vsel %vm279, %v1263, 0.0
  %1266 = vadd.xlane.f32.xlu0 %v1265
  %v1267 = vpop.xlane.xlu0 %1266
  %v1268 = vsel %vm279, %v1264, 0.0
  %1269 = vadd.xlane.f32.xlu0 %v1268
  %v1270 = vpop.xlane.xlu0 %1269
  %vm1271 = vcmp.gt.f32.partialorder %v1267, 0.0
  %vm1272 = vcmp.gt.f32.partialorder %v1270, 0.0
  %v1273 = vsel %vm1271, %v1267, 1.0
  %v1274 = vsel %vm1272, %v1270, 1.0
  %v1275 = vrcp.pop %v1273
  %v1276 = vrcp.pop %v1274
  %v1277 = vmul.f32 %v1263, %v1275
  %v1278 = vmul.f32 %v1264, %v1276
  %v1279 = vmul.f32 %v1277, %v1105
  %v1280 = vmul.f32 %v1278, %v1106
  %v1281 = vsel %vm279, %v1279, 0.0
  %1282 = vadd.xlane.f32.xlu0 %v1281
  %v1283 = vpop.xlane.xlu0 %1282
  %v1284 = vsel %vm279, %v1280, 0.0
  %1285 = vadd.xlane.f32.xlu0 %v1284
  %v1286 = vpop.xlane.xlu0 %1285
  %v1287 = vmul.f32 %v1283, %v316
  %v1288 = vmul.f32 %v1286, %v316
  %v1289 = vadd.f32 %v1287, 0.0
  %v1290 = vadd.f32 %v1288, 0.0
  %v1291 = vmul.f32 %v1277, %v1107
  %v1292 = vmul.f32 %v1278, %v1108
  %v1293 = vsel %vm279, %v1291, 0.0
  %1294 = vadd.xlane.f32.xlu0 %v1293
  %v1295 = vpop.xlane.xlu0 %1294
  %v1296 = vsel %vm279, %v1292, 0.0
  %1297 = vadd.xlane.f32.xlu0 %v1296
  %v1298 = vpop.xlane.xlu0 %1297
  %v1299 = vmul.f32 %v1295, %v329
  %v1300 = vmul.f32 %v1298, %v329
  %v1301 = vadd.f32 %v1289, %v1299
  %v1302 = vadd.f32 %v1290, %v1300
  %v1303 = vmul.f32 %v1277, %v1109
  %v1304 = vmul.f32 %v1278, %v1110
  %v1305 = vsel %vm279, %v1303, 0.0
  %1306 = vadd.xlane.f32.xlu0 %v1305
  %v1307 = vpop.xlane.xlu0 %1306
  %v1308 = vsel %vm279, %v1304, 0.0
  %1309 = vadd.xlane.f32.xlu0 %v1308
  %v1310 = vpop.xlane.xlu0 %1309
  %v1311 = vmul.f32 %v1307, %v342
  %v1312 = vmul.f32 %v1310, %v342
  %v1313 = vadd.f32 %v1301, %v1311
  %v1314 = vadd.f32 %v1302, %v1312
  %v1315 = vmul.f32 %v1277, %v1111
  %v1316 = vmul.f32 %v1278, %v1112
  %v1317 = vsel %vm279, %v1315, 0.0
  %1318 = vadd.xlane.f32.xlu0 %v1317
  %v1319 = vpop.xlane.xlu0 %1318
  %v1320 = vsel %vm279, %v1316, 0.0
  %1321 = vadd.xlane.f32.xlu0 %v1320
  %v1322 = vpop.xlane.xlu0 %1321
  %v1323 = vmul.f32 %v1319, %v355
  %v1324 = vmul.f32 %v1322, %v355
  %v1325 = vadd.f32 %v1313, %v1323
  %v1326 = vadd.f32 %v1314, %v1324
  %v1327 = vmul.f32 %v1277, %v1113
  %v1328 = vmul.f32 %v1278, %v1114
  %v1329 = vsel %vm279, %v1327, 0.0
  %1330 = vadd.xlane.f32.xlu0 %v1329
  %v1331 = vpop.xlane.xlu0 %1330
  %v1332 = vsel %vm279, %v1328, 0.0
  %1333 = vadd.xlane.f32.xlu0 %v1332
  %v1334 = vpop.xlane.xlu0 %1333
  %v1335 = vmul.f32 %v1331, %v368
  %v1336 = vmul.f32 %v1334, %v368
  %v1337 = vadd.f32 %v1325, %v1335
  %v1338 = vadd.f32 %v1326, %v1336
  %1339 = vrot.lane.b32.xlu0 %v106, 64
  %v1340 = vpop.permute.xlu0 %1339
  %1341 = vrot.lane.b32.xlu0 %v109, 64
  %v1342 = vpop.permute.xlu0 %1341
  %v1346 = vsel %vm279, %v1277, 0
  %v1349 = vsel %vm279, %v1278, 0
  %1351 = vmatpush.msra.mxu0 0.0
  %1352 = vmatpush.msra.mxu0 0.0
  %1353 = vmatpush.msra.mxu0 0.0
  %1354 = vmatpush.msra.mxu0 0.0
  %1355 = vmatpush.msra.mxu0 0.0
  %1356 = vmatpush.msra.mxu0 0.0
  %1357 = vmatpush.msra.mxu0 0.0
  %1358 = vmatpush.msra.mxu0 0.0
  %1359 = vmatpush.msra.mxu0 0.0
  %1360 = vmatpush.msra.mxu0 0.0
  %1361 = vmatpush.msra.mxu0 0.0
  %1362 = vmatpush.msra.mxu0 0.0
  %1363 = vmatpush.msra.mxu0 0.0
  %1364 = vmatpush.msra.mxu0 0.0
  %1365 = vmatpush.msra.mxu0 %v1342
  %1366 = vmatpush.msra.mxu0 %v1340
  %1367 = vmatmul.f32.gmra.mxu0 %v1346
  %v1368 = vpop.f32.mrf.mxu0
  %v1369 = vadd.f32 %v1337, %v1368
  %1370 = vmatmul.f32.gmra.mxu0 %v1349
  %v1371 = vpop.f32.mrf.mxu0
  %v1372 = vadd.f32 %v1338, %v1371
  %1373 = vdwg.mxu0
  %1374 = vrot.lane.b32.xlu0 %v106, 32
  %v1375 = vpop.permute.xlu0 %1374
  %1376 = vrot.lane.b32.xlu0 %v109, 32
  %v1377 = vpop.permute.xlu0 %1376
  %v1380 = vadd.f32 %v1369, %v1375
  %v1381 = vadd.f32 %v1372, %v1377
  %v1382 = vmul.f32 %v1380, %v416
  %v1383 = vmul.f32 %v1381, %v416
  %v1384 = vadd.f32 %v1382, %v419
  %v1385 = vadd.f32 %v1383, %v419
  %v1386 = vmax.f32 %v1384, 0.0
  %v1387 = vmax.f32 %v1385, 0.0
  %v1388 = vmul.f32 %v1386, %v1121
  %v1389 = vmul.f32 %v1387, %v1122
  %v1391 = vsel %vm150, %v1388, 0
  %v1394 = vsel %vm150, %v1389, 0
  %1396 = vmatpush.msra.mxu0 0.0
  %1397 = vmatpush.msra.mxu0 0.0
  %1398 = vmatpush.msra.mxu0 0.0
  %1399 = vmatpush.msra.mxu0 0.0
  %1400 = vmatpush.msra.mxu0 0.0
  %1401 = vmatpush.msra.mxu0 0.0
  %1402 = vmatpush.msra.mxu0 0.0
  %1403 = vmatpush.msra.mxu0 0.0
  %1404 = vmatpush.msra.mxu0 0.0
  %1405 = vmatpush.msra.mxu0 0.0
  %1406 = vmatpush.msra.mxu0 0.0
  %1407 = vmatpush.msra.mxu0 0.0
  %1408 = vmatpush.msra.mxu0 %v59
  %1409 = vmatpush.msra.mxu0 %v58
  %1410 = vmatpush.msra.mxu0 %v57
  %1411 = vmatpush.msra.mxu0 %v56
  %1412 = vmatmul.f32.gmra.mxu0 %v1391
  %v1413 = vpop.f32.mrf.mxu0
  %v1414 = vadd.f32 %v426, %v1413
  %1415 = vmatmul.f32.gmra.mxu0 %v1394
  %v1416 = vpop.f32.mrf.mxu0
  %v1417 = vadd.f32 %v426, %v1416
  %1418 = vdwg.mxu0
  %v1419 = vsel %vm456, %v1414, -inf
  %1420 = vmax.xlane.f32.xlu0 %v1419
  %v1421 = vpop.xlane.xlu0 %1420
  %v1422 = vsel %vm456, %v1417, -inf
  %1423 = vmax.xlane.f32.xlu0 %v1422
  %v1424 = vpop.xlane.xlu0 %1423
  %v1425 = vsub.f32 %v1414, %v1421
  %v1426 = vsub.f32 %v1417, %v1424
  %v1427 = vmul.f32 %v1425, 1.442695
  %v1428 = vpow.pop %v1427
  %v1429 = vmul.f32 %v1426, 1.442695
  %v1430 = vpow.pop %v1429
  %v1431 = vsel %vm456, %v1428, 0.0
  %1432 = vadd.xlane.f32.xlu0 %v1431
  %v1433 = vpop.xlane.xlu0 %1432
  %v1434 = vsel %vm456, %v1430, 0.0
  %1435 = vadd.xlane.f32.xlu0 %v1434
  %v1436 = vpop.xlane.xlu0 %1435
  %v1437 = vrcp.pop %v1433
  %v1438 = vrcp.pop %v1436
  %v1439 = vmul.f32 %v1428, %v1437
  %v1440 = vmul.f32 %v1430, %v1438
  %v1441 = vmul.f32 %v1388, %v1121
  %v1442 = vmul.f32 %v1389, %v1122
  %v1443 = vmul.f32 %v1439, %v1121
  %v1444 = vmul.f32 %v1440, %v1122
  %1445 = vxpose.xlu0.b32.start [1/16] %v1443, 128
  %1446 = vxpose.xlu0.b32.cont [2/16] %v1444, 128
  %1447 = vxpose.xlu0.b32.cont [3/16] 0.0, 128
  %1448 = vxpose.xlu0.b32.cont [4/16] 0.0, 128
  %1449 = vxpose.xlu0.b32.cont [5/16] 0.0, 128
  %1450 = vxpose.xlu0.b32.cont [6/16] 0.0, 128
  %1451 = vxpose.xlu0.b32.cont [7/16] 0.0, 128
  %1452 = vxpose.xlu0.b32.cont [8/16] 0.0, 128
  %1453 = vxpose.xlu0.b32.cont [9/16] 0.0, 128
  %1454 = vxpose.xlu0.b32.cont [10/16] 0.0, 128
  %1455 = vxpose.xlu0.b32.cont [11/16] 0.0, 128
  %1456 = vxpose.xlu0.b32.cont [12/16] 0.0, 128
  %1457 = vxpose.xlu0.b32.cont [13/16] 0.0, 128
  %1458 = vxpose.xlu0.b32.cont [14/16] 0.0, 128
  %1459 = vxpose.xlu0.b32.cont [15/16] 0.0, 128
  %1460 = vxpose.xlu0.b32.end [16/16] 0.0, 128
  %v1461 = vpop.trf.xlu0
  %v1462 = vpop.trf.xlu0
  %v1463 = vpop.trf.xlu0
  %v1464 = vpop.trf.xlu0
  %v1465 = vpop.trf.xlu0
  %v1466 = vpop.trf.xlu0
  %v1467 = vpop.trf.xlu0
  %v1468 = vpop.trf.xlu0
  %v1469 = vpop.trf.xlu0
  %v1470 = vpop.trf.xlu0
  %v1471 = vpop.trf.xlu0
  %v1472 = vpop.trf.xlu0
  %v1473 = vpop.trf.xlu0
  %v1474 = vpop.trf.xlu0
  %v1475 = vpop.trf.xlu0
  %v1476 = vpop.trf.xlu0
  %v1478 = vsel %vm279, %v1461, 0
  %1480 = vmatpush.msra.mxu0 0.0
  %1481 = vmatpush.msra.mxu0 0.0
  %1482 = vmatpush.msra.mxu0 0.0
  %1483 = vmatpush.msra.mxu0 0.0
  %1484 = vmatpush.msra.mxu0 0.0
  %1485 = vmatpush.msra.mxu0 0.0
  %1486 = vmatpush.msra.mxu0 0.0
  %1487 = vmatpush.msra.mxu0 0.0
  %1488 = vmatpush.msra.mxu0 0.0
  %1489 = vmatpush.msra.mxu0 0.0
  %1490 = vmatpush.msra.mxu0 0.0
  %1491 = vmatpush.msra.mxu0 0.0
  %1492 = vmatpush.msra.mxu0 0.0
  %1493 = vmatpush.msra.mxu0 0.0
  %1494 = vmatpush.msra.mxu0 %v1442
  %1495 = vmatpush.msra.mxu0 %v1441
  %1496 = vmatmul.f32.gmra.mxu0 %v1478
  %v1497 = vpop.f32.mrf.mxu0
  %v1498 = vadd.f32 0.0, %v1497
  %1499 = vdwg.mxu0
  %1500 = vmatpush.msra.mxu0 0.0
  %1501 = vmatpush.msra.mxu0 0.0
  %1502 = vmatpush.msra.mxu0 0.0
  %1503 = vmatpush.msra.mxu0 0.0
  %1504 = vmatpush.msra.mxu0 0.0
  %1505 = vmatpush.msra.mxu0 0.0
  %1506 = vmatpush.msra.mxu0 0.0
  %1507 = vmatpush.msra.mxu0 0.0
  %1508 = vmatpush.msra.mxu0 0.0
  %1509 = vmatpush.msra.mxu0 0.0
  %1510 = vmatpush.msra.mxu0 0.0
  %1511 = vmatpush.msra.mxu0 0.0
  %1512 = vmatpush.msra.mxu0 0.0
  %1513 = vmatpush.msra.mxu0 0.0
  %1514 = vmatpush.msra.mxu0 %v1103
  %1515 = vmatpush.msra.mxu0 %v1102
  %1516 = vmatmul.f32.gmra.mxu0 %v1478
  %v1517 = vpop.f32.mrf.mxu0
  %v1518 = vadd.f32 0.0, %v1517
  %1519 = vdwg.mxu0
  %v1521 = vsel %vm279, %v1518, 0
  %1523 = vmatpush.msra.mxu0 0.0
  %1524 = vmatpush.msra.mxu0 0.0
  %1525 = vmatpush.msra.mxu0 0.0
  %1526 = vmatpush.msra.mxu0 0.0
  %1527 = vmatpush.msra.mxu0 0.0
  %1528 = vmatpush.msra.mxu0 0.0
  %1529 = vmatpush.msra.mxu0 0.0
  %1530 = vmatpush.msra.mxu0 0.0
  %1531 = vmatpush.msra.mxu0 0.0
  %1532 = vmatpush.msra.mxu0 0.0
  %1533 = vmatpush.msra.mxu0 0.0
  %1534 = vmatpush.msra.mxu0 0.0
  %1535 = vmatpush.msra.mxu0 0.0
  %1536 = vmatpush.msra.mxu0 0.0
  %1537 = vmatpush.msra.mxu0 %v1444
  %1538 = vmatpush.msra.mxu0 %v1443
  %1539 = vmatmul.f32.gmra.mxu0 %v1521
  %v1540 = vpop.f32.mrf.mxu0
  %v1541 = vadd.f32 0.0, %v1540
  %1542 = vdwg.mxu0
  %v1543 = vsel %vm583, 0.0, %v1541
  %v1544 = vsel %vm456, %v1543, 0.0
  %1545 = vadd.xlane.f32.xlu0 %v1544
  %v1546 = vpop.xlane.xlu0 %1545
  %v1547 = vrsqrt.pop %v1546
  %v1548 = vmul.f32 %v1547, %v1546
  %v1549 = vmul.f32 %v1548, %v1547
  %v1550 = vmul.f32 0.5, %v1549
  %v1551 = vsub.f32 1.5, %v1550
  %v1552 = vmul.f32 %v1547, %v1551
  %v1553 = vmul.f32 %v1546, %v1552
  %vm1554 = vcmp.eq.f32.partialorder %v1546, inf
  %v1555 = vsel %vm1554, %v1546, %v1553
  %vm1556 = vcmp.eq.f32.partialorder %v1546, 0.0
  %v1557 = vand.u32 %v1546, 2147483648
  %v1558 = vsel %vm1556, %v1557, %v1555
  %v1559 = vadd.f32 %v1558, 1e-15
  %v1560 = vrcp.pop %v1559
  %1561 = vxpose.xlu0.b32.start [1/16] %v1560, 128
  %1562 = vxpose.xlu0.b32.cont [2/16] 0.0, 128
  %1563 = vxpose.xlu0.b32.cont [3/16] 0.0, 128
  %1564 = vxpose.xlu0.b32.cont [4/16] 0.0, 128
  %1565 = vxpose.xlu0.b32.cont [5/16] 0.0, 128
  %1566 = vxpose.xlu0.b32.cont [6/16] 0.0, 128
  %1567 = vxpose.xlu0.b32.cont [7/16] 0.0, 128
  %1568 = vxpose.xlu0.b32.cont [8/16] 0.0, 128
  %1569 = vxpose.xlu0.b32.cont [9/16] 0.0, 128
  %1570 = vxpose.xlu0.b32.cont [10/16] 0.0, 128
  %1571 = vxpose.xlu0.b32.cont [11/16] 0.0, 128
  %1572 = vxpose.xlu0.b32.cont [12/16] 0.0, 128
  %1573 = vxpose.xlu0.b32.cont [13/16] 0.0, 128
  %1574 = vxpose.xlu0.b32.cont [14/16] 0.0, 128
  %1575 = vxpose.xlu0.b32.cont [15/16] 0.0, 128
  %1576 = vxpose.xlu0.b32.end [16/16] 0.0, 128
  %v1577 = vpop.trf.xlu0
  %v1578 = vpop.trf.xlu0
  %v1579 = vpop.trf.xlu0
  %v1580 = vpop.trf.xlu0
  %v1581 = vpop.trf.xlu0
  %v1582 = vpop.trf.xlu0
  %v1583 = vpop.trf.xlu0
  %v1584 = vpop.trf.xlu0
  %v1585 = vpop.trf.xlu0
  %v1586 = vpop.trf.xlu0
  %v1587 = vpop.trf.xlu0
  %v1588 = vpop.trf.xlu0
  %v1589 = vpop.trf.xlu0
  %v1590 = vpop.trf.xlu0
  %v1591 = vpop.trf.xlu0
  %v1592 = vpop.trf.xlu0
  %v1593 = vperm.slane %v1577, 0
  %v1594 = vmul.f32 %v1543, %v1593
  %v1595 = vmul.f32 %v1594, %v1560
  %v1597 = vsel %vm456, %v1595, 0
  %1599 = vmatpush.msra.mxu0 0.0
  %1600 = vmatpush.msra.mxu0 0.0
  %1601 = vmatpush.msra.mxu0 0.0
  %1602 = vmatpush.msra.mxu0 0.0
  %1603 = vmatpush.msra.mxu0 0.0
  %1604 = vmatpush.msra.mxu0 0.0
  %1605 = vmatpush.msra.mxu0 0.0
  %1606 = vmatpush.msra.mxu0 0.0
  %1607 = vmatpush.msra.mxu0 0.0
  %1608 = vmatpush.msra.mxu0 0.0
  %1609 = vmatpush.msra.mxu0 0.0
  %1610 = vmatpush.msra.mxu0 0.0
  %1611 = vmatpush.msra.mxu0 0.0
  %1612 = vmatpush.msra.mxu0 0.0
  %1613 = vmatpush.msra.mxu0 0.0
  %1614 = vmatpush.msra.mxu0 %v1498
  %1615 = vmatmul.f32.gmra.mxu0 %v1597
  %v1616 = vpop.f32.mrf.mxu0
  %v1617 = vadd.f32 0.0, %v1616
  %1618 = vdwg.mxu0
  %1620 = vrot.lane.b32.xlu0 %v1498, 32
  %v1621 = vpop.permute.xlu0 %1620
  %v1623 = vsel %vm150, %v1617, %v1621
  %v1625 = vsel %vm666, %v1623, 0
  %1627 = vmatpush.msra.mxu0 0.0
  %1628 = vmatpush.msra.mxu0 0.0
  %1629 = vmatpush.msra.mxu0 0.0
  %1630 = vmatpush.msra.mxu0 0.0
  %1631 = vmatpush.msra.mxu0 0.0
  %1632 = vmatpush.msra.mxu0 0.0
  %1633 = vmatpush.msra.mxu0 0.0
  %1634 = vmatpush.msra.mxu0 0.0
  %1635 = vmatpush.msra.mxu0 %v42
  %1636 = vmatpush.msra.mxu0 %v41
  %1637 = vmatpush.msra.mxu0 %v40
  %1638 = vmatpush.msra.mxu0 %v39
  %1639 = vmatpush.msra.mxu0 %v38
  %1640 = vmatpush.msra.mxu0 %v37
  %1641 = vmatpush.msra.mxu0 %v36
  %1642 = vmatpush.msra.mxu0 %v35
  %1643 = vmatmul.f32.gmra.mxu0 %v1625
  %v1644 = vpop.f32.mrf.mxu0
  %v1645 = vadd.f32 %v665, %v1644
  %1646 = vdwg.mxu0
  %v1647 = vsel %vm150, %v1645, 0.0
  %1648 = vadd.xlane.f32.xlu0 %v1647
  %v1649 = vpop.xlane.xlu0 %1648
  %v1650 = vmul.f32 %v1649, %v699
  %v1651 = vsub.f32 %v1645, %v1650
  %v1652 = vmul.f32 %v1651, %v1651
  %v1653 = vsel %vm150, %v1652, 0.0
  %1654 = vadd.xlane.f32.xlu0 %v1653
  %v1655 = vpop.xlane.xlu0 %1654
  %v1656 = vmul.f32 %v1655, %v699
  %v1657 = vadd.f32 %v1656, 1e-05
  %v1658 = vrsqrt.pop %v1657
  %v1659 = vmul.f32 %v1658, %v1657
  %v1660 = vmul.f32 %v1659, %v1658
  %v1661 = vmul.f32 0.5, %v1660
  %v1662 = vsub.f32 1.5, %v1661
  %v1663 = vmul.f32 %v1658, %v1662
  %vm1664 = vweird.f32 %v1657
  %vm1665 = vweird.f32 %v1658
  %vm1666 = vmor %vm1664, %vm1665
  %v1667 = vsel %vm1666, %v1658, %v1663
  %v1668 = vmul.f32 %v1651, %v1667
  %v1669 = vmul.f32 %v1668, %v719
  %v1670 = vadd.f32 %v1669, %v721
  %v1671 = vmax.f32 %v1670, 0.0
  %v1673 = vsel %vm150, %v1671, 0
  %1675 = vmatpush.msra.mxu0 0.0
  %1676 = vmatpush.msra.mxu0 0.0
  %1677 = vmatpush.msra.mxu0 0.0
  %1678 = vmatpush.msra.mxu0 0.0
  %1679 = vmatpush.msra.mxu0 0.0
  %1680 = vmatpush.msra.mxu0 0.0
  %1681 = vmatpush.msra.mxu0 0.0
  %1682 = vmatpush.msra.mxu0 0.0
  %1683 = vmatpush.msra.mxu0 0.0
  %1684 = vmatpush.msra.mxu0 0.0
  %1685 = vmatpush.msra.mxu0 0.0
  %1686 = vmatpush.msra.mxu0 0.0
  %1687 = vmatpush.msra.mxu0 %v732
  %1688 = vmatpush.msra.mxu0 %v730
  %1689 = vmatpush.msra.mxu0 %v728
  %1690 = vmatpush.msra.mxu0 %v726
  %1691 = vmatmul.f32.gmra.mxu0 %v1673
  %v1692 = vpop.f32.mrf.mxu0
  %v1693 = vadd.f32 %v724, %v1692
  %1694 = vdwg.mxu0
  %v1695 = vsel %vm65, %v1693, -inf
  %1696 = vmax.xlane.f32.xlu0 %v1695
  %v1697 = vpop.xlane.xlu0 %1696
  %v1698 = vsub.f32 %v1693, %v1697
  %v1699 = vmul.f32 %v1698, 1.442695
  %v1700 = vpow.pop %v1699
  %v1701 = vsel %vm65, %v1700, 0.0
  %1702 = vadd.xlane.f32.xlu0 %v1701
  %v1703 = vpop.xlane.xlu0 %1702
  %v1704 = vrcp.pop %v1703
  %v1705 = vmul.f32 %v1700, %v1704
  %1706 = vxpose.xlu0.b32.start [1/16] %v1705, 128
  %1707 = vxpose.xlu0.b32.cont [2/16] 0.0, 128
  %1708 = vxpose.xlu0.b32.cont [3/16] 0.0, 128
  %1709 = vxpose.xlu0.b32.cont [4/16] 0.0, 128
  %1710 = vxpose.xlu0.b32.cont [5/16] 0.0, 128
  %1711 = vxpose.xlu0.b32.cont [6/16] 0.0, 128
  %1712 = vxpose.xlu0.b32.cont [7/16] 0.0, 128
  %1713 = vxpose.xlu0.b32.cont [8/16] 0.0, 128
  %1714 = vxpose.xlu0.b32.cont [9/16] 0.0, 128
  %1715 = vxpose.xlu0.b32.cont [10/16] 0.0, 128
  %1716 = vxpose.xlu0.b32.cont [11/16] 0.0, 128
  %1717 = vxpose.xlu0.b32.cont [12/16] 0.0, 128
  %1718 = vxpose.xlu0.b32.cont [13/16] 0.0, 128
  %1719 = vxpose.xlu0.b32.cont [14/16] 0.0, 128
  %1720 = vxpose.xlu0.b32.cont [15/16] 0.0, 128
  %1721 = vxpose.xlu0.b32.end [16/16] 0.0, 128
  %v1722 = vpop.trf.xlu0
  %v1723 = vpop.trf.xlu0
  %v1724 = vpop.trf.xlu0
  %v1725 = vpop.trf.xlu0
  %v1726 = vpop.trf.xlu0
  %v1727 = vpop.trf.xlu0
  %v1728 = vpop.trf.xlu0
  %v1729 = vpop.trf.xlu0
  %v1730 = vpop.trf.xlu0
  %v1731 = vpop.trf.xlu0
  %v1732 = vpop.trf.xlu0
  %v1733 = vpop.trf.xlu0
  %v1734 = vpop.trf.xlu0
  %v1735 = vpop.trf.xlu0
  %v1736 = vpop.trf.xlu0
  %v1737 = vpop.trf.xlu0
  %v1739 = vsel %vm456, %v1722, 0
  %1741 = vmatpush.msra.mxu0 0.0
  %1742 = vmatpush.msra.mxu0 0.0
  %1743 = vmatpush.msra.mxu0 0.0
  %1744 = vmatpush.msra.mxu0 0.0
  %1745 = vmatpush.msra.mxu0 0.0
  %1746 = vmatpush.msra.mxu0 0.0
  %1747 = vmatpush.msra.mxu0 0.0
  %1748 = vmatpush.msra.mxu0 0.0
  %1749 = vmatpush.msra.mxu0 0.0
  %1750 = vmatpush.msra.mxu0 0.0
  %1751 = vmatpush.msra.mxu0 0.0
  %1752 = vmatpush.msra.mxu0 0.0
  %1753 = vmatpush.msra.mxu0 0.0
  %1754 = vmatpush.msra.mxu0 0.0
  %1755 = vmatpush.msra.mxu0 0.0
  %1756 = vmatpush.msra.mxu0 %v1671
  %1757 = vmatmul.f32.gmra.mxu0 %v1739
  %v1758 = vpop.f32.mrf.mxu0
  %v1759 = vadd.f32 0.0, %v1758
  %1760 = vdwg.mxu0
  %1761 = vmatpush.msra.mxu0 0.0
  %1762 = vmatpush.msra.mxu0 0.0
  %1763 = vmatpush.msra.mxu0 0.0
  %1764 = vmatpush.msra.mxu0 0.0
  %1765 = vmatpush.msra.mxu0 0.0
  %1766 = vmatpush.msra.mxu0 0.0
  %1767 = vmatpush.msra.mxu0 0.0
  %1768 = vmatpush.msra.mxu0 0.0
  %1769 = vmatpush.msra.mxu0 0.0
  %1770 = vmatpush.msra.mxu0 0.0
  %1771 = vmatpush.msra.mxu0 0.0
  %1772 = vmatpush.msra.mxu0 0.0
  %1773 = vmatpush.msra.mxu0 0.0
  %1774 = vmatpush.msra.mxu0 0.0
  %1775 = vmatpush.msra.mxu0 0.0
  %1776 = vmatpush.msra.mxu0 %v1595
  %1777 = vmatmul.f32.gmra.mxu0 %v1739
  %v1778 = vpop.f32.mrf.mxu0
  %v1779 = vadd.f32 0.0, %v1778
  %1780 = vdwg.mxu0
  %v1782 = vsel %vm456, %v1779, 0
  %1784 = vmatpush.msra.mxu0 0.0
  %1785 = vmatpush.msra.mxu0 0.0
  %1786 = vmatpush.msra.mxu0 0.0
  %1787 = vmatpush.msra.mxu0 0.0
  %1788 = vmatpush.msra.mxu0 0.0
  %1789 = vmatpush.msra.mxu0 0.0
  %1790 = vmatpush.msra.mxu0 0.0
  %1791 = vmatpush.msra.mxu0 0.0
  %1792 = vmatpush.msra.mxu0 0.0
  %1793 = vmatpush.msra.mxu0 0.0
  %1794 = vmatpush.msra.mxu0 0.0
  %1795 = vmatpush.msra.mxu0 0.0
  %1796 = vmatpush.msra.mxu0 0.0
  %1797 = vmatpush.msra.mxu0 0.0
  %1798 = vmatpush.msra.mxu0 0.0
  %1799 = vmatpush.msra.mxu0 %v1705
  %1800 = vmatmul.f32.gmra.mxu0 %v1782
  %v1801 = vpop.f32.mrf.mxu0
  %v1802 = vadd.f32 0.0, %v1801
  %1803 = vdwg.mxu0
  %v1804 = vsel %vm583, 0.0, %v1802
  %v1805 = vsel %vm870, %v1804, 0.0
  %1806 = vadd.xlane.f32.xlu0 %v1805
  %v1807 = vpop.xlane.xlu0 %1806
  %v1808 = vrsqrt.pop %v1807
  %v1809 = vmul.f32 %v1808, %v1807
  %v1810 = vmul.f32 %v1809, %v1808
  %v1811 = vmul.f32 0.5, %v1810
  %v1812 = vsub.f32 1.5, %v1811
  %v1813 = vmul.f32 %v1808, %v1812
  %v1814 = vmul.f32 %v1807, %v1813
  %vm1815 = vcmp.eq.f32.partialorder %v1807, inf
  %v1816 = vsel %vm1815, %v1807, %v1814
  %vm1817 = vcmp.eq.f32.partialorder %v1807, 0.0
  %v1818 = vand.u32 %v1807, 2147483648
  %v1819 = vsel %vm1817, %v1818, %v1816
  %v1820 = vadd.f32 %v1819, 1e-15
  %v1821 = vrcp.pop %v1820
  %1822 = vxpose.xlu0.b32.start [1/16] %v1821, 128
  %1823 = vxpose.xlu0.b32.cont [2/16] 0.0, 128
  %1824 = vxpose.xlu0.b32.cont [3/16] 0.0, 128
  %1825 = vxpose.xlu0.b32.cont [4/16] 0.0, 128
  %1826 = vxpose.xlu0.b32.cont [5/16] 0.0, 128
  %1827 = vxpose.xlu0.b32.cont [6/16] 0.0, 128
  %1828 = vxpose.xlu0.b32.cont [7/16] 0.0, 128
  %1829 = vxpose.xlu0.b32.cont [8/16] 0.0, 128
  %1830 = vxpose.xlu0.b32.cont [9/16] 0.0, 128
  %1831 = vxpose.xlu0.b32.cont [10/16] 0.0, 128
  %1832 = vxpose.xlu0.b32.cont [11/16] 0.0, 128
  %1833 = vxpose.xlu0.b32.cont [12/16] 0.0, 128
  %1834 = vxpose.xlu0.b32.cont [13/16] 0.0, 128
  %1835 = vxpose.xlu0.b32.cont [14/16] 0.0, 128
  %1836 = vxpose.xlu0.b32.cont [15/16] 0.0, 128
  %1837 = vxpose.xlu0.b32.end [16/16] 0.0, 128
  %v1838 = vpop.trf.xlu0
  %v1839 = vpop.trf.xlu0
  %v1840 = vpop.trf.xlu0
  %v1841 = vpop.trf.xlu0
  %v1842 = vpop.trf.xlu0
  %v1843 = vpop.trf.xlu0
  %v1844 = vpop.trf.xlu0
  %v1845 = vpop.trf.xlu0
  %v1846 = vpop.trf.xlu0
  %v1847 = vpop.trf.xlu0
  %v1848 = vpop.trf.xlu0
  %v1849 = vpop.trf.xlu0
  %v1850 = vpop.trf.xlu0
  %v1851 = vpop.trf.xlu0
  %v1852 = vpop.trf.xlu0
  %v1853 = vpop.trf.xlu0
  %v1854 = vperm.slane %v1838, 0
  %v1855 = vmul.f32 %v1804, %v1854
  %v1856 = vmul.f32 %v1855, %v1821
  %v1858 = vsel %vm65, %v1856, 0
  %v1861 = vsel %vm78, %v1759, 0
  %1863 = vmatpush.msra.mxu0 0.0
  %1864 = vmatpush.msra.mxu0 0.0
  %1865 = vmatpush.msra.mxu0 0.0
  %1866 = vmatpush.msra.mxu0 0.0
  %1867 = vmatpush.msra.mxu0 0.0
  %1868 = vmatpush.msra.mxu0 0.0
  %1869 = vmatpush.msra.mxu0 0.0
  %1870 = vmatpush.msra.mxu0 0.0
  %1871 = vmatpush.msra.mxu0 0.0
  %1872 = vmatpush.msra.mxu0 0.0
  %1873 = vmatpush.msra.mxu0 0.0
  %1874 = vmatpush.msra.mxu0 0.0
  %1875 = vmatpush.msra.mxu0 0.0
  %1876 = vmatpush.msra.mxu0 0.0
  %1877 = vmatpush.msra.mxu0 0.0
  %1878 = vmatpush.msra.mxu0 %v1861
  %1879 = vmatmul.f32.gmra.mxu0 %v1858
  %v1880 = vpop.f32.mrf.mxu0
  %v1881 = vadd.f32 0.0, %v1880
  %1882 = vdwg.mxu0
  %1883 = vrot.lane.b32.xlu0 %v1759, 32
  %v1884 = vpop.permute.xlu0 %1883
  %v1886 = vsel %vm150, %v1881, %v1884
  %v1888 = vsel %vm666, %v1886, 0
  %1890 = vmatpush.msra.mxu0 0.0
  %1891 = vmatpush.msra.mxu0 0.0
  %1892 = vmatpush.msra.mxu0 0.0
  %1893 = vmatpush.msra.mxu0 0.0
  %1894 = vmatpush.msra.mxu0 0.0
  %1895 = vmatpush.msra.mxu0 0.0
  %1896 = vmatpush.msra.mxu0 0.0
  %1897 = vmatpush.msra.mxu0 0.0
  %1898 = vmatpush.msra.mxu0 %v50
  %1899 = vmatpush.msra.mxu0 %v49
  %1900 = vmatpush.msra.mxu0 %v48
  %1901 = vmatpush.msra.mxu0 %v47
  %1902 = vmatpush.msra.mxu0 %v46
  %1903 = vmatpush.msra.mxu0 %v45
  %1904 = vmatpush.msra.mxu0 %v44
  %1905 = vmatpush.msra.mxu0 %v43
  %1906 = vmatmul.f32.gmra.mxu0 %v1888
  %v1907 = vpop.f32.mrf.mxu0
  %v1908 = vadd.f32 %v953, %v1907
  %1909 = vdwg.mxu0
  %v1910 = vsel %vm977, %v1908, 0.0
  %1911 = vadd.xlane.f32.xlu0 %v1910
  %v1912 = vpop.xlane.xlu0 %1911
  %v1913 = vmul.f32 %v1912, %v699
  %v1914 = vsub.f32 %v1908, %v1913
  %v1915 = vmul.f32 %v1914, %v1914
  %v1916 = vsel %vm977, %v1915, 0.0
  %1917 = vadd.xlane.f32.xlu0 %v1916
  %v1918 = vpop.xlane.xlu0 %1917
  %v1919 = vmul.f32 %v1918, %v699
  %v1920 = vadd.f32 %v1919, 1e-05
  %v1921 = vrsqrt.pop %v1920
  %v1922 = vmul.f32 %v1921, %v1920
  %v1923 = vmul.f32 %v1922, %v1921
  %v1924 = vmul.f32 0.5, %v1923
  %v1925 = vsub.f32 1.5, %v1924
  %v1926 = vmul.f32 %v1921, %v1925
  %vm1927 = vweird.f32 %v1920
  %vm1928 = vweird.f32 %v1921
  %vm1929 = vmor %vm1927, %vm1928
  %v1930 = vsel %vm1929, %v1921, %v1926
  %v1931 = vmul.f32 %v1914, %v1930
  %v1932 = vmul.f32 %v1931, %v1000
  %v1933 = vadd.f32 %v1932, %v1002
  %v1934 = vmax.f32 %v1933, 0.0
  %v1936 = vsel %vm150, %v1934, 0
  %1938 = vmatpush.msra.mxu0 0.0
  %1939 = vmatpush.msra.mxu0 0.0
  %1940 = vmatpush.msra.mxu0 0.0
  %1941 = vmatpush.msra.mxu0 0.0
  %1942 = vmatpush.msra.mxu0 0.0
  %1943 = vmatpush.msra.mxu0 0.0
  %1944 = vmatpush.msra.mxu0 0.0
  %1945 = vmatpush.msra.mxu0 0.0
  %1946 = vmatpush.msra.mxu0 0.0
  %1947 = vmatpush.msra.mxu0 0.0
  %1948 = vmatpush.msra.mxu0 0.0
  %1949 = vmatpush.msra.mxu0 0.0
  %1950 = vmatpush.msra.mxu0 %v54
  %1951 = vmatpush.msra.mxu0 %v53
  %1952 = vmatpush.msra.mxu0 %v52
  %1953 = vmatpush.msra.mxu0 %v51
  %1954 = vmatmul.f32.gmra.mxu0 %v1936
  %v1955 = vpop.f32.mrf.mxu0
  %v1956 = vadd.f32 %v1005, %v1955
  %1957 = vdwg.mxu0
  %v1958 = vmax.f32 %v1956, 0.0
  %v1960 = vsel %vm150, %v1958, 0
  %1962 = vmatpush.msra.mxu0 0.0
  %1963 = vmatpush.msra.mxu0 0.0
  %1964 = vmatpush.msra.mxu0 0.0
  %1965 = vmatpush.msra.mxu0 0.0
  %1966 = vmatpush.msra.mxu0 0.0
  %1967 = vmatpush.msra.mxu0 0.0
  %1968 = vmatpush.msra.mxu0 0.0
  %1969 = vmatpush.msra.mxu0 0.0
  %1970 = vmatpush.msra.mxu0 0.0
  %1971 = vmatpush.msra.mxu0 0.0
  %1972 = vmatpush.msra.mxu0 0.0
  %1973 = vmatpush.msra.mxu0 0.0
  %1974 = vmatpush.msra.mxu0 %v1038
  %1975 = vmatpush.msra.mxu0 %v1036
  %1976 = vmatpush.msra.mxu0 %v1034
  %1977 = vmatpush.msra.mxu0 %v1032
  %1978 = vmatmul.f32.gmra.mxu0 %v1960
  %v1979 = vpop.f32.mrf.mxu0
  %v1980 = vadd.f32 %v1030, %v1979
  %1981 = vdwg.mxu0
  %v1982 = vsel %vm1066, %v1980, 0.0
  %v1983 = vrot.slane %v1982, 4
  %v1984 = vadd.f32 %v1982, %v1983
  %v1985 = vrot.slane %v1984, 2
  %v1986 = vadd.f32 %v1984, %v1985
  %v1987 = vrot.slane %v1986, 1
  %v1988 = vadd.f32 %v1986, %v1987
  %v1989 = vmul.f32 %v1988, %v1080
  %v1990 = vxor.u32 %v1989, 2147483648
  %v1991 = vmul.f32 %v1990, 1.442695
  %v1992 = vpow.pop %v1991
  %v1993 = vadd.f32 %v1992, 1.0
  %v1994 = vrcp.pop %v1993
  %v1995 = vmul.f32 %v1993, %v1994
  %v1996 = vsub.f32 1.0, %v1995
  %v1997 = vmul.f32 %v1994, %v1996
  %v1998 = vadd.f32 %v1994, %v1997
  %vm1999 = vweird.f32 %v1993
  %vm2000 = vweird.f32 %v1994
  %vm2001 = vmor %vm1999, %vm2000
  %v2002 = vsel %vm2001, %v1994, %v1998
  %v2003 = vand.u32 2147483647, %v1993
  %vm2004 = vcmp.eq.f32.partialorder %v2003, 8.507059e+37
  %v2005 = vand.u32 %v1993, 2147483648
  %v2006 = vor.u32 1.1754944e-38, %v2005
  %v2007 = vsel %vm2004, %v2006, %v2002
  %v2008 = vmul.f32 1.0, %v2007
  %vm2009 = vcmask 1040384
  %v2010 = vsel %vm2009, %v1100, %v2008
  %2012 = vset.pattern.permute.xlu0 0
  %2013 = vperm.xlu0 %2012, %v2010
  %v2014 = vpop.permute.xlu0 %2013
  %2016 = vst [vmem:[%s7] sm:$0x3] %v2014
  // Predicated region
  $region26: #{forward.1} parent=0 // pred_check
    _
  $region27: #{forward.1} parent=0 // pred_check_branch
    %2018 = sbr.rel (0) target = $region29
  $region28: #{forward.1} parent=0 // pred_region
    _
  $region29: #{forward.1} parent=0 // pred_fallthru
    _
  // Predicated region
  $region30: #{forward.1} parent=0 // pred_check
    _
  $region31: #{forward.1} parent=0 // pred_check_branch
    %2020 = sbr.rel (0) target = $region33
  $region32: #{forward.1} parent=0 // pred_region
    _
  $region33: #{forward.1} parent=0 // pred_fallthru
    _

</llo_original>
